<compile_context>
chip_gen: v5e
topology: v5e:2x2
jax: 0.10.0
libtpu: 0.0.40
codegen_flags: <defaults>
</compile_context>

<pallas_src>
from functools import partial

import jax
import jax.numpy as jnp
from jax.experimental import pallas as pl
from jax.experimental.pallas import tpu as pltpu

GP = 128   # per-gate lane pitch (one lane tile per gate block)
OP = 128   # lane-dense FC output width
BP = 8     # padded batch rows (one f32 sublane tile)

# Lane offsets of the (i, f, o, g) gate blocks inside the fused 8*GP layout
#   [ i2 | f2 | o2 | i1 | f1 | o1 | g2 | g1 ]
_L1_OFF = (3 * GP, 4 * GP, 5 * GP, 7 * GP)
_L2_OFF = (0 * GP, 1 * GP, 2 * GP, 6 * GP)


# ------------------------------ Pallas kernel ------------------------------ #

def lstm_fc_kernel(x_ref, wih_ref, bias_ref, wbig_ref, wfc_ref, bfc_ref, out_ref,
                   *, T, Bp, GP):
    S1 = 3 * GP          # layer-1 sigmoid block start
    G2 = 6 * GP          # g2 block start
    G1 = 7 * GP          # g1 block start

    # Hoisted input projection for all T (+1 zero-padded) steps, already in the
    # fused column layout.  L1 columns = x_t @ Wih1 + b1, L2 columns = b2.
    proj = (jnp.dot(x_ref[...], wih_ref[...], preferred_element_type=jnp.float32)
            + bias_ref[...])                                  # ((T+1)*Bp, 8*GP) f32

    wbig = wbig_ref[...]                                      # (2*GP, 8*GP) bf16

    zeros = jnp.zeros((Bp, GP), jnp.float32)
    h2, c2, c1 = zeros, zeros, zeros

    # --- step 0, layer 1 only (h1_{-1} = 0, so pre1_0 is just the projection) ---
    pre0 = proj[0:Bp, :]
    s0 = jax.nn.sigmoid(pre0[:, S1:S1 + 3 * GP])              # [i1 f1 o1]
    g0 = jnp.tanh(pre0[:, G1:G1 + GP])                        # g1
    c1 = s0[:, GP:2 * GP] * c1 + s0[:, 0:GP] * g0
    h1 = s0[:, 2 * GP:3 * GP] * jnp.tanh(c1)

    # --- main recurrence: one fused MXU call + one sigmoid slab + one tanh slab
    #     per step covers layer-2 gates of step t AND layer-1 gates of step t+1.
    # TODO(synk): dropout1/dropout2 are inference-mode identity (eval()); a
    # training-mode version would mask h1/h2 here with pltpu.prng_random_bits.
    for t in range(T):
        hcat = jnp.concatenate([h1, h2], axis=1).astype(jnp.bfloat16)  # (Bp, 2*GP)
        fused = jnp.dot(hcat, wbig, preferred_element_type=jnp.float32)
        pre = fused + proj[(t + 1) * Bp:(t + 2) * Bp, :]      # (Bp, 8*GP)

        last = (t == T - 1)
        nsig = 3 * GP if last else 6 * GP
        s = jax.nn.sigmoid(pre[:, :nsig])
        g = jnp.tanh(pre[:, G2:(G2 + GP) if last else (G1 + GP)])

        # layer 2, step t
        c2 = s[:, GP:2 * GP] * c2 + s[:, 0:GP] * g[:, 0:GP]
        h2 = s[:, 2 * GP:3 * GP] * jnp.tanh(c2)
        if not last:
            # layer 1, step t+1 (its pre-activation is already in `pre`)
            c1 = s[:, S1 + GP:S1 + 2 * GP] * c1 + s[:, S1:S1 + GP] * g[:, GP:2 * GP]
            h1 = s[:, S1 + 2 * GP:S1 + 3 * GP] * jnp.tanh(c1)

    # lstm2_out[:, -1, :] == h2 after the last step; 128-lane FC, full-tile store.
    out_ref[...] = (jnp.dot(h2.astype(jnp.bfloat16), wfc_ref[...],
                            preferred_element_type=jnp.float32) + bfc_ref[...])


# ------------------------------ weight packing ------------------------------ #

def _place_gates(dst, w, H, offsets):
    """Scatter a (rows, 4H) matrix in PyTorch gate order (i, f, g, o) into the
    fused 8*GP-lane layout at the given per-gate lane offsets (i, f, o, g)."""
    oi, of, oo, og = offsets
    dst = dst.at[:, oi:oi + H].set(w[:, 0 * H:1 * H])   # i
    dst = dst.at[:, of:of + H].set(w[:, 1 * H:2 * H])   # f
    dst = dst.at[:, og:og + H].set(w[:, 2 * H:3 * H])   # g
    dst = dst.at[:, oo:oo + H].set(w[:, 3 * H:4 * H])   # o
    return dst


def pack_params(params):
    """One-time wrapper-side repacking; reuse the result across forward calls."""
    wih1, whh1, b1, wih2, whh2, b2, wfc, bfc = params
    I = wih1.shape[0]
    H1, H2 = whh1.shape[0], whh2.shape[0]
    O = wfc.shape[1]
    assert H1 <= GP and H2 <= GP and O <= OP

    # Input-projection weight in fused column layout (L2 columns stay zero).
    wihf = _place_gates(jnp.zeros((I, 8 * GP), jnp.float32), wih1, H1, _L1_OFF)
    # Bias row: b1 in the layer-1 columns, b2 in the layer-2 columns.
    biasf = _place_gates(jnp.zeros((1, 8 * GP), jnp.float32), b1, H1, _L1_OFF)
    biasf = _place_gates(biasf, b2, H2, _L2_OFF)
    # Fused recurrent weight: rows 0:GP <- h1 (drives layer-2 input gates AND the
    # layer-1 recurrence of the next step); rows GP:2GP <- h2 (layer-2 recurrence).
    top = (_place_gates(jnp.zeros((H1, 8 * GP), jnp.float32), wih2, H2, _L2_OFF)
           + _place_gates(jnp.zeros((H1, 8 * GP), jnp.float32), whh1, H1, _L1_OFF))
    bot = _place_gates(jnp.zeros((H2, 8 * GP), jnp.float32), whh2, H2, _L2_OFF)
    wbig = jnp.zeros((2 * GP, 8 * GP), jnp.float32)
    wbig = wbig.at[:H1].set(top).at[GP:GP + H2].set(bot)

    wfcp = jnp.zeros((GP, OP), jnp.float32).at[:H2, :O].set(wfc)
    bfcp = jnp.zeros((1, OP), jnp.float32).at[:, :O].set(bfc)

    return (wihf.astype(jnp.bfloat16),   # MXU operands in bf16
            biasf,                        # biases stay f32 (added post-dot)
            wbig.astype(jnp.bfloat16),
            wfcp.astype(jnp.bfloat16),
            bfcp)


# ------------------------------ JAX wrapper -------------------------------- #

@partial(jax.jit, static_argnames=("output_size",))
def lstm_forward(x, packed, output_size):
    """x: (B, T, I) batch_first, like the PyTorch module.  Returns (B, O)."""
    wihf, biasf, wbig, wfcp, bfcp = packed
    B, T, I = x.shape
    assert B <= BP

    # Pad batch to one full f32 sublane tile and append one zero time step so
    # every per-step row slice inside the kernel is 8-row aligned and uniform.
    xp = jnp.zeros((T + 1, BP, I), jnp.float32)
    xp = xp.at[:T, :B, :].set(jnp.transpose(x, (1, 0, 2)))
    x2d = xp.reshape((T + 1) * BP, I).astype(jnp.bfloat16)

    kernel = partial(lstm_fc_kernel, T=T, Bp=BP, GP=GP)
    vmem = pl.BlockSpec(memory_space=pltpu.MemorySpace.VMEM)
    out_padded = pl.pallas_call(
        kernel,
        out_shape=jax.ShapeDtypeStruct((BP, OP), jnp.float32),
        in_specs=[vmem] * 6,
        out_specs=vmem,
    )(x2d, wihf, biasf, wbig, wfcp, bfcp)
    return out_padded[:B, :output_size]


def multi_output_lstm(x, params):
    """Convenience path: packs weights then runs the jitted forward."""
    return lstm_forward(x, pack_params(params), output_size=params[6].shape[1])


# ------------------------------ reference ---------------------------------- #

def _lstm_cell_ref(xt, h, c, wih, whh, b, H):
    g = xt @ wih + h @ whh + b
    i = jax.nn.sigmoid(g[:, 0 * H:1 * H])
    f = jax.nn.sigmoid(g[:, 1 * H:2 * H])
    gg = jnp.tanh(g[:, 2 * H:3 * H])
    o = jax.nn.sigmoid(g[:, 3 * H:4 * H])
    c_new = f * c + i * gg
    h_new = o * jnp.tanh(c_new)
    return h_new, c_new


def reference(x, params):
    """Pure-JAX f32 reference of the PyTorch forward (dropout in eval mode)."""
    wih1, whh1, b1, wih2, whh2, b2, wfc, bfc = params
    B = x.shape[0]
    H1, H2 = whh1.shape[0], whh2.shape[0]
    h1 = jnp.zeros((B, H1), jnp.float32); c1 = h1
    h2 = jnp.zeros((B, H2), jnp.float32); c2 = h2
    for t in range(x.shape[1]):
        h1, c1 = _lstm_cell_ref(x[:, t, :], h1, c1, wih1, whh1, b1, H1)
        h2, c2 = _lstm_cell_ref(h1, h2, c2, wih2, whh2, b2, H2)
    return h2 @ wfc + bfc


def init_params(key, input_size, hidden_size1=64, hidden_size2=32, output_size=3):
    """Deterministic synthetic init mirroring PyTorch's uniform(-1/sqrt(H), 1/sqrt(H))."""
    ks = jax.random.split(key, 12)

    def u(k, shape, bound):
        return jax.random.uniform(k, shape, jnp.float32, -bound, bound)

    k1 = 1.0 / (hidden_size1 ** 0.5)
    k2 = 1.0 / (hidden_size2 ** 0.5)
    kf = 1.0 / (hidden_size2 ** 0.5)

    # Weights stored pre-transposed: (in_features, 4*hidden), gate order (i,f,g,o);
    # b_ih + b_hh folded into one bias row.
    wih1 = u(ks[0], (input_size, 4 * hidden_size1), k1)
    whh1 = u(ks[1], (hidden_size1, 4 * hidden_size1), k1)
    b1 = u(ks[2], (1, 4 * hidden_size1), k1) + u(ks[3], (1, 4 * hidden_size1), k1)

    wih2 = u(ks[4], (hidden_size1, 4 * hidden_size2), k2)
    whh2 = u(ks[5], (hidden_size2, 4 * hidden_size2), k2)
    b2 = u(ks[6], (1, 4 * hidden_size2), k2) + u(ks[7], (1, 4 * hidden_size2), k2)

    wfc = u(ks[8], (hidden_size2, output_size), kf)
    bfc = u(ks[9], (1, output_size), kf)
    return (wih1, whh1, b1, wih2, whh2, b2, wfc, bfc)


if __name__ == "__main__":
    B, T, I = 2, 8, 16
    H1, H2, O = 64, 32, 3

    root = jax.random.PRNGKey(0)
    kx, kp = jax.random.split(root)
    x = jax.random.normal(kx, (B, T, I), jnp.float32)
    params = init_params(kp, I, H1, H2, O)

    packed = pack_params(params)          # one-time packing, outside the hot path
    out = lstm_forward(x, packed, output_size=O)
    out = jax.block_until_ready(out)

    ref = reference(x, params)
    assert out.shape == (B, O), out.shape
    # bf16 MXU operands (f32 accumulation / gate math) -> relaxed tolerance.
    assert jnp.allclose(out, ref, atol=2e-2, rtol=2e-2), (out, ref)
    print("KERNEL_OK")
</pallas_src>

<mosaic_0001>
module attributes {stable_mosaic.version = 11 : i64} {
  func.func @lstm_fc_kernel(%arg0: memref<72x16xbf16, #tpu.memory_space<vmem>>, %arg1: memref<16x1024xbf16, #tpu.memory_space<vmem>>, %arg2: memref<1x1024xf32, #tpu.memory_space<vmem>>, %arg3: memref<256x1024xbf16, #tpu.memory_space<vmem>>, %arg4: memref<128x128xbf16, #tpu.memory_space<vmem>>, %arg5: memref<1x128xf32, #tpu.memory_space<vmem>>, %arg6: memref<8x128xf32, #tpu.memory_space<vmem>>) attributes {dimension_semantics = [], scalar_prefetch = 0 : i64, scratch_operands = 0 : i64, tpu.core_type = #tpu.core_type<tc>} {
    %c0 = arith.constant 0 : index
    %c0_0 = arith.constant 0 : index
    %0 = vector.load %arg0[%c0, %c0_0] : memref<72x16xbf16, #tpu.memory_space<vmem>>, vector<72x16xbf16>
    %c0_1 = arith.constant 0 : index
    %c0_2 = arith.constant 0 : index
    %1 = vector.load %arg1[%c0_1, %c0_2] : memref<16x1024xbf16, #tpu.memory_space<vmem>>, vector<16x1024xbf16>
    %cst = arith.constant dense<0.000000e+00> : vector<72x1024xf32>
    %2 = tpu.matmul %0, %1, %cst {dimension_numbers = #tpu.dot_dimension_numbers<[1], [0], [0], [1], [0, 0, 1, 1], [], []>} : vector<72x16xbf16>, vector<16x1024xbf16>, vector<72x1024xf32> -> vector<72x1024xf32>
    %c0_3 = arith.constant 0 : index
    %c0_4 = arith.constant 0 : index
    %3 = vector.load %arg2[%c0_3, %c0_4] : memref<1x1024xf32, #tpu.memory_space<vmem>>, vector<1x1024xf32>
    %4 = vector.broadcast %3 : vector<1x1024xf32> to vector<72x1024xf32>
    %5 = arith.addf %2, %4 : vector<72x1024xf32>
    %c0_5 = arith.constant 0 : index
    %c0_6 = arith.constant 0 : index
    %6 = vector.load %arg3[%c0_5, %c0_6] : memref<256x1024xbf16, #tpu.memory_space<vmem>>, vector<256x1024xbf16>
    %cst_7 = arith.constant 0.000000e+00 : f32
    %7 = vector.broadcast %cst_7 : f32 to vector<8x128xf32>
    %8 = vector.extract_strided_slice %5 {offsets = [0, 0], sizes = [8, 1024], strides = [1, 1]} : vector<72x1024xf32> to vector<8x1024xf32>
    %9 = vector.extract_strided_slice %8 {offsets = [0, 384], sizes = [8, 384], strides = [1, 1]} : vector<8x1024xf32> to vector<8x384xf32>
    %10 = arith.negf %9 : vector<8x384xf32>
    %11 = math.exp %10 : vector<8x384xf32>
    %cst_8 = arith.constant 1.000000e+00 : f32
    %12 = vector.broadcast %cst_8 : f32 to vector<8x384xf32>
    %13 = arith.addf %12, %11 : vector<8x384xf32>
    %14 = arith.divf %12, %13 : vector<8x384xf32>
    %15 = vector.extract_strided_slice %8 {offsets = [0, 896], sizes = [8, 128], strides = [1, 1]} : vector<8x1024xf32> to vector<8x128xf32>
    %16 = math.tanh %15 : vector<8x128xf32>
    %17 = vector.extract_strided_slice %14 {offsets = [0, 128], sizes = [8, 128], strides = [1, 1]} : vector<8x384xf32> to vector<8x128xf32>
    %18 = arith.mulf %17, %7 : vector<8x128xf32>
    %19 = vector.extract_strided_slice %14 {offsets = [0, 0], sizes = [8, 128], strides = [1, 1]} : vector<8x384xf32> to vector<8x128xf32>
    %20 = arith.mulf %19, %16 : vector<8x128xf32>
    %21 = arith.addf %18, %20 : vector<8x128xf32>
    %22 = vector.extract_strided_slice %14 {offsets = [0, 256], sizes = [8, 128], strides = [1, 1]} : vector<8x384xf32> to vector<8x128xf32>
    %23 = math.tanh %21 : vector<8x128xf32>
    %24 = arith.mulf %22, %23 : vector<8x128xf32>
    %25 = tpu.concatenate %24, %7 in 1 : vector<8x128xf32>, vector<8x128xf32> -> vector<8x256xf32>
    %26 = arith.truncf %25 : vector<8x256xf32> to vector<8x256xbf16>
    %cst_9 = arith.constant dense<0.000000e+00> : vector<8x1024xf32>
    %27 = tpu.matmul %26, %6, %cst_9 {dimension_numbers = #tpu.dot_dimension_numbers<[1], [0], [0], [1], [0, 0, 1, 1], [], []>} : vector<8x256xbf16>, vector<256x1024xbf16>, vector<8x1024xf32> -> vector<8x1024xf32>
    %28 = vector.extract_strided_slice %5 {offsets = [8, 0], sizes = [8, 1024], strides = [1, 1]} : vector<72x1024xf32> to vector<8x1024xf32>
    %29 = arith.addf %27, %28 : vector<8x1024xf32>
    %30 = vector.extract_strided_slice %29 {offsets = [0, 0], sizes = [8, 768], strides = [1, 1]} : vector<8x1024xf32> to vector<8x768xf32>
    %31 = arith.negf %30 : vector<8x768xf32>
    %32 = math.exp %31 : vector<8x768xf32>
    %cst_10 = arith.constant 1.000000e+00 : f32
    %33 = vector.broadcast %cst_10 : f32 to vector<8x768xf32>
    %34 = arith.addf %33, %32 : vector<8x768xf32>
    %35 = arith.divf %33, %34 : vector<8x768xf32>
    %36 = vector.extract_strided_slice %29 {offsets = [0, 768], sizes = [8, 256], strides = [1, 1]} : vector<8x1024xf32> to vector<8x256xf32>
    %37 = math.tanh %36 : vector<8x256xf32>
    %38 = vector.extract_strided_slice %35 {offsets = [0, 128], sizes = [8, 128], strides = [1, 1]} : vector<8x768xf32> to vector<8x128xf32>
    %39 = arith.mulf %38, %7 : vector<8x128xf32>
    %40 = vector.extract_strided_slice %35 {offsets = [0, 0], sizes = [8, 128], strides = [1, 1]} : vector<8x768xf32> to vector<8x128xf32>
    %41 = vector.extract_strided_slice %37 {offsets = [0, 0], sizes = [8, 128], strides = [1, 1]} : vector<8x256xf32> to vector<8x128xf32>
    %42 = arith.mulf %40, %41 : vector<8x128xf32>
    %43 = arith.addf %39, %42 : vector<8x128xf32>
    %44 = vector.extract_strided_slice %35 {offsets = [0, 256], sizes = [8, 128], strides = [1, 1]} : vector<8x768xf32> to vector<8x128xf32>
    %45 = math.tanh %43 : vector<8x128xf32>
    %46 = arith.mulf %44, %45 : vector<8x128xf32>
    %47 = vector.extract_strided_slice %35 {offsets = [0, 512], sizes = [8, 128], strides = [1, 1]} : vector<8x768xf32> to vector<8x128xf32>
    %48 = arith.mulf %47, %21 : vector<8x128xf32>
    %49 = vector.extract_strided_slice %35 {offsets = [0, 384], sizes = [8, 128], strides = [1, 1]} : vector<8x768xf32> to vector<8x128xf32>
    %50 = vector.extract_strided_slice %37 {offsets = [0, 128], sizes = [8, 128], strides = [1, 1]} : vector<8x256xf32> to vector<8x128xf32>
    %51 = arith.mulf %49, %50 : vector<8x128xf32>
    %52 = arith.addf %48, %51 : vector<8x128xf32>
    %53 = vector.extract_strided_slice %35 {offsets = [0, 640], sizes = [8, 128], strides = [1, 1]} : vector<8x768xf32> to vector<8x128xf32>
    %54 = math.tanh %52 : vector<8x128xf32>
    %55 = arith.mulf %53, %54 : vector<8x128xf32>
    %56 = tpu.concatenate %55, %46 in 1 : vector<8x128xf32>, vector<8x128xf32> -> vector<8x256xf32>
    %57 = arith.truncf %56 : vector<8x256xf32> to vector<8x256xbf16>
    %cst_11 = arith.constant dense<0.000000e+00> : vector<8x1024xf32>
    %58 = tpu.matmul %57, %6, %cst_11 {dimension_numbers = #tpu.dot_dimension_numbers<[1], [0], [0], [1], [0, 0, 1, 1], [], []>} : vector<8x256xbf16>, vector<256x1024xbf16>, vector<8x1024xf32> -> vector<8x1024xf32>
    %59 = vector.extract_strided_slice %5 {offsets = [16, 0], sizes = [8, 1024], strides = [1, 1]} : vector<72x1024xf32> to vector<8x1024xf32>
    %60 = arith.addf %58, %59 : vector<8x1024xf32>
    %61 = vector.extract_strided_slice %60 {offsets = [0, 0], sizes = [8, 768], strides = [1, 1]} : vector<8x1024xf32> to vector<8x768xf32>
    %62 = arith.negf %61 : vector<8x768xf32>
    %63 = math.exp %62 : vector<8x768xf32>
    %cst_12 = arith.constant 1.000000e+00 : f32
    %64 = vector.broadcast %cst_12 : f32 to vector<8x768xf32>
    %65 = arith.addf %64, %63 : vector<8x768xf32>
    %66 = arith.divf %64, %65 : vector<8x768xf32>
    %67 = vector.extract_strided_slice %60 {offsets = [0, 768], sizes = [8, 256], strides = [1, 1]} : vector<8x1024xf32> to vector<8x256xf32>
    %68 = math.tanh %67 : vector<8x256xf32>
    %69 = vector.extract_strided_slice %66 {offsets = [0, 128], sizes = [8, 128], strides = [1, 1]} : vector<8x768xf32> to vector<8x128xf32>
    %70 = arith.mulf %69, %43 : vector<8x128xf32>
    %71 = vector.extract_strided_slice %66 {offsets = [0, 0], sizes = [8, 128], strides = [1, 1]} : vector<8x768xf32> to vector<8x128xf32>
    %72 = vector.extract_strided_slice %68 {offsets = [0, 0], sizes = [8, 128], strides = [1, 1]} : vector<8x256xf32> to vector<8x128xf32>
    %73 = arith.mulf %71, %72 : vector<8x128xf32>
    %74 = arith.addf %70, %73 : vector<8x128xf32>
    %75 = vector.extract_strided_slice %66 {offsets = [0, 256], sizes = [8, 128], strides = [1, 1]} : vector<8x768xf32> to vector<8x128xf32>
    %76 = math.tanh %74 : vector<8x128xf32>
    %77 = arith.mulf %75, %76 : vector<8x128xf32>
    %78 = vector.extract_strided_slice %66 {offsets = [0, 512], sizes = [8, 128], strides = [1, 1]} : vector<8x768xf32> to vector<8x128xf32>
    %79 = arith.mulf %78, %52 : vector<8x128xf32>
    %80 = vector.extract_strided_slice %66 {offsets = [0, 384], sizes = [8, 128], strides = [1, 1]} : vector<8x768xf32> to vector<8x128xf32>
    %81 = vector.extract_strided_slice %68 {offsets = [0, 128], sizes = [8, 128], strides = [1, 1]} : vector<8x256xf32> to vector<8x128xf32>
    %82 = arith.mulf %80, %81 : vector<8x128xf32>
    %83 = arith.addf %79, %82 : vector<8x128xf32>
    %84 = vector.extract_strided_slice %66 {offsets = [0, 640], sizes = [8, 128], strides = [1, 1]} : vector<8x768xf32> to vector<8x128xf32>
    %85 = math.tanh %83 : vector<8x128xf32>
    %86 = arith.mulf %84, %85 : vector<8x128xf32>
    %87 = tpu.concatenate %86, %77 in 1 : vector<8x128xf32>, vector<8x128xf32> -> vector<8x256xf32>
    %88 = arith.truncf %87 : vector<8x256xf32> to vector<8x256xbf16>
    %cst_13 = arith.constant dense<0.000000e+00> : vector<8x1024xf32>
    %89 = tpu.matmul %88, %6, %cst_13 {dimension_numbers = #tpu.dot_dimension_numbers<[1], [0], [0], [1], [0, 0, 1, 1], [], []>} : vector<8x256xbf16>, vector<256x1024xbf16>, vector<8x1024xf32> -> vector<8x1024xf32>
    %90 = vector.extract_strided_slice %5 {offsets = [24, 0], sizes = [8, 1024], strides = [1, 1]} : vector<72x1024xf32> to vector<8x1024xf32>
    %91 = arith.addf %89, %90 : vector<8x1024xf32>
    %92 = vector.extract_strided_slice %91 {offsets = [0, 0], sizes = [8, 768], strides = [1, 1]} : vector<8x1024xf32> to vector<8x768xf32>
    %93 = arith.negf %92 : vector<8x768xf32>
    %94 = math.exp %93 : vector<8x768xf32>
    %cst_14 = arith.constant 1.000000e+00 : f32
    %95 = vector.broadcast %cst_14 : f32 to vector<8x768xf32>
    %96 = arith.addf %95, %94 : vector<8x768xf32>
    %97 = arith.divf %95, %96 : vector<8x768xf32>
    %98 = vector.extract_strided_slice %91 {offsets = [0, 768], sizes = [8, 256], strides = [1, 1]} : vector<8x1024xf32> to vector<8x256xf32>
    %99 = math.tanh %98 : vector<8x256xf32>
    %100 = vector.extract_strided_slice %97 {offsets = [0, 128], sizes = [8, 128], strides = [1, 1]} : vector<8x768xf32> to vector<8x128xf32>
    %101 = arith.mulf %100, %74 : vector<8x128xf32>
    %102 = vector.extract_strided_slice %97 {offsets = [0, 0], sizes = [8, 128], strides = [1, 1]} : vector<8x768xf32> to vector<8x128xf32>
    %103 = vector.extract_strided_slice %99 {offsets = [0, 0], sizes = [8, 128], strides = [1, 1]} : vector<8x256xf32> to vector<8x128xf32>
    %104 = arith.mulf %102, %103 : vector<8x128xf32>
    %105 = arith.addf %101, %104 : vector<8x128xf32>
    %106 = vector.extract_strided_slice %97 {offsets = [0, 256], sizes = [8, 128], strides = [1, 1]} : vector<8x768xf32> to vector<8x128xf32>
    %107 = math.tanh %105 : vector<8x128xf32>
    %108 = arith.mulf %106, %107 : vector<8x128xf32>
    %109 = vector.extract_strided_slice %97 {offsets = [0, 512], sizes = [8, 128], strides = [1, 1]} : vector<8x768xf32> to vector<8x128xf32>
    %110 = arith.mulf %109, %83 : vector<8x128xf32>
    %111 = vector.extract_strided_slice %97 {offsets = [0, 384], sizes = [8, 128], strides = [1, 1]} : vector<8x768xf32> to vector<8x128xf32>
    %112 = vector.extract_strided_slice %99 {offsets = [0, 128], sizes = [8, 128], strides = [1, 1]} : vector<8x256xf32> to vector<8x128xf32>
    %113 = arith.mulf %111, %112 : vector<8x128xf32>
    %114 = arith.addf %110, %113 : vector<8x128xf32>
    %115 = vector.extract_strided_slice %97 {offsets = [0, 640], sizes = [8, 128], strides = [1, 1]} : vector<8x768xf32> to vector<8x128xf32>
    %116 = math.tanh %114 : vector<8x128xf32>
    %117 = arith.mulf %115, %116 : vector<8x128xf32>
    %118 = tpu.concatenate %117, %108 in 1 : vector<8x128xf32>, vector<8x128xf32> -> vector<8x256xf32>
    %119 = arith.truncf %118 : vector<8x256xf32> to vector<8x256xbf16>
    %cst_15 = arith.constant dense<0.000000e+00> : vector<8x1024xf32>
    %120 = tpu.matmul %119, %6, %cst_15 {dimension_numbers = #tpu.dot_dimension_numbers<[1], [0], [0], [1], [0, 0, 1, 1], [], []>} : vector<8x256xbf16>, vector<256x1024xbf16>, vector<8x1024xf32> -> vector<8x1024xf32>
    %121 = vector.extract_strided_slice %5 {offsets = [32, 0], sizes = [8, 1024], strides = [1, 1]} : vector<72x1024xf32> to vector<8x1024xf32>
    %122 = arith.addf %120, %121 : vector<8x1024xf32>
    %123 = vector.extract_strided_slice %122 {offsets = [0, 0], sizes = [8, 768], strides = [1, 1]} : vector<8x1024xf32> to vector<8x768xf32>
    %124 = arith.negf %123 : vector<8x768xf32>
    %125 = math.exp %124 : vector<8x768xf32>
    %cst_16 = arith.constant 1.000000e+00 : f32
    %126 = vector.broadcast %cst_16 : f32 to vector<8x768xf32>
    %127 = arith.addf %126, %125 : vector<8x768xf32>
    %128 = arith.divf %126, %127 : vector<8x768xf32>
    %129 = vector.extract_strided_slice %122 {offsets = [0, 768], sizes = [8, 256], strides = [1, 1]} : vector<8x1024xf32> to vector<8x256xf32>
    %130 = math.tanh %129 : vector<8x256xf32>
    %131 = vector.extract_strided_slice %128 {offsets = [0, 128], sizes = [8, 128], strides = [1, 1]} : vector<8x768xf32> to vector<8x128xf32>
    %132 = arith.mulf %131, %105 : vector<8x128xf32>
    %133 = vector.extract_strided_slice %128 {offsets = [0, 0], sizes = [8, 128], strides = [1, 1]} : vector<8x768xf32> to vector<8x128xf32>
    %134 = vector.extract_strided_slice %130 {offsets = [0, 0], sizes = [8, 128], strides = [1, 1]} : vector<8x256xf32> to vector<8x128xf32>
    %135 = arith.mulf %133, %134 : vector<8x128xf32>
    %136 = arith.addf %132, %135 : vector<8x128xf32>
    %137 = vector.extract_strided_slice %128 {offsets = [0, 256], sizes = [8, 128], strides = [1, 1]} : vector<8x768xf32> to vector<8x128xf32>
    %138 = math.tanh %136 : vector<8x128xf32>
    %139 = arith.mulf %137, %138 : vector<8x128xf32>
    %140 = vector.extract_strided_slice %128 {offsets = [0, 512], sizes = [8, 128], strides = [1, 1]} : vector<8x768xf32> to vector<8x128xf32>
    %141 = arith.mulf %140, %114 : vector<8x128xf32>
    %142 = vector.extract_strided_slice %128 {offsets = [0, 384], sizes = [8, 128], strides = [1, 1]} : vector<8x768xf32> to vector<8x128xf32>
    %143 = vector.extract_strided_slice %130 {offsets = [0, 128], sizes = [8, 128], strides = [1, 1]} : vector<8x256xf32> to vector<8x128xf32>
    %144 = arith.mulf %142, %143 : vector<8x128xf32>
    %145 = arith.addf %141, %144 : vector<8x128xf32>
    %146 = vector.extract_strided_slice %128 {offsets = [0, 640], sizes = [8, 128], strides = [1, 1]} : vector<8x768xf32> to vector<8x128xf32>
    %147 = math.tanh %145 : vector<8x128xf32>
    %148 = arith.mulf %146, %147 : vector<8x128xf32>
    %149 = tpu.concatenate %148, %139 in 1 : vector<8x128xf32>, vector<8x128xf32> -> vector<8x256xf32>
    %150 = arith.truncf %149 : vector<8x256xf32> to vector<8x256xbf16>
    %cst_17 = arith.constant dense<0.000000e+00> : vector<8x1024xf32>
    %151 = tpu.matmul %150, %6, %cst_17 {dimension_numbers = #tpu.dot_dimension_numbers<[1], [0], [0], [1], [0, 0, 1, 1], [], []>} : vector<8x256xbf16>, vector<256x1024xbf16>, vector<8x1024xf32> -> vector<8x1024xf32>
    %152 = vector.extract_strided_slice %5 {offsets = [40, 0], sizes = [8, 1024], strides = [1, 1]} : vector<72x1024xf32> to vector<8x1024xf32>
    %153 = arith.addf %151, %152 : vector<8x1024xf32>
    %154 = vector.extract_strided_slice %153 {offsets = [0, 0], sizes = [8, 768], strides = [1, 1]} : vector<8x1024xf32> to vector<8x768xf32>
    %155 = arith.negf %154 : vector<8x768xf32>
    %156 = math.exp %155 : vector<8x768xf32>
    %cst_18 = arith.constant 1.000000e+00 : f32
    %157 = vector.broadcast %cst_18 : f32 to vector<8x768xf32>
    %158 = arith.addf %157, %156 : vector<8x768xf32>
    %159 = arith.divf %157, %158 : vector<8x768xf32>
    %160 = vector.extract_strided_slice %153 {offsets = [0, 768], sizes = [8, 256], strides = [1, 1]} : vector<8x1024xf32> to vector<8x256xf32>
    %161 = math.tanh %160 : vector<8x256xf32>
    %162 = vector.extract_strided_slice %159 {offsets = [0, 128], sizes = [8, 128], strides = [1, 1]} : vector<8x768xf32> to vector<8x128xf32>
    %163 = arith.mulf %162, %136 : vector<8x128xf32>
    %164 = vector.extract_strided_slice %159 {offsets = [0, 0], sizes = [8, 128], strides = [1, 1]} : vector<8x768xf32> to vector<8x128xf32>
    %165 = vector.extract_strided_slice %161 {offsets = [0, 0], sizes = [8, 128], strides = [1, 1]} : vector<8x256xf32> to vector<8x128xf32>
    %166 = arith.mulf %164, %165 : vector<8x128xf32>
    %167 = arith.addf %163, %166 : vector<8x128xf32>
    %168 = vector.extract_strided_slice %159 {offsets = [0, 256], sizes = [8, 128], strides = [1, 1]} : vector<8x768xf32> to vector<8x128xf32>
    %169 = math.tanh %167 : vector<8x128xf32>
    %170 = arith.mulf %168, %169 : vector<8x128xf32>
    %171 = vector.extract_strided_slice %159 {offsets = [0, 512], sizes = [8, 128], strides = [1, 1]} : vector<8x768xf32> to vector<8x128xf32>
    %172 = arith.mulf %171, %145 : vector<8x128xf32>
    %173 = vector.extract_strided_slice %159 {offsets = [0, 384], sizes = [8, 128], strides = [1, 1]} : vector<8x768xf32> to vector<8x128xf32>
    %174 = vector.extract_strided_slice %161 {offsets = [0, 128], sizes = [8, 128], strides = [1, 1]} : vector<8x256xf32> to vector<8x128xf32>
    %175 = arith.mulf %173, %174 : vector<8x128xf32>
    %176 = arith.addf %172, %175 : vector<8x128xf32>
    %177 = vector.extract_strided_slice %159 {offsets = [0, 640], sizes = [8, 128], strides = [1, 1]} : vector<8x768xf32> to vector<8x128xf32>
    %178 = math.tanh %176 : vector<8x128xf32>
    %179 = arith.mulf %177, %178 : vector<8x128xf32>
    %180 = tpu.concatenate %179, %170 in 1 : vector<8x128xf32>, vector<8x128xf32> -> vector<8x256xf32>
    %181 = arith.truncf %180 : vector<8x256xf32> to vector<8x256xbf16>
    %cst_19 = arith.constant dense<0.000000e+00> : vector<8x1024xf32>
    %182 = tpu.matmul %181, %6, %cst_19 {dimension_numbers = #tpu.dot_dimension_numbers<[1], [0], [0], [1], [0, 0, 1, 1], [], []>} : vector<8x256xbf16>, vector<256x1024xbf16>, vector<8x1024xf32> -> vector<8x1024xf32>
    %183 = vector.extract_strided_slice %5 {offsets = [48, 0], sizes = [8, 1024], strides = [1, 1]} : vector<72x1024xf32> to vector<8x1024xf32>
    %184 = arith.addf %182, %183 : vector<8x1024xf32>
    %185 = vector.extract_strided_slice %184 {offsets = [0, 0], sizes = [8, 768], strides = [1, 1]} : vector<8x1024xf32> to vector<8x768xf32>
    %186 = arith.negf %185 : vector<8x768xf32>
    %187 = math.exp %186 : vector<8x768xf32>
    %cst_20 = arith.constant 1.000000e+00 : f32
    %188 = vector.broadcast %cst_20 : f32 to vector<8x768xf32>
    %189 = arith.addf %188, %187 : vector<8x768xf32>
    %190 = arith.divf %188, %189 : vector<8x768xf32>
    %191 = vector.extract_strided_slice %184 {offsets = [0, 768], sizes = [8, 256], strides = [1, 1]} : vector<8x1024xf32> to vector<8x256xf32>
    %192 = math.tanh %191 : vector<8x256xf32>
    %193 = vector.extract_strided_slice %190 {offsets = [0, 128], sizes = [8, 128], strides = [1, 1]} : vector<8x768xf32> to vector<8x128xf32>
    %194 = arith.mulf %193, %167 : vector<8x128xf32>
    %195 = vector.extract_strided_slice %190 {offsets = [0, 0], sizes = [8, 128], strides = [1, 1]} : vector<8x768xf32> to vector<8x128xf32>
    %196 = vector.extract_strided_slice %192 {offsets = [0, 0], sizes = [8, 128], strides = [1, 1]} : vector<8x256xf32> to vector<8x128xf32>
    %197 = arith.mulf %195, %196 : vector<8x128xf32>
    %198 = arith.addf %194, %197 : vector<8x128xf32>
    %199 = vector.extract_strided_slice %190 {offsets = [0, 256], sizes = [8, 128], strides = [1, 1]} : vector<8x768xf32> to vector<8x128xf32>
    %200 = math.tanh %198 : vector<8x128xf32>
    %201 = arith.mulf %199, %200 : vector<8x128xf32>
    %202 = vector.extract_strided_slice %190 {offsets = [0, 512], sizes = [8, 128], strides = [1, 1]} : vector<8x768xf32> to vector<8x128xf32>
    %203 = arith.mulf %202, %176 : vector<8x128xf32>
    %204 = vector.extract_strided_slice %190 {offsets = [0, 384], sizes = [8, 128], strides = [1, 1]} : vector<8x768xf32> to vector<8x128xf32>
    %205 = vector.extract_strided_slice %192 {offsets = [0, 128], sizes = [8, 128], strides = [1, 1]} : vector<8x256xf32> to vector<8x128xf32>
    %206 = arith.mulf %204, %205 : vector<8x128xf32>
    %207 = arith.addf %203, %206 : vector<8x128xf32>
    %208 = vector.extract_strided_slice %190 {offsets = [0, 640], sizes = [8, 128], strides = [1, 1]} : vector<8x768xf32> to vector<8x128xf32>
    %209 = math.tanh %207 : vector<8x128xf32>
    %210 = arith.mulf %208, %209 : vector<8x128xf32>
    %211 = tpu.concatenate %210, %201 in 1 : vector<8x128xf32>, vector<8x128xf32> -> vector<8x256xf32>
    %212 = arith.truncf %211 : vector<8x256xf32> to vector<8x256xbf16>
    %cst_21 = arith.constant dense<0.000000e+00> : vector<8x1024xf32>
    %213 = tpu.matmul %212, %6, %cst_21 {dimension_numbers = #tpu.dot_dimension_numbers<[1], [0], [0], [1], [0, 0, 1, 1], [], []>} : vector<8x256xbf16>, vector<256x1024xbf16>, vector<8x1024xf32> -> vector<8x1024xf32>
    %214 = vector.extract_strided_slice %5 {offsets = [56, 0], sizes = [8, 1024], strides = [1, 1]} : vector<72x1024xf32> to vector<8x1024xf32>
    %215 = arith.addf %213, %214 : vector<8x1024xf32>
    %216 = vector.extract_strided_slice %215 {offsets = [0, 0], sizes = [8, 768], strides = [1, 1]} : vector<8x1024xf32> to vector<8x768xf32>
    %217 = arith.negf %216 : vector<8x768xf32>
    %218 = math.exp %217 : vector<8x768xf32>
    %cst_22 = arith.constant 1.000000e+00 : f32
    %219 = vector.broadcast %cst_22 : f32 to vector<8x768xf32>
    %220 = arith.addf %219, %218 : vector<8x768xf32>
    %221 = arith.divf %219, %220 : vector<8x768xf32>
    %222 = vector.extract_strided_slice %215 {offsets = [0, 768], sizes = [8, 256], strides = [1, 1]} : vector<8x1024xf32> to vector<8x256xf32>
    %223 = math.tanh %222 : vector<8x256xf32>
    %224 = vector.extract_strided_slice %221 {offsets = [0, 128], sizes = [8, 128], strides = [1, 1]} : vector<8x768xf32> to vector<8x128xf32>
    %225 = arith.mulf %224, %198 : vector<8x128xf32>
    %226 = vector.extract_strided_slice %221 {offsets = [0, 0], sizes = [8, 128], strides = [1, 1]} : vector<8x768xf32> to vector<8x128xf32>
    %227 = vector.extract_strided_slice %223 {offsets = [0, 0], sizes = [8, 128], strides = [1, 1]} : vector<8x256xf32> to vector<8x128xf32>
    %228 = arith.mulf %226, %227 : vector<8x128xf32>
    %229 = arith.addf %225, %228 : vector<8x128xf32>
    %230 = vector.extract_strided_slice %221 {offsets = [0, 256], sizes = [8, 128], strides = [1, 1]} : vector<8x768xf32> to vector<8x128xf32>
    %231 = math.tanh %229 : vector<8x128xf32>
    %232 = arith.mulf %230, %231 : vector<8x128xf32>
    %233 = vector.extract_strided_slice %221 {offsets = [0, 512], sizes = [8, 128], strides = [1, 1]} : vector<8x768xf32> to vector<8x128xf32>
    %234 = arith.mulf %233, %207 : vector<8x128xf32>
    %235 = vector.extract_strided_slice %221 {offsets = [0, 384], sizes = [8, 128], strides = [1, 1]} : vector<8x768xf32> to vector<8x128xf32>
    %236 = vector.extract_strided_slice %223 {offsets = [0, 128], sizes = [8, 128], strides = [1, 1]} : vector<8x256xf32> to vector<8x128xf32>
    %237 = arith.mulf %235, %236 : vector<8x128xf32>
    %238 = arith.addf %234, %237 : vector<8x128xf32>
    %239 = vector.extract_strided_slice %221 {offsets = [0, 640], sizes = [8, 128], strides = [1, 1]} : vector<8x768xf32> to vector<8x128xf32>
    %240 = math.tanh %238 : vector<8x128xf32>
    %241 = arith.mulf %239, %240 : vector<8x128xf32>
    %242 = tpu.concatenate %241, %232 in 1 : vector<8x128xf32>, vector<8x128xf32> -> vector<8x256xf32>
    %243 = arith.truncf %242 : vector<8x256xf32> to vector<8x256xbf16>
    %cst_23 = arith.constant dense<0.000000e+00> : vector<8x1024xf32>
    %244 = tpu.matmul %243, %6, %cst_23 {dimension_numbers = #tpu.dot_dimension_numbers<[1], [0], [0], [1], [0, 0, 1, 1], [], []>} : vector<8x256xbf16>, vector<256x1024xbf16>, vector<8x1024xf32> -> vector<8x1024xf32>
    %245 = vector.extract_strided_slice %5 {offsets = [64, 0], sizes = [8, 1024], strides = [1, 1]} : vector<72x1024xf32> to vector<8x1024xf32>
    %246 = arith.addf %244, %245 : vector<8x1024xf32>
    %247 = vector.extract_strided_slice %246 {offsets = [0, 0], sizes = [8, 384], strides = [1, 1]} : vector<8x1024xf32> to vector<8x384xf32>
    %248 = arith.negf %247 : vector<8x384xf32>
    %249 = math.exp %248 : vector<8x384xf32>
    %cst_24 = arith.constant 1.000000e+00 : f32
    %250 = vector.broadcast %cst_24 : f32 to vector<8x384xf32>
    %251 = arith.addf %250, %249 : vector<8x384xf32>
    %252 = arith.divf %250, %251 : vector<8x384xf32>
    %253 = vector.extract_strided_slice %246 {offsets = [0, 768], sizes = [8, 128], strides = [1, 1]} : vector<8x1024xf32> to vector<8x128xf32>
    %254 = math.tanh %253 : vector<8x128xf32>
    %255 = vector.extract_strided_slice %252 {offsets = [0, 128], sizes = [8, 128], strides = [1, 1]} : vector<8x384xf32> to vector<8x128xf32>
    %256 = arith.mulf %255, %229 : vector<8x128xf32>
    %257 = vector.extract_strided_slice %252 {offsets = [0, 0], sizes = [8, 128], strides = [1, 1]} : vector<8x384xf32> to vector<8x128xf32>
    %258 = arith.mulf %257, %254 : vector<8x128xf32>
    %259 = arith.addf %256, %258 : vector<8x128xf32>
    %260 = vector.extract_strided_slice %252 {offsets = [0, 256], sizes = [8, 128], strides = [1, 1]} : vector<8x384xf32> to vector<8x128xf32>
    %261 = math.tanh %259 : vector<8x128xf32>
    %262 = arith.mulf %260, %261 : vector<8x128xf32>
    %263 = arith.truncf %262 : vector<8x128xf32> to vector<8x128xbf16>
    %c0_25 = arith.constant 0 : index
    %c0_26 = arith.constant 0 : index
    %264 = vector.load %arg4[%c0_25, %c0_26] : memref<128x128xbf16, #tpu.memory_space<vmem>>, vector<128x128xbf16>
    %cst_27 = arith.constant dense<0.000000e+00> : vector<8x128xf32>
    %265 = tpu.matmul %263, %264, %cst_27 {dimension_numbers = #tpu.dot_dimension_numbers<[1], [0], [0], [1], [0, 0, 1, 1], [], []>} : vector<8x128xbf16>, vector<128x128xbf16>, vector<8x128xf32> -> vector<8x128xf32>
    %c0_28 = arith.constant 0 : index
    %c0_29 = arith.constant 0 : index
    %266 = vector.load %arg5[%c0_28, %c0_29] : memref<1x128xf32, #tpu.memory_space<vmem>>, vector<1x128xf32>
    %267 = vector.broadcast %266 : vector<1x128xf32> to vector<8x128xf32>
    %268 = arith.addf %265, %267 : vector<8x128xf32>
    %c0_30 = arith.constant 0 : index
    %c0_31 = arith.constant 0 : index
    %269 = vector.load %arg6[%c0_30, %c0_31] : memref<8x128xf32, #tpu.memory_space<vmem>>, vector<8x128xf32>
    tpu.vector_store %arg6[%c0_30, %c0_31], %268 {strides = array<i32>} : memref<8x128xf32, #tpu.memory_space<vmem>>, vector<8x128xf32>,
    return
  }
}

</mosaic_0001>

<llo_original>
// kernel: lstm_forward.1
$region0: #{lstm_forward.1}
  #allocation0 [shape = 'u32[]', space=smem, size = 0x4, offset = 0x4, fixed_abs, tag = 'smem constant byte address 0x4 - core index']
  #allocation1 [shape = 'u32[72,128]{1,0:T(1,128)}', space=vmem, size = 0x9000, scoped, tag = 'internal scratch']
  %s0 = inlined_call_operand.vmem [shape: bf16[72,16], index: 0, kind: input, shape index: {}]
  %s1 = inlined_call_operand.vmem [shape: bf16[16,1024], index: 1, kind: input, shape index: {}]
  %s2 = inlined_call_operand.vmem [shape: f32[1,1024], index: 2, kind: input, shape index: {}]
  %s3 = inlined_call_operand.hbm [shape: bf16[256,1024], index: 3, kind: input, shape index: {}]
  %s4 = inlined_call_operand.hbm [shape: bf16[128,128], index: 4, kind: input, shape index: {}]
  %s5 = inlined_call_operand.vmem [shape: f32[1,128], index: 5, kind: input, shape index: {}]
  %s6 = inlined_call_operand.vmem [shape: f32[8,128], index: 6, kind: output, shape index: {}]
  %s7 = sld [smem:[#allocation0]]
  $region42: #{lstm_forward.1} parent=0
    _
  %s9 = ssub.s32 1, %s7
  %s10 = scalar_select 0, %s9, %s7
  $region1: #{lstm_forward.1} parent=0
    #allocation2 [shape = 'u8[524288]{0}', space=vmem, size = 0x80000, scoped, tag = 'input window, operand 3, single buffered']
    #allocation3 [shape = 's32[1]{0}', space=sflag, size = 0x4, scoped, tag = 'scoped memory for lstm_forward.1']
    #allocation4 [shape = 'u8[32768]{0}', space=vmem, size = 0x8000, scoped, tag = 'input window, operand 4, single buffered']
    #allocation5 [shape = 's32[1]{0}', space=sflag, size = 0x4, scoped, tag = 'scoped memory for lstm_forward.1']
    %11 = vsyncpa [#allocation3], 0
    %12 = vsyncpa [#allocation5], 0
    // Predicated region
    $region2: #{lstm_forward.1} parent=1 // pred_check
      _
    $region3: #{lstm_forward.1} parent=1 // pred_check_branch
      %14 = sbr.rel (0) target = $region5
    $region4: #{lstm_forward.1} parent=1 // pred_region
      _
    $region5: #{lstm_forward.1} parent=1 // pred_fallthru
      _
    // Predicated region
    $region6: #{lstm_forward.1} parent=1 // pred_check
      _
    $region7: #{lstm_forward.1} parent=1 // pred_check_branch
      %16 = sbr.rel (0) target = $region9
    $region8: #{lstm_forward.1} parent=1 // pred_region
      _
    $region9: #{lstm_forward.1} parent=1 // pred_fallthru
      _
    // Predicated region
    $region10: #{lstm_forward.1} parent=1 // pred_check
      _
    $region11: #{lstm_forward.1} parent=1 // pred_check_branch
      %18 = sbr.rel (0) target = $region13
    $region12: #{lstm_forward.1} parent=1 // pred_region
      _
    $region13: #{lstm_forward.1} parent=1 // pred_fallthru
      _
    // Predicated region
    $region14: #{lstm_forward.1} parent=1 // pred_check
      _
    $region15: #{lstm_forward.1} parent=1 // pred_check_branch
      %20 = sbr.rel (0) target = $region17
    $region16: #{lstm_forward.1} parent=1 // pred_region
      %22 = vsyncadd [#allocation3], 0
      %s23 = sshll.u32 %s3, 4
      %s24 = int_to_ptr.hbm [resolvable:$true] %s23
      %s25 = sshll.u32 [#allocation2], 4
      %s26 = int_to_ptr.vmem [resolvable:$true] %s25
      %31 = dma.hbm_to_vmem [thread:$0]  %s24, 16384, %s26, [#allocation3], 512, 512, 32
    $region17: #{lstm_forward.1} parent=1 // pred_fallthru
      _
    // Predicated region
    $region18: #{lstm_forward.1} parent=1 // pred_check
      _
    $region19: #{lstm_forward.1} parent=1 // pred_check_branch
      %33 = sbr.rel (0) target = $region21
    $region20: #{lstm_forward.1} parent=1 // pred_region
      %35 = vsyncadd [#allocation5], 0
      %s36 = sshll.u32 %s4, 4
      %s37 = int_to_ptr.hbm [resolvable:$true] %s36
      %s38 = sshll.u32 [#allocation4], 4
      %s39 = int_to_ptr.vmem [resolvable:$true] %s38
      %44 = dma.hbm_to_vmem [thread:$0]  %s37, 1024, %s39, [#allocation5], 64, 64, 4
    $region21: #{lstm_forward.1} parent=1 // pred_fallthru
      _
    // Predicated region
    $region22: #{lstm_forward.1} parent=1 // pred_check
      _
    $region23: #{lstm_forward.1} parent=1 // pred_check_branch
      %46 = sbr.rel (0) target = $region25
    $region24: #{lstm_forward.1} parent=1 // pred_region
      _
    $region25: #{lstm_forward.1} parent=1 // pred_fallthru
      _
    // Predicated region
    $region26: #{lstm_forward.1} parent=1 // pred_check
      _
    $region27: #{lstm_forward.1} parent=1 // pred_check_branch
      %48 = sbr.rel (0) target = $region29
    $region28: #{lstm_forward.1} parent=1 // pred_region
      %50 = dma.done [#allocation3], 16384
    $region29: #{lstm_forward.1} parent=1 // pred_fallthru
      _
    // Predicated region
    $region30: #{lstm_forward.1} parent=1 // pred_check
      _
    $region31: #{lstm_forward.1} parent=1 // pred_check_branch
      %52 = sbr.rel (0) target = $region33
    $region32: #{lstm_forward.1} parent=1 // pred_region
      %54 = dma.done [#allocation5], 1024
    $region33: #{lstm_forward.1} parent=1 // pred_fallthru
      _
    %v56 = vld [vmem:[%s0] sm:$0xf]
    %v57 = vld [vmem:[%s0 + $0x4] sm:$0xf]
    %v58 = vld [vmem:[%s0 + $0x8] sm:$0xf]
    %v59 = vld [vmem:[%s0 + $0xc] sm:$0xf]
    %v60 = vld [vmem:[%s0 + $0x10] sm:$0xf]
    %v61 = vld [vmem:[%s0 + $0x14] sm:$0xf]
    %v62 = vld [vmem:[%s0 + $0x18] sm:$0xf]
    %v63 = vld [vmem:[%s0 + $0x1c] sm:$0xf]
    %v64 = vld [vmem:[%s0 + $0x20] sm:$0xf]
    %v65 = vld [vmem:[%s1] sm:$0xff]
    %v66 = vld [vmem:[%s1 + $0x8] sm:$0xff]
    %v67 = vld [vmem:[%s1 + $0x10] sm:$0xff]
    %v68 = vld [vmem:[%s1 + $0x18] sm:$0xff]
    %v69 = vld [vmem:[%s1 + $0x20] sm:$0xff]
    %v70 = vld [vmem:[%s1 + $0x28] sm:$0xff]
    %v71 = vld [vmem:[%s1 + $0x30] sm:$0xff]
    %v72 = vld [vmem:[%s1 + $0x38] sm:$0xff]
    %v73 = vld [vmem:[%s2] sm:$0xff]
    %v75 = vperm.slane %v73, 0
    %v76 = vperm.slane %v73, 1
    %v77 = vperm.slane %v73, 2
    %v78 = vperm.slane %v73, 3
    %v79 = vperm.slane %v73, 4
    %v80 = vperm.slane %v73, 5
    %v81 = vperm.slane %v73, 6
    %v82 = vperm.slane %v73, 7
    %v100 = vunpack.c.l.b16 %v56
    %v101 = vunpack.c.l.b16 %v57
    %v102 = vunpack.c.l.b16 %v58
    %v103 = vunpack.c.l.b16 %v59
    %v104 = vunpack.c.l.b16 %v60
    %v105 = vunpack.c.l.b16 %v61
    %v106 = vunpack.c.l.b16 %v62
    %v107 = vunpack.c.l.b16 %v63
    %v108 = vunpack.c.l.b16 %v64
    %v109 = vpack.c.b16 %v101, %v100
    %v110 = vpack.c.b16 %v103, %v102
    %v111 = vpack.c.b16 %v105, %v104
    %v112 = vpack.c.b16 %v107, %v106
    %v113 = vpack.c.b16 %v108, %v108
    %v122 = vunpack.c.l.b16 %v65
    %v123 = vunpack.c.h.b16 %v65
    %v124 = vunpack.c.l.b16 %v66
    %v125 = vunpack.c.h.b16 %v66
    %v126 = vunpack.c.l.b16 %v67
    %v127 = vunpack.c.h.b16 %v67
    %v128 = vunpack.c.l.b16 %v68
    %v129 = vunpack.c.h.b16 %v68
    %v130 = vunpack.c.l.b16 %v69
    %v131 = vunpack.c.h.b16 %v69
    %v132 = vunpack.c.l.b16 %v70
    %v133 = vunpack.c.h.b16 %v70
    %v134 = vunpack.c.l.b16 %v71
    %v135 = vunpack.c.h.b16 %v71
    %v136 = vunpack.c.l.b16 %v72
    %v137 = vunpack.c.h.b16 %v72
    %v138 = vpack.c.b16 %v130, %v122
    %v139 = vpack.c.b16 %v131, %v123
    %v140 = vpack.c.b16 %v132, %v124
    %v141 = vpack.c.b16 %v133, %v125
    %v142 = vpack.c.b16 %v134, %v126
    %v143 = vpack.c.b16 %v135, %v127
    %v144 = vpack.c.b16 %v136, %v128
    %v145 = vpack.c.b16 %v137, %v129
    %vm154 = vcmask 130048
    %v156 = vsel %vm154, %v109, 0
    %v159 = vsel %vm154, %v110, 0
    %v162 = vsel %vm154, %v111, 0
    %v165 = vsel %vm154, %v112, 0
    %v168 = vsel %vm154, %v113, 0
    %170 = vmatpush.bf16.msra.mxu0 0
    %171 = vmatpush.bf16.msra.mxu0 0
    %172 = vmatpush.bf16.msra.mxu0 0
    %173 = vmatpush.bf16.msra.mxu0 0
    %174 = vmatpush.bf16.msra.mxu0 0
    %175 = vmatpush.bf16.msra.mxu0 0
    %176 = vmatpush.bf16.msra.mxu0 0
    %177 = vmatpush.bf16.msra.mxu0 %v138
    %178 = vmatmul.bf16.gmra.mxu0 %v156
    %v179 = vpop.f32.mrf.mxu0
    %v180 = vpop.f32.mrf.mxu0
    %v181 = vadd.f32 %v75, %v180
    %182 = vmatmul.bf16.gmra.mxu0 %v159
    %v183 = vpop.f32.mrf.mxu0
    %v184 = vadd.f32 %v75, %v183
    %v185 = vpop.f32.mrf.mxu0
    %v186 = vadd.f32 %v75, %v185
    %187 = vmatmul.bf16.gmra.mxu0 %v162
    %v188 = vpop.f32.mrf.mxu0
    %v189 = vadd.f32 %v75, %v188
    %v190 = vpop.f32.mrf.mxu0
    %v191 = vadd.f32 %v75, %v190
    %192 = vmatmul.bf16.gmra.mxu0 %v165
    %v193 = vpop.f32.mrf.mxu0
    %v194 = vadd.f32 %v75, %v193
    %v195 = vpop.f32.mrf.mxu0
    %v196 = vadd.f32 %v75, %v195
    %197 = vmatmul.bf16.gmra.mxu0 %v168
    %v198 = vpop.f32.mrf.mxu0
    %v199 = vadd.f32 %v75, %v198
    %v200 = vpop.f32.mrf.mxu0
    %201 = vdwg.mxu0
    %202 = vmatpush.bf16.msra.mxu0 0
    %203 = vmatpush.bf16.msra.mxu0 0
    %204 = vmatpush.bf16.msra.mxu0 0
    %205 = vmatpush.bf16.msra.mxu0 0
    %206 = vmatpush.bf16.msra.mxu0 0
    %207 = vmatpush.bf16.msra.mxu0 0
    %208 = vmatpush.bf16.msra.mxu0 0
    %209 = vmatpush.bf16.msra.mxu0 %v139
    %210 = vmatmul.bf16.gmra.mxu0 %v156
    %v211 = vpop.f32.mrf.mxu0
    %v212 = vpop.f32.mrf.mxu0
    %v213 = vadd.f32 %v76, %v212
    %214 = vmatmul.bf16.gmra.mxu0 %v159
    %v215 = vpop.f32.mrf.mxu0
    %v216 = vadd.f32 %v76, %v215
    %v217 = vpop.f32.mrf.mxu0
    %v218 = vadd.f32 %v76, %v217
    %219 = vmatmul.bf16.gmra.mxu0 %v162
    %v220 = vpop.f32.mrf.mxu0
    %v221 = vadd.f32 %v76, %v220
    %v222 = vpop.f32.mrf.mxu0
    %v223 = vadd.f32 %v76, %v222
    %224 = vmatmul.bf16.gmra.mxu0 %v165
    %v225 = vpop.f32.mrf.mxu0
    %v226 = vadd.f32 %v76, %v225
    %v227 = vpop.f32.mrf.mxu0
    %v228 = vadd.f32 %v76, %v227
    %229 = vmatmul.bf16.gmra.mxu0 %v168
    %v230 = vpop.f32.mrf.mxu0
    %v231 = vadd.f32 %v76, %v230
    %v232 = vpop.f32.mrf.mxu0
    %233 = vdwg.mxu0
    %234 = vmatpush.bf16.msra.mxu0 0
    %235 = vmatpush.bf16.msra.mxu0 0
    %236 = vmatpush.bf16.msra.mxu0 0
    %237 = vmatpush.bf16.msra.mxu0 0
    %238 = vmatpush.bf16.msra.mxu0 0
    %239 = vmatpush.bf16.msra.mxu0 0
    %240 = vmatpush.bf16.msra.mxu0 0
    %241 = vmatpush.bf16.msra.mxu0 %v140
    %242 = vmatmul.bf16.gmra.mxu0 %v156
    %v243 = vpop.f32.mrf.mxu0
    %v244 = vpop.f32.mrf.mxu0
    %v245 = vadd.f32 %v77, %v244
    %246 = vmatmul.bf16.gmra.mxu0 %v159
    %v247 = vpop.f32.mrf.mxu0
    %v248 = vadd.f32 %v77, %v247
    %v249 = vpop.f32.mrf.mxu0
    %v250 = vadd.f32 %v77, %v249
    %251 = vmatmul.bf16.gmra.mxu0 %v162
    %v252 = vpop.f32.mrf.mxu0
    %v253 = vadd.f32 %v77, %v252
    %v254 = vpop.f32.mrf.mxu0
    %v255 = vadd.f32 %v77, %v254
    %256 = vmatmul.bf16.gmra.mxu0 %v165
    %v257 = vpop.f32.mrf.mxu0
    %v258 = vadd.f32 %v77, %v257
    %v259 = vpop.f32.mrf.mxu0
    %v260 = vadd.f32 %v77, %v259
    %261 = vmatmul.bf16.gmra.mxu0 %v168
    %v262 = vpop.f32.mrf.mxu0
    %v263 = vadd.f32 %v77, %v262
    %v264 = vpop.f32.mrf.mxu0
    %265 = vdwg.mxu0
    %266 = vmatpush.bf16.msra.mxu0 0
    %267 = vmatpush.bf16.msra.mxu0 0
    %268 = vmatpush.bf16.msra.mxu0 0
    %269 = vmatpush.bf16.msra.mxu0 0
    %270 = vmatpush.bf16.msra.mxu0 0
    %271 = vmatpush.bf16.msra.mxu0 0
    %272 = vmatpush.bf16.msra.mxu0 0
    %273 = vmatpush.bf16.msra.mxu0 %v141
    %274 = vmatmul.bf16.gmra.mxu0 %v156
    %v275 = vpop.f32.mrf.mxu0
    %v276 = vadd.f32 %v78, %v275
    %v277 = vpop.f32.mrf.mxu0
    %v278 = vadd.f32 %v78, %v277
    %279 = vmatmul.bf16.gmra.mxu0 %v159
    %v280 = vpop.f32.mrf.mxu0
    %v281 = vadd.f32 %v78, %v280
    %v282 = vpop.f32.mrf.mxu0
    %v283 = vadd.f32 %v78, %v282
    %284 = vmatmul.bf16.gmra.mxu0 %v162
    %v285 = vpop.f32.mrf.mxu0
    %v286 = vadd.f32 %v78, %v285
    %v287 = vpop.f32.mrf.mxu0
    %v288 = vadd.f32 %v78, %v287
    %289 = vmatmul.bf16.gmra.mxu0 %v165
    %v290 = vpop.f32.mrf.mxu0
    %v291 = vadd.f32 %v78, %v290
    %v292 = vpop.f32.mrf.mxu0
    %v293 = vadd.f32 %v78, %v292
    %294 = vmatmul.bf16.gmra.mxu0 %v168
    %v295 = vpop.f32.mrf.mxu0
    %v296 = vpop.f32.mrf.mxu0
    %297 = vdwg.mxu0
    %298 = vmatpush.bf16.msra.mxu0 0
    %299 = vmatpush.bf16.msra.mxu0 0
    %300 = vmatpush.bf16.msra.mxu0 0
    %301 = vmatpush.bf16.msra.mxu0 0
    %302 = vmatpush.bf16.msra.mxu0 0
    %303 = vmatpush.bf16.msra.mxu0 0
    %304 = vmatpush.bf16.msra.mxu0 0
    %305 = vmatpush.bf16.msra.mxu0 %v142
    %306 = vmatmul.bf16.gmra.mxu0 %v156
    %v307 = vpop.f32.mrf.mxu0
    %v308 = vadd.f32 %v79, %v307
    %v309 = vpop.f32.mrf.mxu0
    %v310 = vadd.f32 %v79, %v309
    %311 = vmatmul.bf16.gmra.mxu0 %v159
    %v312 = vpop.f32.mrf.mxu0
    %v313 = vadd.f32 %v79, %v312
    %v314 = vpop.f32.mrf.mxu0
    %v315 = vadd.f32 %v79, %v314
    %316 = vmatmul.bf16.gmra.mxu0 %v162
    %v317 = vpop.f32.mrf.mxu0
    %v318 = vadd.f32 %v79, %v317
    %v319 = vpop.f32.mrf.mxu0
    %v320 = vadd.f32 %v79, %v319
    %321 = vmatmul.bf16.gmra.mxu0 %v165
    %v322 = vpop.f32.mrf.mxu0
    %v323 = vadd.f32 %v79, %v322
    %v324 = vpop.f32.mrf.mxu0
    %v325 = vadd.f32 %v79, %v324
    %326 = vmatmul.bf16.gmra.mxu0 %v168
    %v327 = vpop.f32.mrf.mxu0
    %v328 = vpop.f32.mrf.mxu0
    %329 = vdwg.mxu0
    %330 = vmatpush.bf16.msra.mxu0 0
    %331 = vmatpush.bf16.msra.mxu0 0
    %332 = vmatpush.bf16.msra.mxu0 0
    %333 = vmatpush.bf16.msra.mxu0 0
    %334 = vmatpush.bf16.msra.mxu0 0
    %335 = vmatpush.bf16.msra.mxu0 0
    %336 = vmatpush.bf16.msra.mxu0 0
    %337 = vmatpush.bf16.msra.mxu0 %v143
    %338 = vmatmul.bf16.gmra.mxu0 %v156
    %v339 = vpop.f32.mrf.mxu0
    %v340 = vadd.f32 %v80, %v339
    %v341 = vpop.f32.mrf.mxu0
    %v342 = vadd.f32 %v80, %v341
    %343 = vmatmul.bf16.gmra.mxu0 %v159
    %v344 = vpop.f32.mrf.mxu0
    %v345 = vadd.f32 %v80, %v344
    %v346 = vpop.f32.mrf.mxu0
    %v347 = vadd.f32 %v80, %v346
    %348 = vmatmul.bf16.gmra.mxu0 %v162
    %v349 = vpop.f32.mrf.mxu0
    %v350 = vadd.f32 %v80, %v349
    %v351 = vpop.f32.mrf.mxu0
    %v352 = vadd.f32 %v80, %v351
    %353 = vmatmul.bf16.gmra.mxu0 %v165
    %v354 = vpop.f32.mrf.mxu0
    %v355 = vadd.f32 %v80, %v354
    %v356 = vpop.f32.mrf.mxu0
    %v357 = vadd.f32 %v80, %v356
    %358 = vmatmul.bf16.gmra.mxu0 %v168
    %v359 = vpop.f32.mrf.mxu0
    %v360 = vpop.f32.mrf.mxu0
    %361 = vdwg.mxu0
    %362 = vmatpush.bf16.msra.mxu0 0
    %363 = vmatpush.bf16.msra.mxu0 0
    %364 = vmatpush.bf16.msra.mxu0 0
    %365 = vmatpush.bf16.msra.mxu0 0
    %366 = vmatpush.bf16.msra.mxu0 0
    %367 = vmatpush.bf16.msra.mxu0 0
    %368 = vmatpush.bf16.msra.mxu0 0
    %369 = vmatpush.bf16.msra.mxu0 %v144
    %370 = vmatmul.bf16.gmra.mxu0 %v156
    %v371 = vpop.f32.mrf.mxu0
    %v372 = vpop.f32.mrf.mxu0
    %v373 = vadd.f32 %v81, %v372
    %374 = vmatmul.bf16.gmra.mxu0 %v159
    %v375 = vpop.f32.mrf.mxu0
    %v376 = vadd.f32 %v81, %v375
    %v377 = vpop.f32.mrf.mxu0
    %v378 = vadd.f32 %v81, %v377
    %379 = vmatmul.bf16.gmra.mxu0 %v162
    %v380 = vpop.f32.mrf.mxu0
    %v381 = vadd.f32 %v81, %v380
    %v382 = vpop.f32.mrf.mxu0
    %v383 = vadd.f32 %v81, %v382
    %384 = vmatmul.bf16.gmra.mxu0 %v165
    %v385 = vpop.f32.mrf.mxu0
    %v386 = vadd.f32 %v81, %v385
    %v387 = vpop.f32.mrf.mxu0
    %v388 = vadd.f32 %v81, %v387
    %389 = vmatmul.bf16.gmra.mxu0 %v168
    %v390 = vpop.f32.mrf.mxu0
    %v391 = vadd.f32 %v81, %v390
    %v392 = vpop.f32.mrf.mxu0
    %393 = vdwg.mxu0
    %394 = vmatpush.bf16.msra.mxu0 0
    %395 = vmatpush.bf16.msra.mxu0 0
    %396 = vmatpush.bf16.msra.mxu0 0
    %397 = vmatpush.bf16.msra.mxu0 0
    %398 = vmatpush.bf16.msra.mxu0 0
    %399 = vmatpush.bf16.msra.mxu0 0
    %400 = vmatpush.bf16.msra.mxu0 0
    %401 = vmatpush.bf16.msra.mxu0 %v145
    %402 = vmatmul.bf16.gmra.mxu0 %v156
    %v403 = vpop.f32.mrf.mxu0
    %v404 = vadd.f32 %v82, %v403
    %v405 = vpop.f32.mrf.mxu0
    %v406 = vadd.f32 %v82, %v405
    %407 = vmatmul.bf16.gmra.mxu0 %v159
    %v408 = vpop.f32.mrf.mxu0
    %v409 = vadd.f32 %v82, %v408
    %v410 = vpop.f32.mrf.mxu0
    %v411 = vadd.f32 %v82, %v410
    %412 = vmatmul.bf16.gmra.mxu0 %v162
    %v413 = vpop.f32.mrf.mxu0
    %v414 = vadd.f32 %v82, %v413
    %v415 = vpop.f32.mrf.mxu0
    %v416 = vadd.f32 %v82, %v415
    %417 = vmatmul.bf16.gmra.mxu0 %v165
    %v418 = vpop.f32.mrf.mxu0
    %v419 = vadd.f32 %v82, %v418
    %v420 = vpop.f32.mrf.mxu0
    %v421 = vadd.f32 %v82, %v420
    %422 = vmatmul.bf16.gmra.mxu0 %v168
    %v423 = vpop.f32.mrf.mxu0
    %v424 = vpop.f32.mrf.mxu0
    %425 = vdwg.mxu0
    %v426 = vld [vmem:[#allocation2] sm:$0xff]
    %v427 = vld [vmem:[#allocation2 + $0x8] sm:$0xff]
    %v428 = vld [vmem:[#allocation2 + $0x10] sm:$0xff]
    %v429 = vld [vmem:[#allocation2 + $0x18] sm:$0xff]
    %v430 = vld [vmem:[#allocation2 + $0x20] sm:$0xff]
    %v431 = vld [vmem:[#allocation2 + $0x28] sm:$0xff]
    %v432 = vld [vmem:[#allocation2 + $0x30] sm:$0xff]
    %v433 = vld [vmem:[#allocation2 + $0x38] sm:$0xff]
    %v434 = vld [vmem:[#allocation2 + $0x40] sm:$0xff]
    %v435 = vld [vmem:[#allocation2 + $0x48] sm:$0xff]
    %v436 = vld [vmem:[#allocation2 + $0x50] sm:$0xff]
    %v437 = vld [vmem:[#allocation2 + $0x58] sm:$0xff]
    %v438 = vld [vmem:[#allocation2 + $0x60] sm:$0xff]
    %v439 = vld [vmem:[#allocation2 + $0x68] sm:$0xff]
    %v440 = vld [vmem:[#allocation2 + $0x70] sm:$0xff]
    %v441 = vld [vmem:[#allocation2 + $0x78] sm:$0xff]
    %v442 = vld [vmem:[#allocation2 + $0x80] sm:$0xff]
    %v443 = vld [vmem:[#allocation2 + $0x88] sm:$0xff]
    %v444 = vld [vmem:[#allocation2 + $0x90] sm:$0xff]
    %v445 = vld [vmem:[#allocation2 + $0x98] sm:$0xff]
    %v446 = vld [vmem:[#allocation2 + $0xa0] sm:$0xff]
    %v447 = vld [vmem:[#allocation2 + $0xa8] sm:$0xff]
    %v448 = vld [vmem:[#allocation2 + $0xb0] sm:$0xff]
    %v449 = vld [vmem:[#allocation2 + $0xb8] sm:$0xff]
    %v450 = vld [vmem:[#allocation2 + $0xc0] sm:$0xff]
    %v451 = vld [vmem:[#allocation2 + $0xc8] sm:$0xff]
    %v452 = vld [vmem:[#allocation2 + $0xd0] sm:$0xff]
    %v453 = vld [vmem:[#allocation2 + $0xd8] sm:$0xff]
    %v454 = vld [vmem:[#allocation2 + $0xe0] sm:$0xff]
    %v455 = vld [vmem:[#allocation2 + $0xe8] sm:$0xff]
    %v456 = vld [vmem:[#allocation2 + $0xf0] sm:$0xff]
    %v457 = vld [vmem:[#allocation2 + $0xf8] sm:$0xff]
    %v458 = vld [vmem:[#allocation2 + $0x100] sm:$0xff]
    %v459 = vld [vmem:[#allocation2 + $0x108] sm:$0xff]
    %v460 = vld [vmem:[#allocation2 + $0x110] sm:$0xff]
    %v461 = vld [vmem:[#allocation2 + $0x118] sm:$0xff]
    %v462 = vld [vmem:[#allocation2 + $0x120] sm:$0xff]
    %v463 = vld [vmem:[#allocation2 + $0x128] sm:$0xff]
    %v464 = vld [vmem:[#allocation2 + $0x130] sm:$0xff]
    %v465 = vld [vmem:[#allocation2 + $0x138] sm:$0xff]
    %v466 = vld [vmem:[#allocation2 + $0x140] sm:$0xff]
    %v467 = vld [vmem:[#allocation2 + $0x148] sm:$0xff]
    %v468 = vld [vmem:[#allocation2 + $0x150] sm:$0xff]
    %v469 = vld [vmem:[#allocation2 + $0x158] sm:$0xff]
    %v470 = vld [vmem:[#allocation2 + $0x160] sm:$0xff]
    %v471 = vld [vmem:[#allocation2 + $0x168] sm:$0xff]
    %v472 = vld [vmem:[#allocation2 + $0x170] sm:$0xff]
    %v473 = vld [vmem:[#allocation2 + $0x178] sm:$0xff]
    %v474 = vld [vmem:[#allocation2 + $0x180] sm:$0xff]
    %v475 = vld [vmem:[#allocation2 + $0x188] sm:$0xff]
    %v476 = vld [vmem:[#allocation2 + $0x190] sm:$0xff]
    %v477 = vld [vmem:[#allocation2 + $0x198] sm:$0xff]
    %v478 = vld [vmem:[#allocation2 + $0x1a0] sm:$0xff]
    %v479 = vld [vmem:[#allocation2 + $0x1a8] sm:$0xff]
    %v480 = vld [vmem:[#allocation2 + $0x1b0] sm:$0xff]
    %v481 = vld [vmem:[#allocation2 + $0x1b8] sm:$0xff]
    %v482 = vld [vmem:[#allocation2 + $0x1c0] sm:$0xff]
    %v483 = vld [vmem:[#allocation2 + $0x1c8] sm:$0xff]
    %v484 = vld [vmem:[#allocation2 + $0x1d0] sm:$0xff]
    %v485 = vld [vmem:[#allocation2 + $0x1d8] sm:$0xff]
    %v486 = vld [vmem:[#allocation2 + $0x1e0] sm:$0xff]
    %v487 = vld [vmem:[#allocation2 + $0x1e8] sm:$0xff]
    %v488 = vld [vmem:[#allocation2 + $0x1f0] sm:$0xff]
    %v489 = vld [vmem:[#allocation2 + $0x1f8] sm:$0xff]
    %v490 = vld [vmem:[#allocation2 + $0x200] sm:$0xff]
    %v491 = vld [vmem:[#allocation2 + $0x208] sm:$0xff]
    %v492 = vld [vmem:[#allocation2 + $0x210] sm:$0xff]
    %v493 = vld [vmem:[#allocation2 + $0x218] sm:$0xff]
    %v494 = vld [vmem:[#allocation2 + $0x220] sm:$0xff]
    %v495 = vld [vmem:[#allocation2 + $0x228] sm:$0xff]
    %v496 = vld [vmem:[#allocation2 + $0x230] sm:$0xff]
    %v497 = vld [vmem:[#allocation2 + $0x238] sm:$0xff]
    %v498 = vld [vmem:[#allocation2 + $0x240] sm:$0xff]
    %v499 = vld [vmem:[#allocation2 + $0x248] sm:$0xff]
    %v500 = vld [vmem:[#allocation2 + $0x250] sm:$0xff]
    %v501 = vld [vmem:[#allocation2 + $0x258] sm:$0xff]
    %v502 = vld [vmem:[#allocation2 + $0x260] sm:$0xff]
    %v503 = vld [vmem:[#allocation2 + $0x268] sm:$0xff]
    %v504 = vld [vmem:[#allocation2 + $0x270] sm:$0xff]
    %v505 = vld [vmem:[#allocation2 + $0x278] sm:$0xff]
    %v506 = vld [vmem:[#allocation2 + $0x280] sm:$0xff]
    %v507 = vld [vmem:[#allocation2 + $0x288] sm:$0xff]
    %v508 = vld [vmem:[#allocation2 + $0x290] sm:$0xff]
    %v509 = vld [vmem:[#allocation2 + $0x298] sm:$0xff]
    %v510 = vld [vmem:[#allocation2 + $0x2a0] sm:$0xff]
    %v511 = vld [vmem:[#allocation2 + $0x2a8] sm:$0xff]
    %v512 = vld [vmem:[#allocation2 + $0x2b0] sm:$0xff]
    %v513 = vld [vmem:[#allocation2 + $0x2b8] sm:$0xff]
    %v514 = vld [vmem:[#allocation2 + $0x2c0] sm:$0xff]
    %v515 = vld [vmem:[#allocation2 + $0x2c8] sm:$0xff]
    %v516 = vld [vmem:[#allocation2 + $0x2d0] sm:$0xff]
    %v517 = vld [vmem:[#allocation2 + $0x2d8] sm:$0xff]
    %v518 = vld [vmem:[#allocation2 + $0x2e0] sm:$0xff]
    %v519 = vld [vmem:[#allocation2 + $0x2e8] sm:$0xff]
    %v520 = vld [vmem:[#allocation2 + $0x2f0] sm:$0xff]
    %v521 = vld [vmem:[#allocation2 + $0x2f8] sm:$0xff]
    %v522 = vld [vmem:[#allocation2 + $0x300] sm:$0xff]
    %v523 = vld [vmem:[#allocation2 + $0x308] sm:$0xff]
    %v524 = vld [vmem:[#allocation2 + $0x310] sm:$0xff]
    %v525 = vld [vmem:[#allocation2 + $0x318] sm:$0xff]
    %v526 = vld [vmem:[#allocation2 + $0x320] sm:$0xff]
    %v527 = vld [vmem:[#allocation2 + $0x328] sm:$0xff]
    %v528 = vld [vmem:[#allocation2 + $0x330] sm:$0xff]
    %v529 = vld [vmem:[#allocation2 + $0x338] sm:$0xff]
    %v530 = vld [vmem:[#allocation2 + $0x340] sm:$0xff]
    %v531 = vld [vmem:[#allocation2 + $0x348] sm:$0xff]
    %v532 = vld [vmem:[#allocation2 + $0x350] sm:$0xff]
    %v533 = vld [vmem:[#allocation2 + $0x358] sm:$0xff]
    %v534 = vld [vmem:[#allocation2 + $0x360] sm:$0xff]
    %v535 = vld [vmem:[#allocation2 + $0x368] sm:$0xff]
    %v536 = vld [vmem:[#allocation2 + $0x370] sm:$0xff]
    %v537 = vld [vmem:[#allocation2 + $0x378] sm:$0xff]
    %v538 = vld [vmem:[#allocation2 + $0x380] sm:$0xff]
    %v539 = vld [vmem:[#allocation2 + $0x388] sm:$0xff]
    %v540 = vld [vmem:[#allocation2 + $0x390] sm:$0xff]
    %v541 = vld [vmem:[#allocation2 + $0x398] sm:$0xff]
    %v542 = vld [vmem:[#allocation2 + $0x3a0] sm:$0xff]
    %v543 = vld [vmem:[#allocation2 + $0x3a8] sm:$0xff]
    %v544 = vld [vmem:[#allocation2 + $0x3b0] sm:$0xff]
    %v545 = vld [vmem:[#allocation2 + $0x3b8] sm:$0xff]
    %v546 = vld [vmem:[#allocation2 + $0x3c0] sm:$0xff]
    %v547 = vld [vmem:[#allocation2 + $0x3c8] sm:$0xff]
    %v548 = vld [vmem:[#allocation2 + $0x3d0] sm:$0xff]
    %v549 = vld [vmem:[#allocation2 + $0x3d8] sm:$0xff]
    %v550 = vld [vmem:[#allocation2 + $0x3e0] sm:$0xff]
    %v551 = vld [vmem:[#allocation2 + $0x3e8] sm:$0xff]
    %v552 = vld [vmem:[#allocation2 + $0x3f0] sm:$0xff]
    %v553 = vld [vmem:[#allocation2 + $0x3f8] sm:$0xff]
    %v554 = vxor.u32 %v276, 2147483648
    %v555 = vxor.u32 %v308, 2147483648
    %v556 = vxor.u32 %v340, 2147483648
    %v557 = vmul.f32 %v554, 1.442695
    %v558 = vpow.pop %v557
    %v559 = vmul.f32 %v555, 1.442695
    %v560 = vpow.pop %v559
    %v561 = vmul.f32 %v556, 1.442695
    %v562 = vpow.pop %v561
    %v563 = vadd.f32 %v558, 1.0
    %v564 = vadd.f32 %v560, 1.0
    %v565 = vadd.f32 %v562, 1.0
    %v566 = vrcp.pop %v563
    %v567 = vmul.f32 %v563, %v566
    %v568 = vsub.f32 1.0, %v567
    %v569 = vmul.f32 %v566, %v568
    %v570 = vadd.f32 %v566, %v569
    %vm571 = vweird.f32 %v563
    %vm572 = vweird.f32 %v566
    %vm573 = vmor %vm571, %vm572
    %v574 = vsel %vm573, %v566, %v570
    %v575 = vand.u32 2147483647, %v563
    %vm576 = vcmp.eq.f32.partialorder %v575, 8.507059e+37
    %v577 = vand.u32 %v563, 2147483648
    %v578 = vor.u32 1.1754944e-38, %v577
    %v579 = vsel %vm576, %v578, %v574
    %v580 = vmul.f32 1.0, %v579
    %v581 = vrcp.pop %v564
    %v582 = vmul.f32 %v564, %v581
    %v583 = vsub.f32 1.0, %v582
    %v584 = vmul.f32 %v581, %v583
    %v585 = vadd.f32 %v581, %v584
    %vm586 = vweird.f32 %v564
    %vm587 = vweird.f32 %v581
    %vm588 = vmor %vm586, %vm587
    %v589 = vsel %vm588, %v581, %v585
    %v590 = vand.u32 2147483647, %v564
    %vm591 = vcmp.eq.f32.partialorder %v590, 8.507059e+37
    %v592 = vand.u32 %v564, 2147483648
    %v593 = vor.u32 1.1754944e-38, %v592
    %v594 = vsel %vm591, %v593, %v589
    %v595 = vmul.f32 1.0, %v594
    %v596 = vrcp.pop %v565
    %v597 = vmul.f32 %v565, %v596
    %v598 = vsub.f32 1.0, %v597
    %v599 = vmul.f32 %v596, %v598
    %v600 = vadd.f32 %v596, %v599
    %vm601 = vweird.f32 %v565
    %vm602 = vweird.f32 %v596
    %vm603 = vmor %vm601, %vm602
    %v604 = vsel %vm603, %v596, %v600
    %v605 = vand.u32 2147483647, %v565
    %vm606 = vcmp.eq.f32.partialorder %v605, 8.507059e+37
    %v607 = vand.u32 %v565, 2147483648
    %v608 = vor.u32 1.1754944e-38, %v607
    %v609 = vsel %vm606, %v608, %v604
    %v610 = vmul.f32 1.0, %v609
    %v611 = vtanh.pop %v404
    %v612 = vmul.f32 %v595, 0.0
    %v613 = vmul.f32 %v580, %v611
    %v614 = vadd.f32 %v612, %v613
    %v615 = vtanh.pop %v614
    %v616 = vmul.f32 %v610, %v615
    %v617 = vpack.c.bf16 %v616, %v616
    %v618 = vpack.c.bf16 0.0, 0.0
    %v747 = vunpack.c.l.b16 %v426
    %v748 = vunpack.c.h.b16 %v426
    %v749 = vunpack.c.l.b16 %v427
    %v750 = vunpack.c.h.b16 %v427
    %v751 = vunpack.c.l.b16 %v428
    %v752 = vunpack.c.h.b16 %v428
    %v753 = vunpack.c.l.b16 %v429
    %v754 = vunpack.c.h.b16 %v429
    %v755 = vunpack.c.l.b16 %v430
    %v756 = vunpack.c.h.b16 %v430
    %v757 = vunpack.c.l.b16 %v431
    %v758 = vunpack.c.h.b16 %v431
    %v759 = vunpack.c.l.b16 %v432
    %v760 = vunpack.c.h.b16 %v432
    %v761 = vunpack.c.l.b16 %v433
    %v762 = vunpack.c.h.b16 %v433
    %v763 = vunpack.c.l.b16 %v434
    %v764 = vunpack.c.h.b16 %v434
    %v765 = vunpack.c.l.b16 %v435
    %v766 = vunpack.c.h.b16 %v435
    %v767 = vunpack.c.l.b16 %v436
    %v768 = vunpack.c.h.b16 %v436
    %v769 = vunpack.c.l.b16 %v437
    %v770 = vunpack.c.h.b16 %v437
    %v771 = vunpack.c.l.b16 %v438
    %v772 = vunpack.c.h.b16 %v438
    %v773 = vunpack.c.l.b16 %v439
    %v774 = vunpack.c.h.b16 %v439
    %v775 = vunpack.c.l.b16 %v440
    %v776 = vunpack.c.h.b16 %v440
    %v777 = vunpack.c.l.b16 %v441
    %v778 = vunpack.c.h.b16 %v441
    %v779 = vunpack.c.l.b16 %v442
    %v780 = vunpack.c.h.b16 %v442
    %v781 = vunpack.c.l.b16 %v443
    %v782 = vunpack.c.h.b16 %v443
    %v783 = vunpack.c.l.b16 %v444
    %v784 = vunpack.c.h.b16 %v444
    %v785 = vunpack.c.l.b16 %v445
    %v786 = vunpack.c.h.b16 %v445
    %v787 = vunpack.c.l.b16 %v446
    %v788 = vunpack.c.h.b16 %v446
    %v789 = vunpack.c.l.b16 %v447
    %v790 = vunpack.c.h.b16 %v447
    %v791 = vunpack.c.l.b16 %v448
    %v792 = vunpack.c.h.b16 %v448
    %v793 = vunpack.c.l.b16 %v449
    %v794 = vunpack.c.h.b16 %v449
    %v795 = vunpack.c.l.b16 %v450
    %v796 = vunpack.c.h.b16 %v450
    %v797 = vunpack.c.l.b16 %v451
    %v798 = vunpack.c.h.b16 %v451
    %v799 = vunpack.c.l.b16 %v452
    %v800 = vunpack.c.h.b16 %v452
    %v801 = vunpack.c.l.b16 %v453
    %v802 = vunpack.c.h.b16 %v453
    %v803 = vunpack.c.l.b16 %v454
    %v804 = vunpack.c.h.b16 %v454
    %v805 = vunpack.c.l.b16 %v455
    %v806 = vunpack.c.h.b16 %v455
    %v807 = vunpack.c.l.b16 %v456
    %v808 = vunpack.c.h.b16 %v456
    %v809 = vunpack.c.l.b16 %v457
    %v810 = vunpack.c.h.b16 %v457
    %v811 = vunpack.c.l.b16 %v458
    %v812 = vunpack.c.h.b16 %v458
    %v813 = vunpack.c.l.b16 %v459
    %v814 = vunpack.c.h.b16 %v459
    %v815 = vunpack.c.l.b16 %v460
    %v816 = vunpack.c.h.b16 %v460
    %v817 = vunpack.c.l.b16 %v461
    %v818 = vunpack.c.h.b16 %v461
    %v819 = vunpack.c.l.b16 %v462
    %v820 = vunpack.c.h.b16 %v462
    %v821 = vunpack.c.l.b16 %v463
    %v822 = vunpack.c.h.b16 %v463
    %v823 = vunpack.c.l.b16 %v464
    %v824 = vunpack.c.h.b16 %v464
    %v825 = vunpack.c.l.b16 %v465
    %v826 = vunpack.c.h.b16 %v465
    %v827 = vunpack.c.l.b16 %v466
    %v828 = vunpack.c.h.b16 %v466
    %v829 = vunpack.c.l.b16 %v467
    %v830 = vunpack.c.h.b16 %v467
    %v831 = vunpack.c.l.b16 %v468
    %v832 = vunpack.c.h.b16 %v468
    %v833 = vunpack.c.l.b16 %v469
    %v834 = vunpack.c.h.b16 %v469
    %v835 = vunpack.c.l.b16 %v470
    %v836 = vunpack.c.h.b16 %v470
    %v837 = vunpack.c.l.b16 %v471
    %v838 = vunpack.c.h.b16 %v471
    %v839 = vunpack.c.l.b16 %v472
    %v840 = vunpack.c.h.b16 %v472
    %v841 = vunpack.c.l.b16 %v473
    %v842 = vunpack.c.h.b16 %v473
    %v843 = vunpack.c.l.b16 %v474
    %v844 = vunpack.c.h.b16 %v474
    %v845 = vunpack.c.l.b16 %v475
    %v846 = vunpack.c.h.b16 %v475
    %v847 = vunpack.c.l.b16 %v476
    %v848 = vunpack.c.h.b16 %v476
    %v849 = vunpack.c.l.b16 %v477
    %v850 = vunpack.c.h.b16 %v477
    %v851 = vunpack.c.l.b16 %v478
    %v852 = vunpack.c.h.b16 %v478
    %v853 = vunpack.c.l.b16 %v479
    %v854 = vunpack.c.h.b16 %v479
    %v855 = vunpack.c.l.b16 %v480
    %v856 = vunpack.c.h.b16 %v480
    %v857 = vunpack.c.l.b16 %v481
    %v858 = vunpack.c.h.b16 %v481
    %v859 = vunpack.c.l.b16 %v482
    %v860 = vunpack.c.h.b16 %v482
    %v861 = vunpack.c.l.b16 %v483
    %v862 = vunpack.c.h.b16 %v483
    %v863 = vunpack.c.l.b16 %v484
    %v864 = vunpack.c.h.b16 %v484
    %v865 = vunpack.c.l.b16 %v485
    %v866 = vunpack.c.h.b16 %v485
    %v867 = vunpack.c.l.b16 %v486
    %v868 = vunpack.c.h.b16 %v486
    %v869 = vunpack.c.l.b16 %v487
    %v870 = vunpack.c.h.b16 %v487
    %v871 = vunpack.c.l.b16 %v488
    %v872 = vunpack.c.h.b16 %v488
    %v873 = vunpack.c.l.b16 %v489
    %v874 = vunpack.c.h.b16 %v489
    %v875 = vunpack.c.l.b16 %v490
    %v876 = vunpack.c.h.b16 %v490
    %v877 = vunpack.c.l.b16 %v491
    %v878 = vunpack.c.h.b16 %v491
    %v879 = vunpack.c.l.b16 %v492
    %v880 = vunpack.c.h.b16 %v492
    %v881 = vunpack.c.l.b16 %v493
    %v882 = vunpack.c.h.b16 %v493
    %v883 = vunpack.c.l.b16 %v494
    %v884 = vunpack.c.h.b16 %v494
    %v885 = vunpack.c.l.b16 %v495
    %v886 = vunpack.c.h.b16 %v495
    %v887 = vunpack.c.l.b16 %v496
    %v888 = vunpack.c.h.b16 %v496
    %v889 = vunpack.c.l.b16 %v497
    %v890 = vunpack.c.h.b16 %v497
    %v891 = vunpack.c.l.b16 %v498
    %v892 = vunpack.c.h.b16 %v498
    %v893 = vunpack.c.l.b16 %v499
    %v894 = vunpack.c.h.b16 %v499
    %v895 = vunpack.c.l.b16 %v500
    %v896 = vunpack.c.h.b16 %v500
    %v897 = vunpack.c.l.b16 %v501
    %v898 = vunpack.c.h.b16 %v501
    %v899 = vunpack.c.l.b16 %v502
    %v900 = vunpack.c.h.b16 %v502
    %v901 = vunpack.c.l.b16 %v503
    %v902 = vunpack.c.h.b16 %v503
    %v903 = vunpack.c.l.b16 %v504
    %v904 = vunpack.c.h.b16 %v504
    %v905 = vunpack.c.l.b16 %v505
    %v906 = vunpack.c.h.b16 %v505
    %v907 = vunpack.c.l.b16 %v506
    %v908 = vunpack.c.h.b16 %v506
    %v909 = vunpack.c.l.b16 %v507
    %v910 = vunpack.c.h.b16 %v507
    %v911 = vunpack.c.l.b16 %v508
    %v912 = vunpack.c.h.b16 %v508
    %v913 = vunpack.c.l.b16 %v509
    %v914 = vunpack.c.h.b16 %v509
    %v915 = vunpack.c.l.b16 %v510
    %v916 = vunpack.c.h.b16 %v510
    %v917 = vunpack.c.l.b16 %v511
    %v918 = vunpack.c.h.b16 %v511
    %v919 = vunpack.c.l.b16 %v512
    %v920 = vunpack.c.h.b16 %v512
    %v921 = vunpack.c.l.b16 %v513
    %v922 = vunpack.c.h.b16 %v513
    %v923 = vunpack.c.l.b16 %v514
    %v924 = vunpack.c.h.b16 %v514
    %v925 = vunpack.c.l.b16 %v515
    %v926 = vunpack.c.h.b16 %v515
    %v927 = vunpack.c.l.b16 %v516
    %v928 = vunpack.c.h.b16 %v516
    %v929 = vunpack.c.l.b16 %v517
    %v930 = vunpack.c.h.b16 %v517
    %v931 = vunpack.c.l.b16 %v518
    %v932 = vunpack.c.h.b16 %v518
    %v933 = vunpack.c.l.b16 %v519
    %v934 = vunpack.c.h.b16 %v519
    %v935 = vunpack.c.l.b16 %v520
    %v936 = vunpack.c.h.b16 %v520
    %v937 = vunpack.c.l.b16 %v521
    %v938 = vunpack.c.h.b16 %v521
    %v939 = vunpack.c.l.b16 %v522
    %v940 = vunpack.c.h.b16 %v522
    %v941 = vunpack.c.l.b16 %v523
    %v942 = vunpack.c.h.b16 %v523
    %v943 = vunpack.c.l.b16 %v524
    %v944 = vunpack.c.h.b16 %v524
    %v945 = vunpack.c.l.b16 %v525
    %v946 = vunpack.c.h.b16 %v525
    %v947 = vunpack.c.l.b16 %v526
    %v948 = vunpack.c.h.b16 %v526
    %v949 = vunpack.c.l.b16 %v527
    %v950 = vunpack.c.h.b16 %v527
    %v951 = vunpack.c.l.b16 %v528
    %v952 = vunpack.c.h.b16 %v528
    %v953 = vunpack.c.l.b16 %v529
    %v954 = vunpack.c.h.b16 %v529
    %v955 = vunpack.c.l.b16 %v530
    %v956 = vunpack.c.h.b16 %v530
    %v957 = vunpack.c.l.b16 %v531
    %v958 = vunpack.c.h.b16 %v531
    %v959 = vunpack.c.l.b16 %v532
    %v960 = vunpack.c.h.b16 %v532
    %v961 = vunpack.c.l.b16 %v533
    %v962 = vunpack.c.h.b16 %v533
    %v963 = vunpack.c.l.b16 %v534
    %v964 = vunpack.c.h.b16 %v534
    %v965 = vunpack.c.l.b16 %v535
    %v966 = vunpack.c.h.b16 %v535
    %v967 = vunpack.c.l.b16 %v536
    %v968 = vunpack.c.h.b16 %v536
    %v969 = vunpack.c.l.b16 %v537
    %v970 = vunpack.c.h.b16 %v537
    %v971 = vunpack.c.l.b16 %v538
    %v972 = vunpack.c.h.b16 %v538
    %v973 = vunpack.c.l.b16 %v539
    %v974 = vunpack.c.h.b16 %v539
    %v975 = vunpack.c.l.b16 %v540
    %v976 = vunpack.c.h.b16 %v540
    %v977 = vunpack.c.l.b16 %v541
    %v978 = vunpack.c.h.b16 %v541
    %v979 = vunpack.c.l.b16 %v542
    %v980 = vunpack.c.h.b16 %v542
    %v981 = vunpack.c.l.b16 %v543
    %v982 = vunpack.c.h.b16 %v543
    %v983 = vunpack.c.l.b16 %v544
    %v984 = vunpack.c.h.b16 %v544
    %v985 = vunpack.c.l.b16 %v545
    %v986 = vunpack.c.h.b16 %v545
    %v987 = vunpack.c.l.b16 %v546
    %v988 = vunpack.c.h.b16 %v546
    %v989 = vunpack.c.l.b16 %v547
    %v990 = vunpack.c.h.b16 %v547
    %v991 = vunpack.c.l.b16 %v548
    %v992 = vunpack.c.h.b16 %v548
    %v993 = vunpack.c.l.b16 %v549
    %v994 = vunpack.c.h.b16 %v549
    %v995 = vunpack.c.l.b16 %v550
    %v996 = vunpack.c.h.b16 %v550
    %v997 = vunpack.c.l.b16 %v551
    %v998 = vunpack.c.h.b16 %v551
    %v999 = vunpack.c.l.b16 %v552
    %v1000 = vunpack.c.h.b16 %v552
    %v1001 = vunpack.c.l.b16 %v553
    %v1002 = vunpack.c.h.b16 %v553
    %v1003 = vpack.c.b16 %v755, %v747
    %v1004 = vpack.c.b16 %v756, %v748
    %v1005 = vpack.c.b16 %v757, %v749
    %v1006 = vpack.c.b16 %v758, %v750
    %v1007 = vpack.c.b16 %v759, %v751
    %v1008 = vpack.c.b16 %v760, %v752
    %v1009 = vpack.c.b16 %v761, %v753
    %v1010 = vpack.c.b16 %v762, %v754
    %v1011 = vpack.c.b16 %v771, %v763
    %v1012 = vpack.c.b16 %v772, %v764
    %v1013 = vpack.c.b16 %v773, %v765
    %v1014 = vpack.c.b16 %v774, %v766
    %v1015 = vpack.c.b16 %v775, %v767
    %v1016 = vpack.c.b16 %v776, %v768
    %v1017 = vpack.c.b16 %v777, %v769
    %v1018 = vpack.c.b16 %v778, %v770
    %v1019 = vpack.c.b16 %v787, %v779
    %v1020 = vpack.c.b16 %v788, %v780
    %v1021 = vpack.c.b16 %v789, %v781
    %v1022 = vpack.c.b16 %v790, %v782
    %v1023 = vpack.c.b16 %v791, %v783
    %v1024 = vpack.c.b16 %v792, %v784
    %v1025 = vpack.c.b16 %v793, %v785
    %v1026 = vpack.c.b16 %v794, %v786
    %v1027 = vpack.c.b16 %v803, %v795
    %v1028 = vpack.c.b16 %v804, %v796
    %v1029 = vpack.c.b16 %v805, %v797
    %v1030 = vpack.c.b16 %v806, %v798
    %v1031 = vpack.c.b16 %v807, %v799
    %v1032 = vpack.c.b16 %v808, %v800
    %v1033 = vpack.c.b16 %v809, %v801
    %v1034 = vpack.c.b16 %v810, %v802
    %v1035 = vpack.c.b16 %v819, %v811
    %v1036 = vpack.c.b16 %v820, %v812
    %v1037 = vpack.c.b16 %v821, %v813
    %v1038 = vpack.c.b16 %v822, %v814
    %v1039 = vpack.c.b16 %v823, %v815
    %v1040 = vpack.c.b16 %v824, %v816
    %v1041 = vpack.c.b16 %v825, %v817
    %v1042 = vpack.c.b16 %v826, %v818
    %v1043 = vpack.c.b16 %v835, %v827
    %v1044 = vpack.c.b16 %v836, %v828
    %v1045 = vpack.c.b16 %v837, %v829
    %v1046 = vpack.c.b16 %v838, %v830
    %v1047 = vpack.c.b16 %v839, %v831
    %v1048 = vpack.c.b16 %v840, %v832
    %v1049 = vpack.c.b16 %v841, %v833
    %v1050 = vpack.c.b16 %v842, %v834
    %v1051 = vpack.c.b16 %v851, %v843
    %v1052 = vpack.c.b16 %v852, %v844
    %v1053 = vpack.c.b16 %v853, %v845
    %v1054 = vpack.c.b16 %v854, %v846
    %v1055 = vpack.c.b16 %v855, %v847
    %v1056 = vpack.c.b16 %v856, %v848
    %v1057 = vpack.c.b16 %v857, %v849
    %v1058 = vpack.c.b16 %v858, %v850
    %v1059 = vpack.c.b16 %v867, %v859
    %v1060 = vpack.c.b16 %v868, %v860
    %v1061 = vpack.c.b16 %v869, %v861
    %v1062 = vpack.c.b16 %v870, %v862
    %v1063 = vpack.c.b16 %v871, %v863
    %v1064 = vpack.c.b16 %v872, %v864
    %v1065 = vpack.c.b16 %v873, %v865
    %v1066 = vpack.c.b16 %v874, %v866
    %v1067 = vpack.c.b16 %v883, %v875
    %v1068 = vpack.c.b16 %v884, %v876
    %v1069 = vpack.c.b16 %v885, %v877
    %v1070 = vpack.c.b16 %v886, %v878
    %v1071 = vpack.c.b16 %v887, %v879
    %v1072 = vpack.c.b16 %v888, %v880
    %v1073 = vpack.c.b16 %v889, %v881
    %v1074 = vpack.c.b16 %v890, %v882
    %v1075 = vpack.c.b16 %v899, %v891
    %v1076 = vpack.c.b16 %v900, %v892
    %v1077 = vpack.c.b16 %v901, %v893
    %v1078 = vpack.c.b16 %v902, %v894
    %v1079 = vpack.c.b16 %v903, %v895
    %v1080 = vpack.c.b16 %v904, %v896
    %v1081 = vpack.c.b16 %v905, %v897
    %v1082 = vpack.c.b16 %v906, %v898
    %v1083 = vpack.c.b16 %v915, %v907
    %v1084 = vpack.c.b16 %v916, %v908
    %v1085 = vpack.c.b16 %v917, %v909
    %v1086 = vpack.c.b16 %v918, %v910
    %v1087 = vpack.c.b16 %v919, %v911
    %v1088 = vpack.c.b16 %v920, %v912
    %v1089 = vpack.c.b16 %v921, %v913
    %v1090 = vpack.c.b16 %v922, %v914
    %v1091 = vpack.c.b16 %v931, %v923
    %v1092 = vpack.c.b16 %v932, %v924
    %v1093 = vpack.c.b16 %v933, %v925
    %v1094 = vpack.c.b16 %v934, %v926
    %v1095 = vpack.c.b16 %v935, %v927
    %v1096 = vpack.c.b16 %v936, %v928
    %v1097 = vpack.c.b16 %v937, %v929
    %v1098 = vpack.c.b16 %v938, %v930
    %v1099 = vpack.c.b16 %v947, %v939
    %v1100 = vpack.c.b16 %v948, %v940
    %v1101 = vpack.c.b16 %v949, %v941
    %v1102 = vpack.c.b16 %v950, %v942
    %v1103 = vpack.c.b16 %v951, %v943
    %v1104 = vpack.c.b16 %v952, %v944
    %v1105 = vpack.c.b16 %v953, %v945
    %v1106 = vpack.c.b16 %v954, %v946
    %v1107 = vpack.c.b16 %v963, %v955
    %v1108 = vpack.c.b16 %v964, %v956
    %v1109 = vpack.c.b16 %v965, %v957
    %v1110 = vpack.c.b16 %v966, %v958
    %v1111 = vpack.c.b16 %v967, %v959
    %v1112 = vpack.c.b16 %v968, %v960
    %v1113 = vpack.c.b16 %v969, %v961
    %v1114 = vpack.c.b16 %v970, %v962
    %v1115 = vpack.c.b16 %v979, %v971
    %v1116 = vpack.c.b16 %v980, %v972
    %v1117 = vpack.c.b16 %v981, %v973
    %v1118 = vpack.c.b16 %v982, %v974
    %v1119 = vpack.c.b16 %v983, %v975
    %v1120 = vpack.c.b16 %v984, %v976
    %v1121 = vpack.c.b16 %v985, %v977
    %v1122 = vpack.c.b16 %v986, %v978
    %v1123 = vpack.c.b16 %v995, %v987
    %v1124 = vpack.c.b16 %v996, %v988
    %v1125 = vpack.c.b16 %v997, %v989
    %v1126 = vpack.c.b16 %v998, %v990
    %v1127 = vpack.c.b16 %v999, %v991
    %v1128 = vpack.c.b16 %v1000, %v992
    %v1129 = vpack.c.b16 %v1001, %v993
    %v1130 = vpack.c.b16 %v1002, %v994
    %1259 = vmatpush.bf16.msra.mxu0 %v1059
    %1260 = vmatpush.bf16.msra.mxu0 %v1051
    %1261 = vmatpush.bf16.msra.mxu0 %v1043
    %1262 = vmatpush.bf16.msra.mxu0 %v1035
    %1263 = vmatpush.bf16.msra.mxu0 %v1027
    %1264 = vmatpush.bf16.msra.mxu0 %v1019
    %1265 = vmatpush.bf16.msra.mxu0 %v1011
    %1266 = vmatpush.bf16.msra.mxu0 %v1003
    %1267 = vmatmul.bf16.gmra.mxu0 %v617
    %v1268 = vpop.f32.mrf.mxu0
    %v1269 = vadd.f32 %v181, %v1268
    %v1270 = vpop.f32.mrf.mxu0
    %1271 = vdwg.mxu0
    %1272 = vmatpush.bf16.msra.mxu0 %v1123
    %1273 = vmatpush.bf16.msra.mxu0 %v1115
    %1274 = vmatpush.bf16.msra.mxu0 %v1107
    %1275 = vmatpush.bf16.msra.mxu0 %v1099
    %1276 = vmatpush.bf16.msra.mxu0 %v1091
    %1277 = vmatpush.bf16.msra.mxu0 %v1083
    %1278 = vmatpush.bf16.msra.mxu0 %v1075
    %1279 = vmatpush.bf16.msra.mxu0 %v1067
    %1280 = vmatmul.bf16.gmra.mxu0 %v618
    %v1281 = vpop.f32.mrf.mxu0
    %v1282 = vadd.f32 %v1269, %v1281
    %v1283 = vpop.f32.mrf.mxu0
    %1284 = vdwg.mxu0
    %1285 = vmatpush.bf16.msra.mxu0 %v1060
    %1286 = vmatpush.bf16.msra.mxu0 %v1052
    %1287 = vmatpush.bf16.msra.mxu0 %v1044
    %1288 = vmatpush.bf16.msra.mxu0 %v1036
    %1289 = vmatpush.bf16.msra.mxu0 %v1028
    %1290 = vmatpush.bf16.msra.mxu0 %v1020
    %1291 = vmatpush.bf16.msra.mxu0 %v1012
    %1292 = vmatpush.bf16.msra.mxu0 %v1004
    %1293 = vmatmul.bf16.gmra.mxu0 %v617
    %v1294 = vpop.f32.mrf.mxu0
    %v1295 = vadd.f32 %v213, %v1294
    %v1296 = vpop.f32.mrf.mxu0
    %1297 = vdwg.mxu0
    %1298 = vmatpush.bf16.msra.mxu0 %v1124
    %1299 = vmatpush.bf16.msra.mxu0 %v1116
    %1300 = vmatpush.bf16.msra.mxu0 %v1108
    %1301 = vmatpush.bf16.msra.mxu0 %v1100
    %1302 = vmatpush.bf16.msra.mxu0 %v1092
    %1303 = vmatpush.bf16.msra.mxu0 %v1084
    %1304 = vmatpush.bf16.msra.mxu0 %v1076
    %1305 = vmatpush.bf16.msra.mxu0 %v1068
    %1306 = vmatmul.bf16.gmra.mxu0 %v618
    %v1307 = vpop.f32.mrf.mxu0
    %v1308 = vadd.f32 %v1295, %v1307
    %v1309 = vpop.f32.mrf.mxu0
    %1310 = vdwg.mxu0
    %1311 = vmatpush.bf16.msra.mxu0 %v1061
    %1312 = vmatpush.bf16.msra.mxu0 %v1053
    %1313 = vmatpush.bf16.msra.mxu0 %v1045
    %1314 = vmatpush.bf16.msra.mxu0 %v1037
    %1315 = vmatpush.bf16.msra.mxu0 %v1029
    %1316 = vmatpush.bf16.msra.mxu0 %v1021
    %1317 = vmatpush.bf16.msra.mxu0 %v1013
    %1318 = vmatpush.bf16.msra.mxu0 %v1005
    %1319 = vmatmul.bf16.gmra.mxu0 %v617
    %v1320 = vpop.f32.mrf.mxu0
    %v1321 = vadd.f32 %v245, %v1320
    %v1322 = vpop.f32.mrf.mxu0
    %1323 = vdwg.mxu0
    %1324 = vmatpush.bf16.msra.mxu0 %v1125
    %1325 = vmatpush.bf16.msra.mxu0 %v1117
    %1326 = vmatpush.bf16.msra.mxu0 %v1109
    %1327 = vmatpush.bf16.msra.mxu0 %v1101
    %1328 = vmatpush.bf16.msra.mxu0 %v1093
    %1329 = vmatpush.bf16.msra.mxu0 %v1085
    %1330 = vmatpush.bf16.msra.mxu0 %v1077
    %1331 = vmatpush.bf16.msra.mxu0 %v1069
    %1332 = vmatmul.bf16.gmra.mxu0 %v618
    %v1333 = vpop.f32.mrf.mxu0
    %v1334 = vadd.f32 %v1321, %v1333
    %v1335 = vpop.f32.mrf.mxu0
    %1336 = vdwg.mxu0
    %1337 = vmatpush.bf16.msra.mxu0 %v1062
    %1338 = vmatpush.bf16.msra.mxu0 %v1054
    %1339 = vmatpush.bf16.msra.mxu0 %v1046
    %1340 = vmatpush.bf16.msra.mxu0 %v1038
    %1341 = vmatpush.bf16.msra.mxu0 %v1030
    %1342 = vmatpush.bf16.msra.mxu0 %v1022
    %1343 = vmatpush.bf16.msra.mxu0 %v1014
    %1344 = vmatpush.bf16.msra.mxu0 %v1006
    %1345 = vmatmul.bf16.gmra.mxu0 %v617
    %v1346 = vpop.f32.mrf.mxu0
    %v1347 = vadd.f32 %v278, %v1346
    %v1348 = vpop.f32.mrf.mxu0
    %1349 = vdwg.mxu0
    %1350 = vmatpush.bf16.msra.mxu0 %v1126
    %1351 = vmatpush.bf16.msra.mxu0 %v1118
    %1352 = vmatpush.bf16.msra.mxu0 %v1110
    %1353 = vmatpush.bf16.msra.mxu0 %v1102
    %1354 = vmatpush.bf16.msra.mxu0 %v1094
    %1355 = vmatpush.bf16.msra.mxu0 %v1086
    %1356 = vmatpush.bf16.msra.mxu0 %v1078
    %1357 = vmatpush.bf16.msra.mxu0 %v1070
    %1358 = vmatmul.bf16.gmra.mxu0 %v618
    %v1359 = vpop.f32.mrf.mxu0
    %v1360 = vadd.f32 %v1347, %v1359
    %v1361 = vpop.f32.mrf.mxu0
    %1362 = vdwg.mxu0
    %1363 = vmatpush.bf16.msra.mxu0 %v1063
    %1364 = vmatpush.bf16.msra.mxu0 %v1055
    %1365 = vmatpush.bf16.msra.mxu0 %v1047
    %1366 = vmatpush.bf16.msra.mxu0 %v1039
    %1367 = vmatpush.bf16.msra.mxu0 %v1031
    %1368 = vmatpush.bf16.msra.mxu0 %v1023
    %1369 = vmatpush.bf16.msra.mxu0 %v1015
    %1370 = vmatpush.bf16.msra.mxu0 %v1007
    %1371 = vmatmul.bf16.gmra.mxu0 %v617
    %v1372 = vpop.f32.mrf.mxu0
    %v1373 = vadd.f32 %v310, %v1372
    %v1374 = vpop.f32.mrf.mxu0
    %1375 = vdwg.mxu0
    %1376 = vmatpush.bf16.msra.mxu0 %v1127
    %1377 = vmatpush.bf16.msra.mxu0 %v1119
    %1378 = vmatpush.bf16.msra.mxu0 %v1111
    %1379 = vmatpush.bf16.msra.mxu0 %v1103
    %1380 = vmatpush.bf16.msra.mxu0 %v1095
    %1381 = vmatpush.bf16.msra.mxu0 %v1087
    %1382 = vmatpush.bf16.msra.mxu0 %v1079
    %1383 = vmatpush.bf16.msra.mxu0 %v1071
    %1384 = vmatmul.bf16.gmra.mxu0 %v618
    %v1385 = vpop.f32.mrf.mxu0
    %v1386 = vadd.f32 %v1373, %v1385
    %v1387 = vpop.f32.mrf.mxu0
    %1388 = vdwg.mxu0
    %1389 = vmatpush.bf16.msra.mxu0 %v1064
    %1390 = vmatpush.bf16.msra.mxu0 %v1056
    %1391 = vmatpush.bf16.msra.mxu0 %v1048
    %1392 = vmatpush.bf16.msra.mxu0 %v1040
    %1393 = vmatpush.bf16.msra.mxu0 %v1032
    %1394 = vmatpush.bf16.msra.mxu0 %v1024
    %1395 = vmatpush.bf16.msra.mxu0 %v1016
    %1396 = vmatpush.bf16.msra.mxu0 %v1008
    %1397 = vmatmul.bf16.gmra.mxu0 %v617
    %v1398 = vpop.f32.mrf.mxu0
    %v1399 = vadd.f32 %v342, %v1398
    %v1400 = vpop.f32.mrf.mxu0
    %1401 = vdwg.mxu0
    %1402 = vmatpush.bf16.msra.mxu0 %v1128
    %1403 = vmatpush.bf16.msra.mxu0 %v1120
    %1404 = vmatpush.bf16.msra.mxu0 %v1112
    %1405 = vmatpush.bf16.msra.mxu0 %v1104
    %1406 = vmatpush.bf16.msra.mxu0 %v1096
    %1407 = vmatpush.bf16.msra.mxu0 %v1088
    %1408 = vmatpush.bf16.msra.mxu0 %v1080
    %1409 = vmatpush.bf16.msra.mxu0 %v1072
    %1410 = vmatmul.bf16.gmra.mxu0 %v618
    %v1411 = vpop.f32.mrf.mxu0
    %v1412 = vadd.f32 %v1399, %v1411
    %v1413 = vpop.f32.mrf.mxu0
    %1414 = vdwg.mxu0
    %1415 = vmatpush.bf16.msra.mxu0 %v1065
    %1416 = vmatpush.bf16.msra.mxu0 %v1057
    %1417 = vmatpush.bf16.msra.mxu0 %v1049
    %1418 = vmatpush.bf16.msra.mxu0 %v1041
    %1419 = vmatpush.bf16.msra.mxu0 %v1033
    %1420 = vmatpush.bf16.msra.mxu0 %v1025
    %1421 = vmatpush.bf16.msra.mxu0 %v1017
    %1422 = vmatpush.bf16.msra.mxu0 %v1009
    %1423 = vmatmul.bf16.gmra.mxu0 %v617
    %v1424 = vpop.f32.mrf.mxu0
    %v1425 = vadd.f32 %v373, %v1424
    %v1426 = vpop.f32.mrf.mxu0
    %1427 = vdwg.mxu0
    %1428 = vmatpush.bf16.msra.mxu0 %v1129
    %1429 = vmatpush.bf16.msra.mxu0 %v1121
    %1430 = vmatpush.bf16.msra.mxu0 %v1113
    %1431 = vmatpush.bf16.msra.mxu0 %v1105
    %1432 = vmatpush.bf16.msra.mxu0 %v1097
    %1433 = vmatpush.bf16.msra.mxu0 %v1089
    %1434 = vmatpush.bf16.msra.mxu0 %v1081
    %1435 = vmatpush.bf16.msra.mxu0 %v1073
    %1436 = vmatmul.bf16.gmra.mxu0 %v618
    %v1437 = vpop.f32.mrf.mxu0
    %v1438 = vadd.f32 %v1425, %v1437
    %v1439 = vpop.f32.mrf.mxu0
    %1440 = vdwg.mxu0
    %1441 = vmatpush.bf16.msra.mxu0 %v1066
    %1442 = vmatpush.bf16.msra.mxu0 %v1058
    %1443 = vmatpush.bf16.msra.mxu0 %v1050
    %1444 = vmatpush.bf16.msra.mxu0 %v1042
    %1445 = vmatpush.bf16.msra.mxu0 %v1034
    %1446 = vmatpush.bf16.msra.mxu0 %v1026
    %1447 = vmatpush.bf16.msra.mxu0 %v1018
    %1448 = vmatpush.bf16.msra.mxu0 %v1010
    %1449 = vmatmul.bf16.gmra.mxu0 %v617
    %v1450 = vpop.f32.mrf.mxu0
    %v1451 = vadd.f32 %v406, %v1450
    %v1452 = vpop.f32.mrf.mxu0
    %1453 = vdwg.mxu0
    %1454 = vmatpush.bf16.msra.mxu0 %v1130
    %1455 = vmatpush.bf16.msra.mxu0 %v1122
    %1456 = vmatpush.bf16.msra.mxu0 %v1114
    %1457 = vmatpush.bf16.msra.mxu0 %v1106
    %1458 = vmatpush.bf16.msra.mxu0 %v1098
    %1459 = vmatpush.bf16.msra.mxu0 %v1090
    %1460 = vmatpush.bf16.msra.mxu0 %v1082
    %1461 = vmatpush.bf16.msra.mxu0 %v1074
    %1462 = vmatmul.bf16.gmra.mxu0 %v618
    %v1463 = vpop.f32.mrf.mxu0
    %v1464 = vadd.f32 %v1451, %v1463
    %v1465 = vpop.f32.mrf.mxu0
    %1466 = vdwg.mxu0
    %v1467 = vxor.u32 %v1282, 2147483648
    %v1468 = vxor.u32 %v1308, 2147483648
    %v1469 = vxor.u32 %v1334, 2147483648
    %v1470 = vxor.u32 %v1360, 2147483648
    %v1471 = vxor.u32 %v1386, 2147483648
    %v1472 = vxor.u32 %v1412, 2147483648
    %v1473 = vmul.f32 %v1467, 1.442695
    %v1474 = vpow.pop %v1473
    %v1475 = vmul.f32 %v1468, 1.442695
    %v1476 = vpow.pop %v1475
    %v1477 = vmul.f32 %v1469, 1.442695
    %v1478 = vpow.pop %v1477
    %v1479 = vmul.f32 %v1470, 1.442695
    %v1480 = vpow.pop %v1479
    %v1481 = vmul.f32 %v1471, 1.442695
    %v1482 = vpow.pop %v1481
    %v1483 = vmul.f32 %v1472, 1.442695
    %v1484 = vpow.pop %v1483
    %v1485 = vadd.f32 %v1474, 1.0
    %v1486 = vadd.f32 %v1476, 1.0
    %v1487 = vadd.f32 %v1478, 1.0
    %v1488 = vadd.f32 %v1480, 1.0
    %v1489 = vadd.f32 %v1482, 1.0
    %v1490 = vadd.f32 %v1484, 1.0
    %v1491 = vrcp.pop %v1485
    %v1492 = vmul.f32 %v1485, %v1491
    %v1493 = vsub.f32 1.0, %v1492
    %v1494 = vmul.f32 %v1491, %v1493
    %v1495 = vadd.f32 %v1491, %v1494
    %vm1496 = vweird.f32 %v1485
    %vm1497 = vweird.f32 %v1491
    %vm1498 = vmor %vm1496, %vm1497
    %v1499 = vsel %vm1498, %v1491, %v1495
    %v1500 = vand.u32 2147483647, %v1485
    %vm1501 = vcmp.eq.f32.partialorder %v1500, 8.507059e+37
    %v1502 = vand.u32 %v1485, 2147483648
    %v1503 = vor.u32 1.1754944e-38, %v1502
    %v1504 = vsel %vm1501, %v1503, %v1499
    %v1505 = vmul.f32 1.0, %v1504
    %v1506 = vrcp.pop %v1486
    %v1507 = vmul.f32 %v1486, %v1506
    %v1508 = vsub.f32 1.0, %v1507
    %v1509 = vmul.f32 %v1506, %v1508
    %v1510 = vadd.f32 %v1506, %v1509
    %vm1511 = vweird.f32 %v1486
    %vm1512 = vweird.f32 %v1506
    %vm1513 = vmor %vm1511, %vm1512
    %v1514 = vsel %vm1513, %v1506, %v1510
    %v1515 = vand.u32 2147483647, %v1486
    %vm1516 = vcmp.eq.f32.partialorder %v1515, 8.507059e+37
    %v1517 = vand.u32 %v1486, 2147483648
    %v1518 = vor.u32 1.1754944e-38, %v1517
    %v1519 = vsel %vm1516, %v1518, %v1514
    %v1520 = vmul.f32 1.0, %v1519
    %v1521 = vrcp.pop %v1487
    %v1522 = vmul.f32 %v1487, %v1521
    %v1523 = vsub.f32 1.0, %v1522
    %v1524 = vmul.f32 %v1521, %v1523
    %v1525 = vadd.f32 %v1521, %v1524
    %vm1526 = vweird.f32 %v1487
    %vm1527 = vweird.f32 %v1521
    %vm1528 = vmor %vm1526, %vm1527
    %v1529 = vsel %vm1528, %v1521, %v1525
    %v1530 = vand.u32 2147483647, %v1487
    %vm1531 = vcmp.eq.f32.partialorder %v1530, 8.507059e+37
    %v1532 = vand.u32 %v1487, 2147483648
    %v1533 = vor.u32 1.1754944e-38, %v1532
    %v1534 = vsel %vm1531, %v1533, %v1529
    %v1535 = vmul.f32 1.0, %v1534
    %v1536 = vrcp.pop %v1488
    %v1537 = vmul.f32 %v1488, %v1536
    %v1538 = vsub.f32 1.0, %v1537
    %v1539 = vmul.f32 %v1536, %v1538
    %v1540 = vadd.f32 %v1536, %v1539
    %vm1541 = vweird.f32 %v1488
    %vm1542 = vweird.f32 %v1536
    %vm1543 = vmor %vm1541, %vm1542
    %v1544 = vsel %vm1543, %v1536, %v1540
    %v1545 = vand.u32 2147483647, %v1488
    %vm1546 = vcmp.eq.f32.partialorder %v1545, 8.507059e+37
    %v1547 = vand.u32 %v1488, 2147483648
    %v1548 = vor.u32 1.1754944e-38, %v1547
    %v1549 = vsel %vm1546, %v1548, %v1544
    %v1550 = vmul.f32 1.0, %v1549
    %v1551 = vrcp.pop %v1489
    %v1552 = vmul.f32 %v1489, %v1551
    %v1553 = vsub.f32 1.0, %v1552
    %v1554 = vmul.f32 %v1551, %v1553
    %v1555 = vadd.f32 %v1551, %v1554
    %vm1556 = vweird.f32 %v1489
    %vm1557 = vweird.f32 %v1551
    %vm1558 = vmor %vm1556, %vm1557
    %v1559 = vsel %vm1558, %v1551, %v1555
    %v1560 = vand.u32 2147483647, %v1489
    %vm1561 = vcmp.eq.f32.partialorder %v1560, 8.507059e+37
    %v1562 = vand.u32 %v1489, 2147483648
    %v1563 = vor.u32 1.1754944e-38, %v1562
    %v1564 = vsel %vm1561, %v1563, %v1559
    %v1565 = vmul.f32 1.0, %v1564
    %v1566 = vrcp.pop %v1490
    %v1567 = vmul.f32 %v1490, %v1566
    %v1568 = vsub.f32 1.0, %v1567
    %v1569 = vmul.f32 %v1566, %v1568
    %v1570 = vadd.f32 %v1566, %v1569
    %vm1571 = vweird.f32 %v1490
    %vm1572 = vweird.f32 %v1566
    %vm1573 = vmor %vm1571, %vm1572
    %v1574 = vsel %vm1573, %v1566, %v1570
    %v1575 = vand.u32 2147483647, %v1490
    %vm1576 = vcmp.eq.f32.partialorder %v1575, 8.507059e+37
    %v1577 = vand.u32 %v1490, 2147483648
    %v1578 = vor.u32 1.1754944e-38, %v1577
    %v1579 = vsel %vm1576, %v1578, %v1574
    %v1580 = vmul.f32 1.0, %v1579
    %v1581 = vtanh.pop %v1438
    %v1582 = vtanh.pop %v1464
    %v1583 = vmul.f32 %v1520, 0.0
    %v1584 = vmul.f32 %v1505, %v1581
    %v1585 = vadd.f32 %v1583, %v1584
    %v1586 = vtanh.pop %v1585
    %v1587 = vmul.f32 %v1535, %v1586
    %v1588 = vmul.f32 %v1565, %v614
    %v1589 = vmul.f32 %v1550, %v1582
    %v1590 = vadd.f32 %v1588, %v1589
    %v1591 = vtanh.pop %v1590
    %v1592 = vmul.f32 %v1580, %v1591
    %v1593 = vpack.c.bf16 %v1592, %v1592
    %v1594 = vpack.c.bf16 %v1587, %v1587
    %1595 = vmatpush.bf16.msra.mxu0 %v1059
    %1596 = vmatpush.bf16.msra.mxu0 %v1051
    %1597 = vmatpush.bf16.msra.mxu0 %v1043
    %1598 = vmatpush.bf16.msra.mxu0 %v1035
    %1599 = vmatpush.bf16.msra.mxu0 %v1027
    %1600 = vmatpush.bf16.msra.mxu0 %v1019
    %1601 = vmatpush.bf16.msra.mxu0 %v1011
    %1602 = vmatpush.bf16.msra.mxu0 %v1003
    %1603 = vmatmul.bf16.gmra.mxu0 %v1593
    %v1604 = vpop.f32.mrf.mxu0
    %v1605 = vadd.f32 %v184, %v1604
    %v1606 = vpop.f32.mrf.mxu0
    %1607 = vdwg.mxu0
    %1608 = vmatpush.bf16.msra.mxu0 %v1123
    %1609 = vmatpush.bf16.msra.mxu0 %v1115
    %1610 = vmatpush.bf16.msra.mxu0 %v1107
    %1611 = vmatpush.bf16.msra.mxu0 %v1099
    %1612 = vmatpush.bf16.msra.mxu0 %v1091
    %1613 = vmatpush.bf16.msra.mxu0 %v1083
    %1614 = vmatpush.bf16.msra.mxu0 %v1075
    %1615 = vmatpush.bf16.msra.mxu0 %v1067
    %1616 = vmatmul.bf16.gmra.mxu0 %v1594
    %v1617 = vpop.f32.mrf.mxu0
    %v1618 = vadd.f32 %v1605, %v1617
    %v1619 = vpop.f32.mrf.mxu0
    %1620 = vdwg.mxu0
    %1621 = vmatpush.bf16.msra.mxu0 %v1060
    %1622 = vmatpush.bf16.msra.mxu0 %v1052
    %1623 = vmatpush.bf16.msra.mxu0 %v1044
    %1624 = vmatpush.bf16.msra.mxu0 %v1036
    %1625 = vmatpush.bf16.msra.mxu0 %v1028
    %1626 = vmatpush.bf16.msra.mxu0 %v1020
    %1627 = vmatpush.bf16.msra.mxu0 %v1012
    %1628 = vmatpush.bf16.msra.mxu0 %v1004
    %1629 = vmatmul.bf16.gmra.mxu0 %v1593
    %v1630 = vpop.f32.mrf.mxu0
    %v1631 = vadd.f32 %v216, %v1630
    %v1632 = vpop.f32.mrf.mxu0
    %1633 = vdwg.mxu0
    %1634 = vmatpush.bf16.msra.mxu0 %v1124
    %1635 = vmatpush.bf16.msra.mxu0 %v1116
    %1636 = vmatpush.bf16.msra.mxu0 %v1108
    %1637 = vmatpush.bf16.msra.mxu0 %v1100
    %1638 = vmatpush.bf16.msra.mxu0 %v1092
    %1639 = vmatpush.bf16.msra.mxu0 %v1084
    %1640 = vmatpush.bf16.msra.mxu0 %v1076
    %1641 = vmatpush.bf16.msra.mxu0 %v1068
    %1642 = vmatmul.bf16.gmra.mxu0 %v1594
    %v1643 = vpop.f32.mrf.mxu0
    %v1644 = vadd.f32 %v1631, %v1643
    %v1645 = vpop.f32.mrf.mxu0
    %1646 = vdwg.mxu0
    %1647 = vmatpush.bf16.msra.mxu0 %v1061
    %1648 = vmatpush.bf16.msra.mxu0 %v1053
    %1649 = vmatpush.bf16.msra.mxu0 %v1045
    %1650 = vmatpush.bf16.msra.mxu0 %v1037
    %1651 = vmatpush.bf16.msra.mxu0 %v1029
    %1652 = vmatpush.bf16.msra.mxu0 %v1021
    %1653 = vmatpush.bf16.msra.mxu0 %v1013
    %1654 = vmatpush.bf16.msra.mxu0 %v1005
    %1655 = vmatmul.bf16.gmra.mxu0 %v1593
    %v1656 = vpop.f32.mrf.mxu0
    %v1657 = vadd.f32 %v248, %v1656
    %v1658 = vpop.f32.mrf.mxu0
    %1659 = vdwg.mxu0
    %1660 = vmatpush.bf16.msra.mxu0 %v1125
    %1661 = vmatpush.bf16.msra.mxu0 %v1117
    %1662 = vmatpush.bf16.msra.mxu0 %v1109
    %1663 = vmatpush.bf16.msra.mxu0 %v1101
    %1664 = vmatpush.bf16.msra.mxu0 %v1093
    %1665 = vmatpush.bf16.msra.mxu0 %v1085
    %1666 = vmatpush.bf16.msra.mxu0 %v1077
    %1667 = vmatpush.bf16.msra.mxu0 %v1069
    %1668 = vmatmul.bf16.gmra.mxu0 %v1594
    %v1669 = vpop.f32.mrf.mxu0
    %v1670 = vadd.f32 %v1657, %v1669
    %v1671 = vpop.f32.mrf.mxu0
    %1672 = vdwg.mxu0
    %1673 = vmatpush.bf16.msra.mxu0 %v1062
    %1674 = vmatpush.bf16.msra.mxu0 %v1054
    %1675 = vmatpush.bf16.msra.mxu0 %v1046
    %1676 = vmatpush.bf16.msra.mxu0 %v1038
    %1677 = vmatpush.bf16.msra.mxu0 %v1030
    %1678 = vmatpush.bf16.msra.mxu0 %v1022
    %1679 = vmatpush.bf16.msra.mxu0 %v1014
    %1680 = vmatpush.bf16.msra.mxu0 %v1006
    %1681 = vmatmul.bf16.gmra.mxu0 %v1593
    %v1682 = vpop.f32.mrf.mxu0
    %v1683 = vadd.f32 %v281, %v1682
    %v1684 = vpop.f32.mrf.mxu0
    %1685 = vdwg.mxu0
    %1686 = vmatpush.bf16.msra.mxu0 %v1126
    %1687 = vmatpush.bf16.msra.mxu0 %v1118
    %1688 = vmatpush.bf16.msra.mxu0 %v1110
    %1689 = vmatpush.bf16.msra.mxu0 %v1102
    %1690 = vmatpush.bf16.msra.mxu0 %v1094
    %1691 = vmatpush.bf16.msra.mxu0 %v1086
    %1692 = vmatpush.bf16.msra.mxu0 %v1078
    %1693 = vmatpush.bf16.msra.mxu0 %v1070
    %1694 = vmatmul.bf16.gmra.mxu0 %v1594
    %v1695 = vpop.f32.mrf.mxu0
    %v1696 = vadd.f32 %v1683, %v1695
    %v1697 = vpop.f32.mrf.mxu0
    %1698 = vdwg.mxu0
    %1699 = vmatpush.bf16.msra.mxu0 %v1063
    %1700 = vmatpush.bf16.msra.mxu0 %v1055
    %1701 = vmatpush.bf16.msra.mxu0 %v1047
    %1702 = vmatpush.bf16.msra.mxu0 %v1039
    %1703 = vmatpush.bf16.msra.mxu0 %v1031
    %1704 = vmatpush.bf16.msra.mxu0 %v1023
    %1705 = vmatpush.bf16.msra.mxu0 %v1015
    %1706 = vmatpush.bf16.msra.mxu0 %v1007
    %1707 = vmatmul.bf16.gmra.mxu0 %v1593
    %v1708 = vpop.f32.mrf.mxu0
    %v1709 = vadd.f32 %v313, %v1708
    %v1710 = vpop.f32.mrf.mxu0
    %1711 = vdwg.mxu0
    %1712 = vmatpush.bf16.msra.mxu0 %v1127
    %1713 = vmatpush.bf16.msra.mxu0 %v1119
    %1714 = vmatpush.bf16.msra.mxu0 %v1111
    %1715 = vmatpush.bf16.msra.mxu0 %v1103
    %1716 = vmatpush.bf16.msra.mxu0 %v1095
    %1717 = vmatpush.bf16.msra.mxu0 %v1087
    %1718 = vmatpush.bf16.msra.mxu0 %v1079
    %1719 = vmatpush.bf16.msra.mxu0 %v1071
    %1720 = vmatmul.bf16.gmra.mxu0 %v1594
    %v1721 = vpop.f32.mrf.mxu0
    %v1722 = vadd.f32 %v1709, %v1721
    %v1723 = vpop.f32.mrf.mxu0
    %1724 = vdwg.mxu0
    %1725 = vmatpush.bf16.msra.mxu0 %v1064
    %1726 = vmatpush.bf16.msra.mxu0 %v1056
    %1727 = vmatpush.bf16.msra.mxu0 %v1048
    %1728 = vmatpush.bf16.msra.mxu0 %v1040
    %1729 = vmatpush.bf16.msra.mxu0 %v1032
    %1730 = vmatpush.bf16.msra.mxu0 %v1024
    %1731 = vmatpush.bf16.msra.mxu0 %v1016
    %1732 = vmatpush.bf16.msra.mxu0 %v1008
    %1733 = vmatmul.bf16.gmra.mxu0 %v1593
    %v1734 = vpop.f32.mrf.mxu0
    %v1735 = vadd.f32 %v345, %v1734
    %v1736 = vpop.f32.mrf.mxu0
    %1737 = vdwg.mxu0
    %1738 = vmatpush.bf16.msra.mxu0 %v1128
    %1739 = vmatpush.bf16.msra.mxu0 %v1120
    %1740 = vmatpush.bf16.msra.mxu0 %v1112
    %1741 = vmatpush.bf16.msra.mxu0 %v1104
    %1742 = vmatpush.bf16.msra.mxu0 %v1096
    %1743 = vmatpush.bf16.msra.mxu0 %v1088
    %1744 = vmatpush.bf16.msra.mxu0 %v1080
    %1745 = vmatpush.bf16.msra.mxu0 %v1072
    %1746 = vmatmul.bf16.gmra.mxu0 %v1594
    %v1747 = vpop.f32.mrf.mxu0
    %v1748 = vadd.f32 %v1735, %v1747
    %v1749 = vpop.f32.mrf.mxu0
    %1750 = vdwg.mxu0
    %1751 = vmatpush.bf16.msra.mxu0 %v1065
    %1752 = vmatpush.bf16.msra.mxu0 %v1057
    %1753 = vmatpush.bf16.msra.mxu0 %v1049
    %1754 = vmatpush.bf16.msra.mxu0 %v1041
    %1755 = vmatpush.bf16.msra.mxu0 %v1033
    %1756 = vmatpush.bf16.msra.mxu0 %v1025
    %1757 = vmatpush.bf16.msra.mxu0 %v1017
    %1758 = vmatpush.bf16.msra.mxu0 %v1009
    %1759 = vmatmul.bf16.gmra.mxu0 %v1593
    %v1760 = vpop.f32.mrf.mxu0
    %v1761 = vadd.f32 %v376, %v1760
    %v1762 = vpop.f32.mrf.mxu0
    %1763 = vdwg.mxu0
    %1764 = vmatpush.bf16.msra.mxu0 %v1129
    %1765 = vmatpush.bf16.msra.mxu0 %v1121
    %1766 = vmatpush.bf16.msra.mxu0 %v1113
    %1767 = vmatpush.bf16.msra.mxu0 %v1105
    %1768 = vmatpush.bf16.msra.mxu0 %v1097
    %1769 = vmatpush.bf16.msra.mxu0 %v1089
    %1770 = vmatpush.bf16.msra.mxu0 %v1081
    %1771 = vmatpush.bf16.msra.mxu0 %v1073
    %1772 = vmatmul.bf16.gmra.mxu0 %v1594
    %v1773 = vpop.f32.mrf.mxu0
    %v1774 = vadd.f32 %v1761, %v1773
    %v1775 = vpop.f32.mrf.mxu0
    %1776 = vdwg.mxu0
    %1777 = vmatpush.bf16.msra.mxu0 %v1066
    %1778 = vmatpush.bf16.msra.mxu0 %v1058
    %1779 = vmatpush.bf16.msra.mxu0 %v1050
    %1780 = vmatpush.bf16.msra.mxu0 %v1042
    %1781 = vmatpush.bf16.msra.mxu0 %v1034
    %1782 = vmatpush.bf16.msra.mxu0 %v1026
    %1783 = vmatpush.bf16.msra.mxu0 %v1018
    %1784 = vmatpush.bf16.msra.mxu0 %v1010
    %1785 = vmatmul.bf16.gmra.mxu0 %v1593
    %v1786 = vpop.f32.mrf.mxu0
    %v1787 = vadd.f32 %v409, %v1786
    %v1788 = vpop.f32.mrf.mxu0
    %1789 = vdwg.mxu0
    %1790 = vmatpush.bf16.msra.mxu0 %v1130
    %1791 = vmatpush.bf16.msra.mxu0 %v1122
    %1792 = vmatpush.bf16.msra.mxu0 %v1114
    %1793 = vmatpush.bf16.msra.mxu0 %v1106
    %1794 = vmatpush.bf16.msra.mxu0 %v1098
    %1795 = vmatpush.bf16.msra.mxu0 %v1090
    %1796 = vmatpush.bf16.msra.mxu0 %v1082
    %1797 = vmatpush.bf16.msra.mxu0 %v1074
    %1798 = vmatmul.bf16.gmra.mxu0 %v1594
    %v1799 = vpop.f32.mrf.mxu0
    %v1800 = vadd.f32 %v1787, %v1799
    %v1801 = vpop.f32.mrf.mxu0
    %1802 = vdwg.mxu0
    %v1803 = vxor.u32 %v1618, 2147483648
    %v1804 = vxor.u32 %v1644, 2147483648
    %v1805 = vxor.u32 %v1670, 2147483648
    %v1806 = vxor.u32 %v1696, 2147483648
    %v1807 = vxor.u32 %v1722, 2147483648
    %v1808 = vxor.u32 %v1748, 2147483648
    %v1809 = vmul.f32 %v1803, 1.442695
    %v1810 = vpow.pop %v1809
    %v1811 = vmul.f32 %v1804, 1.442695
    %v1812 = vpow.pop %v1811
    %v1813 = vmul.f32 %v1805, 1.442695
    %v1814 = vpow.pop %v1813
    %v1815 = vmul.f32 %v1806, 1.442695
    %v1816 = vpow.pop %v1815
    %v1817 = vmul.f32 %v1807, 1.442695
    %v1818 = vpow.pop %v1817
    %v1819 = vmul.f32 %v1808, 1.442695
    %v1820 = vpow.pop %v1819
    %v1821 = vadd.f32 %v1810, 1.0
    %v1822 = vadd.f32 %v1812, 1.0
    %v1823 = vadd.f32 %v1814, 1.0
    %v1824 = vadd.f32 %v1816, 1.0
    %v1825 = vadd.f32 %v1818, 1.0
    %v1826 = vadd.f32 %v1820, 1.0
    %v1827 = vrcp.pop %v1821
    %v1828 = vmul.f32 %v1821, %v1827
    %v1829 = vsub.f32 1.0, %v1828
    %v1830 = vmul.f32 %v1827, %v1829
    %v1831 = vadd.f32 %v1827, %v1830
    %vm1832 = vweird.f32 %v1821
    %vm1833 = vweird.f32 %v1827
    %vm1834 = vmor %vm1832, %vm1833
    %v1835 = vsel %vm1834, %v1827, %v1831
    %v1836 = vand.u32 2147483647, %v1821
    %vm1837 = vcmp.eq.f32.partialorder %v1836, 8.507059e+37
    %v1838 = vand.u32 %v1821, 2147483648
    %v1839 = vor.u32 1.1754944e-38, %v1838
    %v1840 = vsel %vm1837, %v1839, %v1835
    %v1841 = vmul.f32 1.0, %v1840
    %v1842 = vrcp.pop %v1822
    %v1843 = vmul.f32 %v1822, %v1842
    %v1844 = vsub.f32 1.0, %v1843
    %v1845 = vmul.f32 %v1842, %v1844
    %v1846 = vadd.f32 %v1842, %v1845
    %vm1847 = vweird.f32 %v1822
    %vm1848 = vweird.f32 %v1842
    %vm1849 = vmor %vm1847, %vm1848
    %v1850 = vsel %vm1849, %v1842, %v1846
    %v1851 = vand.u32 2147483647, %v1822
    %vm1852 = vcmp.eq.f32.partialorder %v1851, 8.507059e+37
    %v1853 = vand.u32 %v1822, 2147483648
    %v1854 = vor.u32 1.1754944e-38, %v1853
    %v1855 = vsel %vm1852, %v1854, %v1850
    %v1856 = vmul.f32 1.0, %v1855
    %v1857 = vrcp.pop %v1823
    %v1858 = vmul.f32 %v1823, %v1857
    %v1859 = vsub.f32 1.0, %v1858
    %v1860 = vmul.f32 %v1857, %v1859
    %v1861 = vadd.f32 %v1857, %v1860
    %vm1862 = vweird.f32 %v1823
    %vm1863 = vweird.f32 %v1857
    %vm1864 = vmor %vm1862, %vm1863
    %v1865 = vsel %vm1864, %v1857, %v1861
    %v1866 = vand.u32 2147483647, %v1823
    %vm1867 = vcmp.eq.f32.partialorder %v1866, 8.507059e+37
    %v1868 = vand.u32 %v1823, 2147483648
    %v1869 = vor.u32 1.1754944e-38, %v1868
    %v1870 = vsel %vm1867, %v1869, %v1865
    %v1871 = vmul.f32 1.0, %v1870
    %v1872 = vrcp.pop %v1824
    %v1873 = vmul.f32 %v1824, %v1872
    %v1874 = vsub.f32 1.0, %v1873
    %v1875 = vmul.f32 %v1872, %v1874
    %v1876 = vadd.f32 %v1872, %v1875
    %vm1877 = vweird.f32 %v1824
    %vm1878 = vweird.f32 %v1872
    %vm1879 = vmor %vm1877, %vm1878
    %v1880 = vsel %vm1879, %v1872, %v1876
    %v1881 = vand.u32 2147483647, %v1824
    %vm1882 = vcmp.eq.f32.partialorder %v1881, 8.507059e+37
    %v1883 = vand.u32 %v1824, 2147483648
    %v1884 = vor.u32 1.1754944e-38, %v1883
    %v1885 = vsel %vm1882, %v1884, %v1880
    %v1886 = vmul.f32 1.0, %v1885
    %v1887 = vrcp.pop %v1825
    %v1888 = vmul.f32 %v1825, %v1887
    %v1889 = vsub.f32 1.0, %v1888
    %v1890 = vmul.f32 %v1887, %v1889
    %v1891 = vadd.f32 %v1887, %v1890
    %vm1892 = vweird.f32 %v1825
    %vm1893 = vweird.f32 %v1887
    %vm1894 = vmor %vm1892, %vm1893
    %v1895 = vsel %vm1894, %v1887, %v1891
    %v1896 = vand.u32 2147483647, %v1825
    %vm1897 = vcmp.eq.f32.partialorder %v1896, 8.507059e+37
    %v1898 = vand.u32 %v1825, 2147483648
    %v1899 = vor.u32 1.1754944e-38, %v1898
    %v1900 = vsel %vm1897, %v1899, %v1895
    %v1901 = vmul.f32 1.0, %v1900
    %v1902 = vrcp.pop %v1826
    %v1903 = vmul.f32 %v1826, %v1902
    %v1904 = vsub.f32 1.0, %v1903
    %v1905 = vmul.f32 %v1902, %v1904
    %v1906 = vadd.f32 %v1902, %v1905
    %vm1907 = vweird.f32 %v1826
    %vm1908 = vweird.f32 %v1902
    %vm1909 = vmor %vm1907, %vm1908
    %v1910 = vsel %vm1909, %v1902, %v1906
    %v1911 = vand.u32 2147483647, %v1826
    %vm1912 = vcmp.eq.f32.partialorder %v1911, 8.507059e+37
    %v1913 = vand.u32 %v1826, 2147483648
    %v1914 = vor.u32 1.1754944e-38, %v1913
    %v1915 = vsel %vm1912, %v1914, %v1910
    %v1916 = vmul.f32 1.0, %v1915
    %v1917 = vtanh.pop %v1774
    %v1918 = vtanh.pop %v1800
    %v1919 = vmul.f32 %v1856, %v1585
    %v1920 = vmul.f32 %v1841, %v1917
    %v1921 = vadd.f32 %v1919, %v1920
    %v1922 = vtanh.pop %v1921
    %v1923 = vmul.f32 %v1871, %v1922
    %v1924 = vmul.f32 %v1901, %v1590
    %v1925 = vmul.f32 %v1886, %v1918
    %v1926 = vadd.f32 %v1924, %v1925
    %v1927 = vtanh.pop %v1926
    %v1928 = vmul.f32 %v1916, %v1927
    %v1929 = vpack.c.bf16 %v1928, %v1928
    %v1930 = vpack.c.bf16 %v1923, %v1923
    %1931 = vmatpush.bf16.msra.mxu0 %v1059
    %1932 = vmatpush.bf16.msra.mxu0 %v1051
    %1933 = vmatpush.bf16.msra.mxu0 %v1043
    %1934 = vmatpush.bf16.msra.mxu0 %v1035
    %1935 = vmatpush.bf16.msra.mxu0 %v1027
    %1936 = vmatpush.bf16.msra.mxu0 %v1019
    %1937 = vmatpush.bf16.msra.mxu0 %v1011
    %1938 = vmatpush.bf16.msra.mxu0 %v1003
    %1939 = vmatmul.bf16.gmra.mxu0 %v1929
    %v1940 = vpop.f32.mrf.mxu0
    %v1941 = vadd.f32 %v186, %v1940
    %v1942 = vpop.f32.mrf.mxu0
    %1943 = vdwg.mxu0
    %1944 = vmatpush.bf16.msra.mxu0 %v1123
    %1945 = vmatpush.bf16.msra.mxu0 %v1115
    %1946 = vmatpush.bf16.msra.mxu0 %v1107
    %1947 = vmatpush.bf16.msra.mxu0 %v1099
    %1948 = vmatpush.bf16.msra.mxu0 %v1091
    %1949 = vmatpush.bf16.msra.mxu0 %v1083
    %1950 = vmatpush.bf16.msra.mxu0 %v1075
    %1951 = vmatpush.bf16.msra.mxu0 %v1067
    %1952 = vmatmul.bf16.gmra.mxu0 %v1930
    %v1953 = vpop.f32.mrf.mxu0
    %v1954 = vadd.f32 %v1941, %v1953
    %v1955 = vpop.f32.mrf.mxu0
    %1956 = vdwg.mxu0
    %1957 = vmatpush.bf16.msra.mxu0 %v1060
    %1958 = vmatpush.bf16.msra.mxu0 %v1052
    %1959 = vmatpush.bf16.msra.mxu0 %v1044
    %1960 = vmatpush.bf16.msra.mxu0 %v1036
    %1961 = vmatpush.bf16.msra.mxu0 %v1028
    %1962 = vmatpush.bf16.msra.mxu0 %v1020
    %1963 = vmatpush.bf16.msra.mxu0 %v1012
    %1964 = vmatpush.bf16.msra.mxu0 %v1004
    %1965 = vmatmul.bf16.gmra.mxu0 %v1929
    %v1966 = vpop.f32.mrf.mxu0
    %v1967 = vadd.f32 %v218, %v1966
    %v1968 = vpop.f32.mrf.mxu0
    %1969 = vdwg.mxu0
    %1970 = vmatpush.bf16.msra.mxu0 %v1124
    %1971 = vmatpush.bf16.msra.mxu0 %v1116
    %1972 = vmatpush.bf16.msra.mxu0 %v1108
    %1973 = vmatpush.bf16.msra.mxu0 %v1100
    %1974 = vmatpush.bf16.msra.mxu0 %v1092
    %1975 = vmatpush.bf16.msra.mxu0 %v1084
    %1976 = vmatpush.bf16.msra.mxu0 %v1076
    %1977 = vmatpush.bf16.msra.mxu0 %v1068
    %1978 = vmatmul.bf16.gmra.mxu0 %v1930
    %v1979 = vpop.f32.mrf.mxu0
    %v1980 = vadd.f32 %v1967, %v1979
    %v1981 = vpop.f32.mrf.mxu0
    %1982 = vdwg.mxu0
    %1983 = vmatpush.bf16.msra.mxu0 %v1061
    %1984 = vmatpush.bf16.msra.mxu0 %v1053
    %1985 = vmatpush.bf16.msra.mxu0 %v1045
    %1986 = vmatpush.bf16.msra.mxu0 %v1037
    %1987 = vmatpush.bf16.msra.mxu0 %v1029
    %1988 = vmatpush.bf16.msra.mxu0 %v1021
    %1989 = vmatpush.bf16.msra.mxu0 %v1013
    %1990 = vmatpush.bf16.msra.mxu0 %v1005
    %1991 = vmatmul.bf16.gmra.mxu0 %v1929
    %v1992 = vpop.f32.mrf.mxu0
    %v1993 = vadd.f32 %v250, %v1992
    %v1994 = vpop.f32.mrf.mxu0
    %1995 = vdwg.mxu0
    %1996 = vmatpush.bf16.msra.mxu0 %v1125
    %1997 = vmatpush.bf16.msra.mxu0 %v1117
    %1998 = vmatpush.bf16.msra.mxu0 %v1109
    %1999 = vmatpush.bf16.msra.mxu0 %v1101
    %2000 = vmatpush.bf16.msra.mxu0 %v1093
    %2001 = vmatpush.bf16.msra.mxu0 %v1085
    %2002 = vmatpush.bf16.msra.mxu0 %v1077
    %2003 = vmatpush.bf16.msra.mxu0 %v1069
    %2004 = vmatmul.bf16.gmra.mxu0 %v1930
    %v2005 = vpop.f32.mrf.mxu0
    %v2006 = vadd.f32 %v1993, %v2005
    %v2007 = vpop.f32.mrf.mxu0
    %2008 = vdwg.mxu0
    %2009 = vmatpush.bf16.msra.mxu0 %v1062
    %2010 = vmatpush.bf16.msra.mxu0 %v1054
    %2011 = vmatpush.bf16.msra.mxu0 %v1046
    %2012 = vmatpush.bf16.msra.mxu0 %v1038
    %2013 = vmatpush.bf16.msra.mxu0 %v1030
    %2014 = vmatpush.bf16.msra.mxu0 %v1022
    %2015 = vmatpush.bf16.msra.mxu0 %v1014
    %2016 = vmatpush.bf16.msra.mxu0 %v1006
    %2017 = vmatmul.bf16.gmra.mxu0 %v1929
    %v2018 = vpop.f32.mrf.mxu0
    %v2019 = vadd.f32 %v283, %v2018
    %v2020 = vpop.f32.mrf.mxu0
    %2021 = vdwg.mxu0
    %2022 = vmatpush.bf16.msra.mxu0 %v1126
    %2023 = vmatpush.bf16.msra.mxu0 %v1118
    %2024 = vmatpush.bf16.msra.mxu0 %v1110
    %2025 = vmatpush.bf16.msra.mxu0 %v1102
    %2026 = vmatpush.bf16.msra.mxu0 %v1094
    %2027 = vmatpush.bf16.msra.mxu0 %v1086
    %2028 = vmatpush.bf16.msra.mxu0 %v1078
    %2029 = vmatpush.bf16.msra.mxu0 %v1070
    %2030 = vmatmul.bf16.gmra.mxu0 %v1930
    %v2031 = vpop.f32.mrf.mxu0
    %v2032 = vadd.f32 %v2019, %v2031
    %v2033 = vpop.f32.mrf.mxu0
    %2034 = vdwg.mxu0
    %2035 = vmatpush.bf16.msra.mxu0 %v1063
    %2036 = vmatpush.bf16.msra.mxu0 %v1055
    %2037 = vmatpush.bf16.msra.mxu0 %v1047
    %2038 = vmatpush.bf16.msra.mxu0 %v1039
    %2039 = vmatpush.bf16.msra.mxu0 %v1031
    %2040 = vmatpush.bf16.msra.mxu0 %v1023
    %2041 = vmatpush.bf16.msra.mxu0 %v1015
    %2042 = vmatpush.bf16.msra.mxu0 %v1007
    %2043 = vmatmul.bf16.gmra.mxu0 %v1929
    %v2044 = vpop.f32.mrf.mxu0
    %v2045 = vadd.f32 %v315, %v2044
    %v2046 = vpop.f32.mrf.mxu0
    %2047 = vdwg.mxu0
    %2048 = vmatpush.bf16.msra.mxu0 %v1127
    %2049 = vmatpush.bf16.msra.mxu0 %v1119
    %2050 = vmatpush.bf16.msra.mxu0 %v1111
    %2051 = vmatpush.bf16.msra.mxu0 %v1103
    %2052 = vmatpush.bf16.msra.mxu0 %v1095
    %2053 = vmatpush.bf16.msra.mxu0 %v1087
    %2054 = vmatpush.bf16.msra.mxu0 %v1079
    %2055 = vmatpush.bf16.msra.mxu0 %v1071
    %2056 = vmatmul.bf16.gmra.mxu0 %v1930
    %v2057 = vpop.f32.mrf.mxu0
    %v2058 = vadd.f32 %v2045, %v2057
    %v2059 = vpop.f32.mrf.mxu0
    %2060 = vdwg.mxu0
    %2061 = vmatpush.bf16.msra.mxu0 %v1064
    %2062 = vmatpush.bf16.msra.mxu0 %v1056
    %2063 = vmatpush.bf16.msra.mxu0 %v1048
    %2064 = vmatpush.bf16.msra.mxu0 %v1040
    %2065 = vmatpush.bf16.msra.mxu0 %v1032
    %2066 = vmatpush.bf16.msra.mxu0 %v1024
    %2067 = vmatpush.bf16.msra.mxu0 %v1016
    %2068 = vmatpush.bf16.msra.mxu0 %v1008
    %2069 = vmatmul.bf16.gmra.mxu0 %v1929
    %v2070 = vpop.f32.mrf.mxu0
    %v2071 = vadd.f32 %v347, %v2070
    %v2072 = vpop.f32.mrf.mxu0
    %2073 = vdwg.mxu0
    %2074 = vmatpush.bf16.msra.mxu0 %v1128
    %2075 = vmatpush.bf16.msra.mxu0 %v1120
    %2076 = vmatpush.bf16.msra.mxu0 %v1112
    %2077 = vmatpush.bf16.msra.mxu0 %v1104
    %2078 = vmatpush.bf16.msra.mxu0 %v1096
    %2079 = vmatpush.bf16.msra.mxu0 %v1088
    %2080 = vmatpush.bf16.msra.mxu0 %v1080
    %2081 = vmatpush.bf16.msra.mxu0 %v1072
    %2082 = vmatmul.bf16.gmra.mxu0 %v1930
    %v2083 = vpop.f32.mrf.mxu0
    %v2084 = vadd.f32 %v2071, %v2083
    %v2085 = vpop.f32.mrf.mxu0
    %2086 = vdwg.mxu0
    %2087 = vmatpush.bf16.msra.mxu0 %v1065
    %2088 = vmatpush.bf16.msra.mxu0 %v1057
    %2089 = vmatpush.bf16.msra.mxu0 %v1049
    %2090 = vmatpush.bf16.msra.mxu0 %v1041
    %2091 = vmatpush.bf16.msra.mxu0 %v1033
    %2092 = vmatpush.bf16.msra.mxu0 %v1025
    %2093 = vmatpush.bf16.msra.mxu0 %v1017
    %2094 = vmatpush.bf16.msra.mxu0 %v1009
    %2095 = vmatmul.bf16.gmra.mxu0 %v1929
    %v2096 = vpop.f32.mrf.mxu0
    %v2097 = vadd.f32 %v378, %v2096
    %v2098 = vpop.f32.mrf.mxu0
    %2099 = vdwg.mxu0
    %2100 = vmatpush.bf16.msra.mxu0 %v1129
    %2101 = vmatpush.bf16.msra.mxu0 %v1121
    %2102 = vmatpush.bf16.msra.mxu0 %v1113
    %2103 = vmatpush.bf16.msra.mxu0 %v1105
    %2104 = vmatpush.bf16.msra.mxu0 %v1097
    %2105 = vmatpush.bf16.msra.mxu0 %v1089
    %2106 = vmatpush.bf16.msra.mxu0 %v1081
    %2107 = vmatpush.bf16.msra.mxu0 %v1073
    %2108 = vmatmul.bf16.gmra.mxu0 %v1930
    %v2109 = vpop.f32.mrf.mxu0
    %v2110 = vadd.f32 %v2097, %v2109
    %v2111 = vpop.f32.mrf.mxu0
    %2112 = vdwg.mxu0
    %2113 = vmatpush.bf16.msra.mxu0 %v1066
    %2114 = vmatpush.bf16.msra.mxu0 %v1058
    %2115 = vmatpush.bf16.msra.mxu0 %v1050
    %2116 = vmatpush.bf16.msra.mxu0 %v1042
    %2117 = vmatpush.bf16.msra.mxu0 %v1034
    %2118 = vmatpush.bf16.msra.mxu0 %v1026
    %2119 = vmatpush.bf16.msra.mxu0 %v1018
    %2120 = vmatpush.bf16.msra.mxu0 %v1010
    %2121 = vmatmul.bf16.gmra.mxu0 %v1929
    %v2122 = vpop.f32.mrf.mxu0
    %v2123 = vadd.f32 %v411, %v2122
    %v2124 = vpop.f32.mrf.mxu0
    %2125 = vdwg.mxu0
    %2126 = vmatpush.bf16.msra.mxu0 %v1130
    %2127 = vmatpush.bf16.msra.mxu0 %v1122
    %2128 = vmatpush.bf16.msra.mxu0 %v1114
    %2129 = vmatpush.bf16.msra.mxu0 %v1106
    %2130 = vmatpush.bf16.msra.mxu0 %v1098
    %2131 = vmatpush.bf16.msra.mxu0 %v1090
    %2132 = vmatpush.bf16.msra.mxu0 %v1082
    %2133 = vmatpush.bf16.msra.mxu0 %v1074
    %2134 = vmatmul.bf16.gmra.mxu0 %v1930
    %v2135 = vpop.f32.mrf.mxu0
    %v2136 = vadd.f32 %v2123, %v2135
    %v2137 = vpop.f32.mrf.mxu0
    %2138 = vdwg.mxu0
    %v2139 = vxor.u32 %v1954, 2147483648
    %v2140 = vxor.u32 %v1980, 2147483648
    %v2141 = vxor.u32 %v2006, 2147483648
    %v2142 = vxor.u32 %v2032, 2147483648
    %v2143 = vxor.u32 %v2058, 2147483648
    %v2144 = vxor.u32 %v2084, 2147483648
    %v2145 = vmul.f32 %v2139, 1.442695
    %v2146 = vpow.pop %v2145
    %v2147 = vmul.f32 %v2140, 1.442695
    %v2148 = vpow.pop %v2147
    %v2149 = vmul.f32 %v2141, 1.442695
    %v2150 = vpow.pop %v2149
    %v2151 = vmul.f32 %v2142, 1.442695
    %v2152 = vpow.pop %v2151
    %v2153 = vmul.f32 %v2143, 1.442695
    %v2154 = vpow.pop %v2153
    %v2155 = vmul.f32 %v2144, 1.442695
    %v2156 = vpow.pop %v2155
    %v2157 = vadd.f32 %v2146, 1.0
    %v2158 = vadd.f32 %v2148, 1.0
    %v2159 = vadd.f32 %v2150, 1.0
    %v2160 = vadd.f32 %v2152, 1.0
    %v2161 = vadd.f32 %v2154, 1.0
    %v2162 = vadd.f32 %v2156, 1.0
    %v2163 = vrcp.pop %v2157
    %v2164 = vmul.f32 %v2157, %v2163
    %v2165 = vsub.f32 1.0, %v2164
    %v2166 = vmul.f32 %v2163, %v2165
    %v2167 = vadd.f32 %v2163, %v2166
    %vm2168 = vweird.f32 %v2157
    %vm2169 = vweird.f32 %v2163
    %vm2170 = vmor %vm2168, %vm2169
    %v2171 = vsel %vm2170, %v2163, %v2167
    %v2172 = vand.u32 2147483647, %v2157
    %vm2173 = vcmp.eq.f32.partialorder %v2172, 8.507059e+37
    %v2174 = vand.u32 %v2157, 2147483648
    %v2175 = vor.u32 1.1754944e-38, %v2174
    %v2176 = vsel %vm2173, %v2175, %v2171
    %v2177 = vmul.f32 1.0, %v2176
    %v2178 = vrcp.pop %v2158
    %v2179 = vmul.f32 %v2158, %v2178
    %v2180 = vsub.f32 1.0, %v2179
    %v2181 = vmul.f32 %v2178, %v2180
    %v2182 = vadd.f32 %v2178, %v2181
    %vm2183 = vweird.f32 %v2158
    %vm2184 = vweird.f32 %v2178
    %vm2185 = vmor %vm2183, %vm2184
    %v2186 = vsel %vm2185, %v2178, %v2182
    %v2187 = vand.u32 2147483647, %v2158
    %vm2188 = vcmp.eq.f32.partialorder %v2187, 8.507059e+37
    %v2189 = vand.u32 %v2158, 2147483648
    %v2190 = vor.u32 1.1754944e-38, %v2189
    %v2191 = vsel %vm2188, %v2190, %v2186
    %v2192 = vmul.f32 1.0, %v2191
    %v2193 = vrcp.pop %v2159
    %v2194 = vmul.f32 %v2159, %v2193
    %v2195 = vsub.f32 1.0, %v2194
    %v2196 = vmul.f32 %v2193, %v2195
    %v2197 = vadd.f32 %v2193, %v2196
    %vm2198 = vweird.f32 %v2159
    %vm2199 = vweird.f32 %v2193
    %vm2200 = vmor %vm2198, %vm2199
    %v2201 = vsel %vm2200, %v2193, %v2197
    %v2202 = vand.u32 2147483647, %v2159
    %vm2203 = vcmp.eq.f32.partialorder %v2202, 8.507059e+37
    %v2204 = vand.u32 %v2159, 2147483648
    %v2205 = vor.u32 1.1754944e-38, %v2204
    %v2206 = vsel %vm2203, %v2205, %v2201
    %v2207 = vmul.f32 1.0, %v2206
    %v2208 = vrcp.pop %v2160
    %v2209 = vmul.f32 %v2160, %v2208
    %v2210 = vsub.f32 1.0, %v2209
    %v2211 = vmul.f32 %v2208, %v2210
    %v2212 = vadd.f32 %v2208, %v2211
    %vm2213 = vweird.f32 %v2160
    %vm2214 = vweird.f32 %v2208
    %vm2215 = vmor %vm2213, %vm2214
    %v2216 = vsel %vm2215, %v2208, %v2212
    %v2217 = vand.u32 2147483647, %v2160
    %vm2218 = vcmp.eq.f32.partialorder %v2217, 8.507059e+37
    %v2219 = vand.u32 %v2160, 2147483648
    %v2220 = vor.u32 1.1754944e-38, %v2219
    %v2221 = vsel %vm2218, %v2220, %v2216
    %v2222 = vmul.f32 1.0, %v2221
    %v2223 = vrcp.pop %v2161
    %v2224 = vmul.f32 %v2161, %v2223
    %v2225 = vsub.f32 1.0, %v2224
    %v2226 = vmul.f32 %v2223, %v2225
    %v2227 = vadd.f32 %v2223, %v2226
    %vm2228 = vweird.f32 %v2161
    %vm2229 = vweird.f32 %v2223
    %vm2230 = vmor %vm2228, %vm2229
    %v2231 = vsel %vm2230, %v2223, %v2227
    %v2232 = vand.u32 2147483647, %v2161
    %vm2233 = vcmp.eq.f32.partialorder %v2232, 8.507059e+37
    %v2234 = vand.u32 %v2161, 2147483648
    %v2235 = vor.u32 1.1754944e-38, %v2234
    %v2236 = vsel %vm2233, %v2235, %v2231
    %v2237 = vmul.f32 1.0, %v2236
    %v2238 = vrcp.pop %v2162
    %v2239 = vmul.f32 %v2162, %v2238
    %v2240 = vsub.f32 1.0, %v2239
    %v2241 = vmul.f32 %v2238, %v2240
    %v2242 = vadd.f32 %v2238, %v2241
    %vm2243 = vweird.f32 %v2162
    %vm2244 = vweird.f32 %v2238
    %vm2245 = vmor %vm2243, %vm2244
    %v2246 = vsel %vm2245, %v2238, %v2242
    %v2247 = vand.u32 2147483647, %v2162
    %vm2248 = vcmp.eq.f32.partialorder %v2247, 8.507059e+37
    %v2249 = vand.u32 %v2162, 2147483648
    %v2250 = vor.u32 1.1754944e-38, %v2249
    %v2251 = vsel %vm2248, %v2250, %v2246
    %v2252 = vmul.f32 1.0, %v2251
    %v2253 = vtanh.pop %v2110
    %v2254 = vtanh.pop %v2136
    %v2255 = vmul.f32 %v2192, %v1921
    %v2256 = vmul.f32 %v2177, %v2253
    %v2257 = vadd.f32 %v2255, %v2256
    %v2258 = vtanh.pop %v2257
    %v2259 = vmul.f32 %v2207, %v2258
    %v2260 = vmul.f32 %v2237, %v1926
    %v2261 = vmul.f32 %v2222, %v2254
    %v2262 = vadd.f32 %v2260, %v2261
    %v2263 = vtanh.pop %v2262
    %v2264 = vmul.f32 %v2252, %v2263
    %v2265 = vpack.c.bf16 %v2264, %v2264
    %v2266 = vpack.c.bf16 %v2259, %v2259
    %2267 = vmatpush.bf16.msra.mxu0 %v1059
    %2268 = vmatpush.bf16.msra.mxu0 %v1051
    %2269 = vmatpush.bf16.msra.mxu0 %v1043
    %2270 = vmatpush.bf16.msra.mxu0 %v1035
    %2271 = vmatpush.bf16.msra.mxu0 %v1027
    %2272 = vmatpush.bf16.msra.mxu0 %v1019
    %2273 = vmatpush.bf16.msra.mxu0 %v1011
    %2274 = vmatpush.bf16.msra.mxu0 %v1003
    %2275 = vmatmul.bf16.gmra.mxu0 %v2265
    %v2276 = vpop.f32.mrf.mxu0
    %v2277 = vadd.f32 %v189, %v2276
    %v2278 = vpop.f32.mrf.mxu0
    %2279 = vdwg.mxu0
    %2280 = vmatpush.bf16.msra.mxu0 %v1123
    %2281 = vmatpush.bf16.msra.mxu0 %v1115
    %2282 = vmatpush.bf16.msra.mxu0 %v1107
    %2283 = vmatpush.bf16.msra.mxu0 %v1099
    %2284 = vmatpush.bf16.msra.mxu0 %v1091
    %2285 = vmatpush.bf16.msra.mxu0 %v1083
    %2286 = vmatpush.bf16.msra.mxu0 %v1075
    %2287 = vmatpush.bf16.msra.mxu0 %v1067
    %2288 = vmatmul.bf16.gmra.mxu0 %v2266
    %v2289 = vpop.f32.mrf.mxu0
    %v2290 = vadd.f32 %v2277, %v2289
    %v2291 = vpop.f32.mrf.mxu0
    %2292 = vdwg.mxu0
    %2293 = vmatpush.bf16.msra.mxu0 %v1060
    %2294 = vmatpush.bf16.msra.mxu0 %v1052
    %2295 = vmatpush.bf16.msra.mxu0 %v1044
    %2296 = vmatpush.bf16.msra.mxu0 %v1036
    %2297 = vmatpush.bf16.msra.mxu0 %v1028
    %2298 = vmatpush.bf16.msra.mxu0 %v1020
    %2299 = vmatpush.bf16.msra.mxu0 %v1012
    %2300 = vmatpush.bf16.msra.mxu0 %v1004
    %2301 = vmatmul.bf16.gmra.mxu0 %v2265
    %v2302 = vpop.f32.mrf.mxu0
    %v2303 = vadd.f32 %v221, %v2302
    %v2304 = vpop.f32.mrf.mxu0
    %2305 = vdwg.mxu0
    %2306 = vmatpush.bf16.msra.mxu0 %v1124
    %2307 = vmatpush.bf16.msra.mxu0 %v1116
    %2308 = vmatpush.bf16.msra.mxu0 %v1108
    %2309 = vmatpush.bf16.msra.mxu0 %v1100
    %2310 = vmatpush.bf16.msra.mxu0 %v1092
    %2311 = vmatpush.bf16.msra.mxu0 %v1084
    %2312 = vmatpush.bf16.msra.mxu0 %v1076
    %2313 = vmatpush.bf16.msra.mxu0 %v1068
    %2314 = vmatmul.bf16.gmra.mxu0 %v2266
    %v2315 = vpop.f32.mrf.mxu0
    %v2316 = vadd.f32 %v2303, %v2315
    %v2317 = vpop.f32.mrf.mxu0
    %2318 = vdwg.mxu0
    %2319 = vmatpush.bf16.msra.mxu0 %v1061
    %2320 = vmatpush.bf16.msra.mxu0 %v1053
    %2321 = vmatpush.bf16.msra.mxu0 %v1045
    %2322 = vmatpush.bf16.msra.mxu0 %v1037
    %2323 = vmatpush.bf16.msra.mxu0 %v1029
    %2324 = vmatpush.bf16.msra.mxu0 %v1021
    %2325 = vmatpush.bf16.msra.mxu0 %v1013
    %2326 = vmatpush.bf16.msra.mxu0 %v1005
    %2327 = vmatmul.bf16.gmra.mxu0 %v2265
    %v2328 = vpop.f32.mrf.mxu0
    %v2329 = vadd.f32 %v253, %v2328
    %v2330 = vpop.f32.mrf.mxu0
    %2331 = vdwg.mxu0
    %2332 = vmatpush.bf16.msra.mxu0 %v1125
    %2333 = vmatpush.bf16.msra.mxu0 %v1117
    %2334 = vmatpush.bf16.msra.mxu0 %v1109
    %2335 = vmatpush.bf16.msra.mxu0 %v1101
    %2336 = vmatpush.bf16.msra.mxu0 %v1093
    %2337 = vmatpush.bf16.msra.mxu0 %v1085
    %2338 = vmatpush.bf16.msra.mxu0 %v1077
    %2339 = vmatpush.bf16.msra.mxu0 %v1069
    %2340 = vmatmul.bf16.gmra.mxu0 %v2266
    %v2341 = vpop.f32.mrf.mxu0
    %v2342 = vadd.f32 %v2329, %v2341
    %v2343 = vpop.f32.mrf.mxu0
    %2344 = vdwg.mxu0
    %2345 = vmatpush.bf16.msra.mxu0 %v1062
    %2346 = vmatpush.bf16.msra.mxu0 %v1054
    %2347 = vmatpush.bf16.msra.mxu0 %v1046
    %2348 = vmatpush.bf16.msra.mxu0 %v1038
    %2349 = vmatpush.bf16.msra.mxu0 %v1030
    %2350 = vmatpush.bf16.msra.mxu0 %v1022
    %2351 = vmatpush.bf16.msra.mxu0 %v1014
    %2352 = vmatpush.bf16.msra.mxu0 %v1006
    %2353 = vmatmul.bf16.gmra.mxu0 %v2265
    %v2354 = vpop.f32.mrf.mxu0
    %v2355 = vadd.f32 %v286, %v2354
    %v2356 = vpop.f32.mrf.mxu0
    %2357 = vdwg.mxu0
    %2358 = vmatpush.bf16.msra.mxu0 %v1126
    %2359 = vmatpush.bf16.msra.mxu0 %v1118
    %2360 = vmatpush.bf16.msra.mxu0 %v1110
    %2361 = vmatpush.bf16.msra.mxu0 %v1102
    %2362 = vmatpush.bf16.msra.mxu0 %v1094
    %2363 = vmatpush.bf16.msra.mxu0 %v1086
    %2364 = vmatpush.bf16.msra.mxu0 %v1078
    %2365 = vmatpush.bf16.msra.mxu0 %v1070
    %2366 = vmatmul.bf16.gmra.mxu0 %v2266
    %v2367 = vpop.f32.mrf.mxu0
    %v2368 = vadd.f32 %v2355, %v2367
    %v2369 = vpop.f32.mrf.mxu0
    %2370 = vdwg.mxu0
    %2371 = vmatpush.bf16.msra.mxu0 %v1063
    %2372 = vmatpush.bf16.msra.mxu0 %v1055
    %2373 = vmatpush.bf16.msra.mxu0 %v1047
    %2374 = vmatpush.bf16.msra.mxu0 %v1039
    %2375 = vmatpush.bf16.msra.mxu0 %v1031
    %2376 = vmatpush.bf16.msra.mxu0 %v1023
    %2377 = vmatpush.bf16.msra.mxu0 %v1015
    %2378 = vmatpush.bf16.msra.mxu0 %v1007
    %2379 = vmatmul.bf16.gmra.mxu0 %v2265
    %v2380 = vpop.f32.mrf.mxu0
    %v2381 = vadd.f32 %v318, %v2380
    %v2382 = vpop.f32.mrf.mxu0
    %2383 = vdwg.mxu0
    %2384 = vmatpush.bf16.msra.mxu0 %v1127
    %2385 = vmatpush.bf16.msra.mxu0 %v1119
    %2386 = vmatpush.bf16.msra.mxu0 %v1111
    %2387 = vmatpush.bf16.msra.mxu0 %v1103
    %2388 = vmatpush.bf16.msra.mxu0 %v1095
    %2389 = vmatpush.bf16.msra.mxu0 %v1087
    %2390 = vmatpush.bf16.msra.mxu0 %v1079
    %2391 = vmatpush.bf16.msra.mxu0 %v1071
    %2392 = vmatmul.bf16.gmra.mxu0 %v2266
    %v2393 = vpop.f32.mrf.mxu0
    %v2394 = vadd.f32 %v2381, %v2393
    %v2395 = vpop.f32.mrf.mxu0
    %2396 = vdwg.mxu0
    %2397 = vmatpush.bf16.msra.mxu0 %v1064
    %2398 = vmatpush.bf16.msra.mxu0 %v1056
    %2399 = vmatpush.bf16.msra.mxu0 %v1048
    %2400 = vmatpush.bf16.msra.mxu0 %v1040
    %2401 = vmatpush.bf16.msra.mxu0 %v1032
    %2402 = vmatpush.bf16.msra.mxu0 %v1024
    %2403 = vmatpush.bf16.msra.mxu0 %v1016
    %2404 = vmatpush.bf16.msra.mxu0 %v1008
    %2405 = vmatmul.bf16.gmra.mxu0 %v2265
    %v2406 = vpop.f32.mrf.mxu0
    %v2407 = vadd.f32 %v350, %v2406
    %v2408 = vpop.f32.mrf.mxu0
    %2409 = vdwg.mxu0
    %2410 = vmatpush.bf16.msra.mxu0 %v1128
    %2411 = vmatpush.bf16.msra.mxu0 %v1120
    %2412 = vmatpush.bf16.msra.mxu0 %v1112
    %2413 = vmatpush.bf16.msra.mxu0 %v1104
    %2414 = vmatpush.bf16.msra.mxu0 %v1096
    %2415 = vmatpush.bf16.msra.mxu0 %v1088
    %2416 = vmatpush.bf16.msra.mxu0 %v1080
    %2417 = vmatpush.bf16.msra.mxu0 %v1072
    %2418 = vmatmul.bf16.gmra.mxu0 %v2266
    %v2419 = vpop.f32.mrf.mxu0
    %v2420 = vadd.f32 %v2407, %v2419
    %v2421 = vpop.f32.mrf.mxu0
    %2422 = vdwg.mxu0
    %2423 = vmatpush.bf16.msra.mxu0 %v1065
    %2424 = vmatpush.bf16.msra.mxu0 %v1057
    %2425 = vmatpush.bf16.msra.mxu0 %v1049
    %2426 = vmatpush.bf16.msra.mxu0 %v1041
    %2427 = vmatpush.bf16.msra.mxu0 %v1033
    %2428 = vmatpush.bf16.msra.mxu0 %v1025
    %2429 = vmatpush.bf16.msra.mxu0 %v1017
    %2430 = vmatpush.bf16.msra.mxu0 %v1009
    %2431 = vmatmul.bf16.gmra.mxu0 %v2265
    %v2432 = vpop.f32.mrf.mxu0
    %v2433 = vadd.f32 %v381, %v2432
    %v2434 = vpop.f32.mrf.mxu0
    %2435 = vdwg.mxu0
    %2436 = vmatpush.bf16.msra.mxu0 %v1129
    %2437 = vmatpush.bf16.msra.mxu0 %v1121
    %2438 = vmatpush.bf16.msra.mxu0 %v1113
    %2439 = vmatpush.bf16.msra.mxu0 %v1105
    %2440 = vmatpush.bf16.msra.mxu0 %v1097
    %2441 = vmatpush.bf16.msra.mxu0 %v1089
    %2442 = vmatpush.bf16.msra.mxu0 %v1081
    %2443 = vmatpush.bf16.msra.mxu0 %v1073
    %2444 = vmatmul.bf16.gmra.mxu0 %v2266
    %v2445 = vpop.f32.mrf.mxu0
    %v2446 = vadd.f32 %v2433, %v2445
    %v2447 = vpop.f32.mrf.mxu0
    %2448 = vdwg.mxu0
    %2449 = vmatpush.bf16.msra.mxu0 %v1066
    %2450 = vmatpush.bf16.msra.mxu0 %v1058
    %2451 = vmatpush.bf16.msra.mxu0 %v1050
    %2452 = vmatpush.bf16.msra.mxu0 %v1042
    %2453 = vmatpush.bf16.msra.mxu0 %v1034
    %2454 = vmatpush.bf16.msra.mxu0 %v1026
    %2455 = vmatpush.bf16.msra.mxu0 %v1018
    %2456 = vmatpush.bf16.msra.mxu0 %v1010
    %2457 = vmatmul.bf16.gmra.mxu0 %v2265
    %v2458 = vpop.f32.mrf.mxu0
    %v2459 = vadd.f32 %v414, %v2458
    %v2460 = vpop.f32.mrf.mxu0
    %2461 = vdwg.mxu0
    %2462 = vmatpush.bf16.msra.mxu0 %v1130
    %2463 = vmatpush.bf16.msra.mxu0 %v1122
    %2464 = vmatpush.bf16.msra.mxu0 %v1114
    %2465 = vmatpush.bf16.msra.mxu0 %v1106
    %2466 = vmatpush.bf16.msra.mxu0 %v1098
    %2467 = vmatpush.bf16.msra.mxu0 %v1090
    %2468 = vmatpush.bf16.msra.mxu0 %v1082
    %2469 = vmatpush.bf16.msra.mxu0 %v1074
    %2470 = vmatmul.bf16.gmra.mxu0 %v2266
    %v2471 = vpop.f32.mrf.mxu0
    %v2472 = vadd.f32 %v2459, %v2471
    %v2473 = vpop.f32.mrf.mxu0
    %2474 = vdwg.mxu0
    %v2475 = vxor.u32 %v2290, 2147483648
    %v2476 = vxor.u32 %v2316, 2147483648
    %v2477 = vxor.u32 %v2342, 2147483648
    %v2478 = vxor.u32 %v2368, 2147483648
    %v2479 = vxor.u32 %v2394, 2147483648
    %v2480 = vxor.u32 %v2420, 2147483648
    %v2481 = vmul.f32 %v2475, 1.442695
    %v2482 = vpow.pop %v2481
    %v2483 = vmul.f32 %v2476, 1.442695
    %v2484 = vpow.pop %v2483
    %v2485 = vmul.f32 %v2477, 1.442695
    %v2486 = vpow.pop %v2485
    %v2487 = vmul.f32 %v2478, 1.442695
    %v2488 = vpow.pop %v2487
    %v2489 = vmul.f32 %v2479, 1.442695
    %v2490 = vpow.pop %v2489
    %v2491 = vmul.f32 %v2480, 1.442695
    %v2492 = vpow.pop %v2491
    %v2493 = vadd.f32 %v2482, 1.0
    %v2494 = vadd.f32 %v2484, 1.0
    %v2495 = vadd.f32 %v2486, 1.0
    %v2496 = vadd.f32 %v2488, 1.0
    %v2497 = vadd.f32 %v2490, 1.0
    %v2498 = vadd.f32 %v2492, 1.0
    %v2499 = vrcp.pop %v2493
    %v2500 = vmul.f32 %v2493, %v2499
    %v2501 = vsub.f32 1.0, %v2500
    %v2502 = vmul.f32 %v2499, %v2501
    %v2503 = vadd.f32 %v2499, %v2502
    %vm2504 = vweird.f32 %v2493
    %vm2505 = vweird.f32 %v2499
    %vm2506 = vmor %vm2504, %vm2505
    %v2507 = vsel %vm2506, %v2499, %v2503
    %v2508 = vand.u32 2147483647, %v2493
    %vm2509 = vcmp.eq.f32.partialorder %v2508, 8.507059e+37
    %v2510 = vand.u32 %v2493, 2147483648
    %v2511 = vor.u32 1.1754944e-38, %v2510
    %v2512 = vsel %vm2509, %v2511, %v2507
    %v2513 = vmul.f32 1.0, %v2512
    %v2514 = vrcp.pop %v2494
    %v2515 = vmul.f32 %v2494, %v2514
    %v2516 = vsub.f32 1.0, %v2515
    %v2517 = vmul.f32 %v2514, %v2516
    %v2518 = vadd.f32 %v2514, %v2517
    %vm2519 = vweird.f32 %v2494
    %vm2520 = vweird.f32 %v2514
    %vm2521 = vmor %vm2519, %vm2520
    %v2522 = vsel %vm2521, %v2514, %v2518
    %v2523 = vand.u32 2147483647, %v2494
    %vm2524 = vcmp.eq.f32.partialorder %v2523, 8.507059e+37
    %v2525 = vand.u32 %v2494, 2147483648
    %v2526 = vor.u32 1.1754944e-38, %v2525
    %v2527 = vsel %vm2524, %v2526, %v2522
    %v2528 = vmul.f32 1.0, %v2527
    %v2529 = vrcp.pop %v2495
    %v2530 = vmul.f32 %v2495, %v2529
    %v2531 = vsub.f32 1.0, %v2530
    %v2532 = vmul.f32 %v2529, %v2531
    %v2533 = vadd.f32 %v2529, %v2532
    %vm2534 = vweird.f32 %v2495
    %vm2535 = vweird.f32 %v2529
    %vm2536 = vmor %vm2534, %vm2535
    %v2537 = vsel %vm2536, %v2529, %v2533
    %v2538 = vand.u32 2147483647, %v2495
    %vm2539 = vcmp.eq.f32.partialorder %v2538, 8.507059e+37
    %v2540 = vand.u32 %v2495, 2147483648
    %v2541 = vor.u32 1.1754944e-38, %v2540
    %v2542 = vsel %vm2539, %v2541, %v2537
    %v2543 = vmul.f32 1.0, %v2542
    %v2544 = vrcp.pop %v2496
    %v2545 = vmul.f32 %v2496, %v2544
    %v2546 = vsub.f32 1.0, %v2545
    %v2547 = vmul.f32 %v2544, %v2546
    %v2548 = vadd.f32 %v2544, %v2547
    %vm2549 = vweird.f32 %v2496
    %vm2550 = vweird.f32 %v2544
    %vm2551 = vmor %vm2549, %vm2550
    %v2552 = vsel %vm2551, %v2544, %v2548
    %v2553 = vand.u32 2147483647, %v2496
    %vm2554 = vcmp.eq.f32.partialorder %v2553, 8.507059e+37
    %v2555 = vand.u32 %v2496, 2147483648
    %v2556 = vor.u32 1.1754944e-38, %v2555
    %v2557 = vsel %vm2554, %v2556, %v2552
    %v2558 = vmul.f32 1.0, %v2557
    %v2559 = vrcp.pop %v2497
    %v2560 = vmul.f32 %v2497, %v2559
    %v2561 = vsub.f32 1.0, %v2560
    %v2562 = vmul.f32 %v2559, %v2561
    %v2563 = vadd.f32 %v2559, %v2562
    %vm2564 = vweird.f32 %v2497
    %vm2565 = vweird.f32 %v2559
    %vm2566 = vmor %vm2564, %vm2565
    %v2567 = vsel %vm2566, %v2559, %v2563
    %v2568 = vand.u32 2147483647, %v2497
    %vm2569 = vcmp.eq.f32.partialorder %v2568, 8.507059e+37
    %v2570 = vand.u32 %v2497, 2147483648
    %v2571 = vor.u32 1.1754944e-38, %v2570
    %v2572 = vsel %vm2569, %v2571, %v2567
    %v2573 = vmul.f32 1.0, %v2572
    %v2574 = vrcp.pop %v2498
    %v2575 = vmul.f32 %v2498, %v2574
    %v2576 = vsub.f32 1.0, %v2575
    %v2577 = vmul.f32 %v2574, %v2576
    %v2578 = vadd.f32 %v2574, %v2577
    %vm2579 = vweird.f32 %v2498
    %vm2580 = vweird.f32 %v2574
    %vm2581 = vmor %vm2579, %vm2580
    %v2582 = vsel %vm2581, %v2574, %v2578
    %v2583 = vand.u32 2147483647, %v2498
    %vm2584 = vcmp.eq.f32.partialorder %v2583, 8.507059e+37
    %v2585 = vand.u32 %v2498, 2147483648
    %v2586 = vor.u32 1.1754944e-38, %v2585
    %v2587 = vsel %vm2584, %v2586, %v2582
    %v2588 = vmul.f32 1.0, %v2587
    %v2589 = vtanh.pop %v2446
    %v2590 = vtanh.pop %v2472
    %v2591 = vmul.f32 %v2528, %v2257
    %v2592 = vmul.f32 %v2513, %v2589
    %v2593 = vadd.f32 %v2591, %v2592
    %v2594 = vtanh.pop %v2593
    %v2595 = vmul.f32 %v2543, %v2594
    %v2596 = vmul.f32 %v2573, %v2262
    %v2597 = vmul.f32 %v2558, %v2590
    %v2598 = vadd.f32 %v2596, %v2597
    %v2599 = vtanh.pop %v2598
    %v2600 = vmul.f32 %v2588, %v2599
    %v2601 = vpack.c.bf16 %v2600, %v2600
    %v2602 = vpack.c.bf16 %v2595, %v2595
    %2603 = vmatpush.bf16.msra.mxu0 %v1059
    %2604 = vmatpush.bf16.msra.mxu0 %v1051
    %2605 = vmatpush.bf16.msra.mxu0 %v1043
    %2606 = vmatpush.bf16.msra.mxu0 %v1035
    %2607 = vmatpush.bf16.msra.mxu0 %v1027
    %2608 = vmatpush.bf16.msra.mxu0 %v1019
    %2609 = vmatpush.bf16.msra.mxu0 %v1011
    %2610 = vmatpush.bf16.msra.mxu0 %v1003
    %2611 = vmatmul.bf16.gmra.mxu0 %v2601
    %v2612 = vpop.f32.mrf.mxu0
    %v2613 = vadd.f32 %v191, %v2612
    %v2614 = vpop.f32.mrf.mxu0
    %2615 = vdwg.mxu0
    %2616 = vmatpush.bf16.msra.mxu0 %v1123
    %2617 = vmatpush.bf16.msra.mxu0 %v1115
    %2618 = vmatpush.bf16.msra.mxu0 %v1107
    %2619 = vmatpush.bf16.msra.mxu0 %v1099
    %2620 = vmatpush.bf16.msra.mxu0 %v1091
    %2621 = vmatpush.bf16.msra.mxu0 %v1083
    %2622 = vmatpush.bf16.msra.mxu0 %v1075
    %2623 = vmatpush.bf16.msra.mxu0 %v1067
    %2624 = vmatmul.bf16.gmra.mxu0 %v2602
    %v2625 = vpop.f32.mrf.mxu0
    %v2626 = vadd.f32 %v2613, %v2625
    %v2627 = vpop.f32.mrf.mxu0
    %2628 = vdwg.mxu0
    %2629 = vmatpush.bf16.msra.mxu0 %v1060
    %2630 = vmatpush.bf16.msra.mxu0 %v1052
    %2631 = vmatpush.bf16.msra.mxu0 %v1044
    %2632 = vmatpush.bf16.msra.mxu0 %v1036
    %2633 = vmatpush.bf16.msra.mxu0 %v1028
    %2634 = vmatpush.bf16.msra.mxu0 %v1020
    %2635 = vmatpush.bf16.msra.mxu0 %v1012
    %2636 = vmatpush.bf16.msra.mxu0 %v1004
    %2637 = vmatmul.bf16.gmra.mxu0 %v2601
    %v2638 = vpop.f32.mrf.mxu0
    %v2639 = vadd.f32 %v223, %v2638
    %v2640 = vpop.f32.mrf.mxu0
    %2641 = vdwg.mxu0
    %2642 = vmatpush.bf16.msra.mxu0 %v1124
    %2643 = vmatpush.bf16.msra.mxu0 %v1116
    %2644 = vmatpush.bf16.msra.mxu0 %v1108
    %2645 = vmatpush.bf16.msra.mxu0 %v1100
    %2646 = vmatpush.bf16.msra.mxu0 %v1092
    %2647 = vmatpush.bf16.msra.mxu0 %v1084
    %2648 = vmatpush.bf16.msra.mxu0 %v1076
    %2649 = vmatpush.bf16.msra.mxu0 %v1068
    %2650 = vmatmul.bf16.gmra.mxu0 %v2602
    %v2651 = vpop.f32.mrf.mxu0
    %v2652 = vadd.f32 %v2639, %v2651
    %v2653 = vpop.f32.mrf.mxu0
    %2654 = vdwg.mxu0
    %2655 = vmatpush.bf16.msra.mxu0 %v1061
    %2656 = vmatpush.bf16.msra.mxu0 %v1053
    %2657 = vmatpush.bf16.msra.mxu0 %v1045
    %2658 = vmatpush.bf16.msra.mxu0 %v1037
    %2659 = vmatpush.bf16.msra.mxu0 %v1029
    %2660 = vmatpush.bf16.msra.mxu0 %v1021
    %2661 = vmatpush.bf16.msra.mxu0 %v1013
    %2662 = vmatpush.bf16.msra.mxu0 %v1005
    %2663 = vmatmul.bf16.gmra.mxu0 %v2601
    %v2664 = vpop.f32.mrf.mxu0
    %v2665 = vadd.f32 %v255, %v2664
    %v2666 = vpop.f32.mrf.mxu0
    %2667 = vdwg.mxu0
    %2668 = vmatpush.bf16.msra.mxu0 %v1125
    %2669 = vmatpush.bf16.msra.mxu0 %v1117
    %2670 = vmatpush.bf16.msra.mxu0 %v1109
    %2671 = vmatpush.bf16.msra.mxu0 %v1101
    %2672 = vmatpush.bf16.msra.mxu0 %v1093
    %2673 = vmatpush.bf16.msra.mxu0 %v1085
    %2674 = vmatpush.bf16.msra.mxu0 %v1077
    %2675 = vmatpush.bf16.msra.mxu0 %v1069
    %2676 = vmatmul.bf16.gmra.mxu0 %v2602
    %v2677 = vpop.f32.mrf.mxu0
    %v2678 = vadd.f32 %v2665, %v2677
    %v2679 = vpop.f32.mrf.mxu0
    %2680 = vdwg.mxu0
    %2681 = vmatpush.bf16.msra.mxu0 %v1062
    %2682 = vmatpush.bf16.msra.mxu0 %v1054
    %2683 = vmatpush.bf16.msra.mxu0 %v1046
    %2684 = vmatpush.bf16.msra.mxu0 %v1038
    %2685 = vmatpush.bf16.msra.mxu0 %v1030
    %2686 = vmatpush.bf16.msra.mxu0 %v1022
    %2687 = vmatpush.bf16.msra.mxu0 %v1014
    %2688 = vmatpush.bf16.msra.mxu0 %v1006
    %2689 = vmatmul.bf16.gmra.mxu0 %v2601
    %v2690 = vpop.f32.mrf.mxu0
    %v2691 = vadd.f32 %v288, %v2690
    %v2692 = vpop.f32.mrf.mxu0
    %2693 = vdwg.mxu0
    %2694 = vmatpush.bf16.msra.mxu0 %v1126
    %2695 = vmatpush.bf16.msra.mxu0 %v1118
    %2696 = vmatpush.bf16.msra.mxu0 %v1110
    %2697 = vmatpush.bf16.msra.mxu0 %v1102
    %2698 = vmatpush.bf16.msra.mxu0 %v1094
    %2699 = vmatpush.bf16.msra.mxu0 %v1086
    %2700 = vmatpush.bf16.msra.mxu0 %v1078
    %2701 = vmatpush.bf16.msra.mxu0 %v1070
    %2702 = vmatmul.bf16.gmra.mxu0 %v2602
    %v2703 = vpop.f32.mrf.mxu0
    %v2704 = vadd.f32 %v2691, %v2703
    %v2705 = vpop.f32.mrf.mxu0
    %2706 = vdwg.mxu0
    %2707 = vmatpush.bf16.msra.mxu0 %v1063
    %2708 = vmatpush.bf16.msra.mxu0 %v1055
    %2709 = vmatpush.bf16.msra.mxu0 %v1047
    %2710 = vmatpush.bf16.msra.mxu0 %v1039
    %2711 = vmatpush.bf16.msra.mxu0 %v1031
    %2712 = vmatpush.bf16.msra.mxu0 %v1023
    %2713 = vmatpush.bf16.msra.mxu0 %v1015
    %2714 = vmatpush.bf16.msra.mxu0 %v1007
    %2715 = vmatmul.bf16.gmra.mxu0 %v2601
    %v2716 = vpop.f32.mrf.mxu0
    %v2717 = vadd.f32 %v320, %v2716
    %v2718 = vpop.f32.mrf.mxu0
    %2719 = vdwg.mxu0
    %2720 = vmatpush.bf16.msra.mxu0 %v1127
    %2721 = vmatpush.bf16.msra.mxu0 %v1119
    %2722 = vmatpush.bf16.msra.mxu0 %v1111
    %2723 = vmatpush.bf16.msra.mxu0 %v1103
    %2724 = vmatpush.bf16.msra.mxu0 %v1095
    %2725 = vmatpush.bf16.msra.mxu0 %v1087
    %2726 = vmatpush.bf16.msra.mxu0 %v1079
    %2727 = vmatpush.bf16.msra.mxu0 %v1071
    %2728 = vmatmul.bf16.gmra.mxu0 %v2602
    %v2729 = vpop.f32.mrf.mxu0
    %v2730 = vadd.f32 %v2717, %v2729
    %v2731 = vpop.f32.mrf.mxu0
    %2732 = vdwg.mxu0
    %2733 = vmatpush.bf16.msra.mxu0 %v1064
    %2734 = vmatpush.bf16.msra.mxu0 %v1056
    %2735 = vmatpush.bf16.msra.mxu0 %v1048
    %2736 = vmatpush.bf16.msra.mxu0 %v1040
    %2737 = vmatpush.bf16.msra.mxu0 %v1032
    %2738 = vmatpush.bf16.msra.mxu0 %v1024
    %2739 = vmatpush.bf16.msra.mxu0 %v1016
    %2740 = vmatpush.bf16.msra.mxu0 %v1008
    %2741 = vmatmul.bf16.gmra.mxu0 %v2601
    %v2742 = vpop.f32.mrf.mxu0
    %v2743 = vadd.f32 %v352, %v2742
    %v2744 = vpop.f32.mrf.mxu0
    %2745 = vdwg.mxu0
    %2746 = vmatpush.bf16.msra.mxu0 %v1128
    %2747 = vmatpush.bf16.msra.mxu0 %v1120
    %2748 = vmatpush.bf16.msra.mxu0 %v1112
    %2749 = vmatpush.bf16.msra.mxu0 %v1104
    %2750 = vmatpush.bf16.msra.mxu0 %v1096
    %2751 = vmatpush.bf16.msra.mxu0 %v1088
    %2752 = vmatpush.bf16.msra.mxu0 %v1080
    %2753 = vmatpush.bf16.msra.mxu0 %v1072
    %2754 = vmatmul.bf16.gmra.mxu0 %v2602
    %v2755 = vpop.f32.mrf.mxu0
    %v2756 = vadd.f32 %v2743, %v2755
    %v2757 = vpop.f32.mrf.mxu0
    %2758 = vdwg.mxu0
    %2759 = vmatpush.bf16.msra.mxu0 %v1065
    %2760 = vmatpush.bf16.msra.mxu0 %v1057
    %2761 = vmatpush.bf16.msra.mxu0 %v1049
    %2762 = vmatpush.bf16.msra.mxu0 %v1041
    %2763 = vmatpush.bf16.msra.mxu0 %v1033
    %2764 = vmatpush.bf16.msra.mxu0 %v1025
    %2765 = vmatpush.bf16.msra.mxu0 %v1017
    %2766 = vmatpush.bf16.msra.mxu0 %v1009
    %2767 = vmatmul.bf16.gmra.mxu0 %v2601
    %v2768 = vpop.f32.mrf.mxu0
    %v2769 = vadd.f32 %v383, %v2768
    %v2770 = vpop.f32.mrf.mxu0
    %2771 = vdwg.mxu0
    %2772 = vmatpush.bf16.msra.mxu0 %v1129
    %2773 = vmatpush.bf16.msra.mxu0 %v1121
    %2774 = vmatpush.bf16.msra.mxu0 %v1113
    %2775 = vmatpush.bf16.msra.mxu0 %v1105
    %2776 = vmatpush.bf16.msra.mxu0 %v1097
    %2777 = vmatpush.bf16.msra.mxu0 %v1089
    %2778 = vmatpush.bf16.msra.mxu0 %v1081
    %2779 = vmatpush.bf16.msra.mxu0 %v1073
    %2780 = vmatmul.bf16.gmra.mxu0 %v2602
    %v2781 = vpop.f32.mrf.mxu0
    %v2782 = vadd.f32 %v2769, %v2781
    %v2783 = vpop.f32.mrf.mxu0
    %2784 = vdwg.mxu0
    %2785 = vmatpush.bf16.msra.mxu0 %v1066
    %2786 = vmatpush.bf16.msra.mxu0 %v1058
    %2787 = vmatpush.bf16.msra.mxu0 %v1050
    %2788 = vmatpush.bf16.msra.mxu0 %v1042
    %2789 = vmatpush.bf16.msra.mxu0 %v1034
    %2790 = vmatpush.bf16.msra.mxu0 %v1026
    %2791 = vmatpush.bf16.msra.mxu0 %v1018
    %2792 = vmatpush.bf16.msra.mxu0 %v1010
    %2793 = vmatmul.bf16.gmra.mxu0 %v2601
    %v2794 = vpop.f32.mrf.mxu0
    %v2795 = vadd.f32 %v416, %v2794
    %v2796 = vpop.f32.mrf.mxu0
    %2797 = vdwg.mxu0
    %2798 = vmatpush.bf16.msra.mxu0 %v1130
    %2799 = vmatpush.bf16.msra.mxu0 %v1122
    %2800 = vmatpush.bf16.msra.mxu0 %v1114
    %2801 = vmatpush.bf16.msra.mxu0 %v1106
    %2802 = vmatpush.bf16.msra.mxu0 %v1098
    %2803 = vmatpush.bf16.msra.mxu0 %v1090
    %2804 = vmatpush.bf16.msra.mxu0 %v1082
    %2805 = vmatpush.bf16.msra.mxu0 %v1074
    %2806 = vmatmul.bf16.gmra.mxu0 %v2602
    %v2807 = vpop.f32.mrf.mxu0
    %v2808 = vadd.f32 %v2795, %v2807
    %v2809 = vpop.f32.mrf.mxu0
    %2810 = vdwg.mxu0
    %v2811 = vxor.u32 %v2626, 2147483648
    %v2812 = vxor.u32 %v2652, 2147483648
    %v2813 = vxor.u32 %v2678, 2147483648
    %v2814 = vxor.u32 %v2704, 2147483648
    %v2815 = vxor.u32 %v2730, 2147483648
    %v2816 = vxor.u32 %v2756, 2147483648
    %v2817 = vmul.f32 %v2811, 1.442695
    %v2818 = vpow.pop %v2817
    %v2819 = vmul.f32 %v2812, 1.442695
    %v2820 = vpow.pop %v2819
    %v2821 = vmul.f32 %v2813, 1.442695
    %v2822 = vpow.pop %v2821
    %v2823 = vmul.f32 %v2814, 1.442695
    %v2824 = vpow.pop %v2823
    %v2825 = vmul.f32 %v2815, 1.442695
    %v2826 = vpow.pop %v2825
    %v2827 = vmul.f32 %v2816, 1.442695
    %v2828 = vpow.pop %v2827
    %v2829 = vadd.f32 %v2818, 1.0
    %v2830 = vadd.f32 %v2820, 1.0
    %v2831 = vadd.f32 %v2822, 1.0
    %v2832 = vadd.f32 %v2824, 1.0
    %v2833 = vadd.f32 %v2826, 1.0
    %v2834 = vadd.f32 %v2828, 1.0
    %v2835 = vrcp.pop %v2829
    %v2836 = vmul.f32 %v2829, %v2835
    %v2837 = vsub.f32 1.0, %v2836
    %v2838 = vmul.f32 %v2835, %v2837
    %v2839 = vadd.f32 %v2835, %v2838
    %vm2840 = vweird.f32 %v2829
    %vm2841 = vweird.f32 %v2835
    %vm2842 = vmor %vm2840, %vm2841
    %v2843 = vsel %vm2842, %v2835, %v2839
    %v2844 = vand.u32 2147483647, %v2829
    %vm2845 = vcmp.eq.f32.partialorder %v2844, 8.507059e+37
    %v2846 = vand.u32 %v2829, 2147483648
    %v2847 = vor.u32 1.1754944e-38, %v2846
    %v2848 = vsel %vm2845, %v2847, %v2843
    %v2849 = vmul.f32 1.0, %v2848
    %v2850 = vrcp.pop %v2830
    %v2851 = vmul.f32 %v2830, %v2850
    %v2852 = vsub.f32 1.0, %v2851
    %v2853 = vmul.f32 %v2850, %v2852
    %v2854 = vadd.f32 %v2850, %v2853
    %vm2855 = vweird.f32 %v2830
    %vm2856 = vweird.f32 %v2850
    %vm2857 = vmor %vm2855, %vm2856
    %v2858 = vsel %vm2857, %v2850, %v2854
    %v2859 = vand.u32 2147483647, %v2830
    %vm2860 = vcmp.eq.f32.partialorder %v2859, 8.507059e+37
    %v2861 = vand.u32 %v2830, 2147483648
    %v2862 = vor.u32 1.1754944e-38, %v2861
    %v2863 = vsel %vm2860, %v2862, %v2858
    %v2864 = vmul.f32 1.0, %v2863
    %v2865 = vrcp.pop %v2831
    %v2866 = vmul.f32 %v2831, %v2865
    %v2867 = vsub.f32 1.0, %v2866
    %v2868 = vmul.f32 %v2865, %v2867
    %v2869 = vadd.f32 %v2865, %v2868
    %vm2870 = vweird.f32 %v2831
    %vm2871 = vweird.f32 %v2865
    %vm2872 = vmor %vm2870, %vm2871
    %v2873 = vsel %vm2872, %v2865, %v2869
    %v2874 = vand.u32 2147483647, %v2831
    %vm2875 = vcmp.eq.f32.partialorder %v2874, 8.507059e+37
    %v2876 = vand.u32 %v2831, 2147483648
    %v2877 = vor.u32 1.1754944e-38, %v2876
    %v2878 = vsel %vm2875, %v2877, %v2873
    %v2879 = vmul.f32 1.0, %v2878
    %v2880 = vrcp.pop %v2832
    %v2881 = vmul.f32 %v2832, %v2880
    %v2882 = vsub.f32 1.0, %v2881
    %v2883 = vmul.f32 %v2880, %v2882
    %v2884 = vadd.f32 %v2880, %v2883
    %vm2885 = vweird.f32 %v2832
    %vm2886 = vweird.f32 %v2880
    %vm2887 = vmor %vm2885, %vm2886
    %v2888 = vsel %vm2887, %v2880, %v2884
    %v2889 = vand.u32 2147483647, %v2832
    %vm2890 = vcmp.eq.f32.partialorder %v2889, 8.507059e+37
    %v2891 = vand.u32 %v2832, 2147483648
    %v2892 = vor.u32 1.1754944e-38, %v2891
    %v2893 = vsel %vm2890, %v2892, %v2888
    %v2894 = vmul.f32 1.0, %v2893
    %v2895 = vrcp.pop %v2833
    %v2896 = vmul.f32 %v2833, %v2895
    %v2897 = vsub.f32 1.0, %v2896
    %v2898 = vmul.f32 %v2895, %v2897
    %v2899 = vadd.f32 %v2895, %v2898
    %vm2900 = vweird.f32 %v2833
    %vm2901 = vweird.f32 %v2895
    %vm2902 = vmor %vm2900, %vm2901
    %v2903 = vsel %vm2902, %v2895, %v2899
    %v2904 = vand.u32 2147483647, %v2833
    %vm2905 = vcmp.eq.f32.partialorder %v2904, 8.507059e+37
    %v2906 = vand.u32 %v2833, 2147483648
    %v2907 = vor.u32 1.1754944e-38, %v2906
    %v2908 = vsel %vm2905, %v2907, %v2903
    %v2909 = vmul.f32 1.0, %v2908
    %v2910 = vrcp.pop %v2834
    %v2911 = vmul.f32 %v2834, %v2910
    %v2912 = vsub.f32 1.0, %v2911
    %v2913 = vmul.f32 %v2910, %v2912
    %v2914 = vadd.f32 %v2910, %v2913
    %vm2915 = vweird.f32 %v2834
    %vm2916 = vweird.f32 %v2910
    %vm2917 = vmor %vm2915, %vm2916
    %v2918 = vsel %vm2917, %v2910, %v2914
    %v2919 = vand.u32 2147483647, %v2834
    %vm2920 = vcmp.eq.f32.partialorder %v2919, 8.507059e+37
    %v2921 = vand.u32 %v2834, 2147483648
    %v2922 = vor.u32 1.1754944e-38, %v2921
    %v2923 = vsel %vm2920, %v2922, %v2918
    %v2924 = vmul.f32 1.0, %v2923
    %v2925 = vtanh.pop %v2782
    %v2926 = vtanh.pop %v2808
    %v2927 = vmul.f32 %v2864, %v2593
    %v2928 = vmul.f32 %v2849, %v2925
    %v2929 = vadd.f32 %v2927, %v2928
    %v2930 = vtanh.pop %v2929
    %v2931 = vmul.f32 %v2879, %v2930
    %v2932 = vmul.f32 %v2909, %v2598
    %v2933 = vmul.f32 %v2894, %v2926
    %v2934 = vadd.f32 %v2932, %v2933
    %v2935 = vtanh.pop %v2934
    %v2936 = vmul.f32 %v2924, %v2935
    %v2937 = vpack.c.bf16 %v2936, %v2936
    %v2938 = vpack.c.bf16 %v2931, %v2931
    %2939 = vmatpush.bf16.msra.mxu0 %v1059
    %2940 = vmatpush.bf16.msra.mxu0 %v1051
    %2941 = vmatpush.bf16.msra.mxu0 %v1043
    %2942 = vmatpush.bf16.msra.mxu0 %v1035
    %2943 = vmatpush.bf16.msra.mxu0 %v1027
    %2944 = vmatpush.bf16.msra.mxu0 %v1019
    %2945 = vmatpush.bf16.msra.mxu0 %v1011
    %2946 = vmatpush.bf16.msra.mxu0 %v1003
    %2947 = vmatmul.bf16.gmra.mxu0 %v2937
    %v2948 = vpop.f32.mrf.mxu0
    %v2949 = vadd.f32 %v194, %v2948
    %v2950 = vpop.f32.mrf.mxu0
    %2951 = vdwg.mxu0
    %2952 = vmatpush.bf16.msra.mxu0 %v1123
    %2953 = vmatpush.bf16.msra.mxu0 %v1115
    %2954 = vmatpush.bf16.msra.mxu0 %v1107
    %2955 = vmatpush.bf16.msra.mxu0 %v1099
    %2956 = vmatpush.bf16.msra.mxu0 %v1091
    %2957 = vmatpush.bf16.msra.mxu0 %v1083
    %2958 = vmatpush.bf16.msra.mxu0 %v1075
    %2959 = vmatpush.bf16.msra.mxu0 %v1067
    %2960 = vmatmul.bf16.gmra.mxu0 %v2938
    %v2961 = vpop.f32.mrf.mxu0
    %v2962 = vadd.f32 %v2949, %v2961
    %v2963 = vpop.f32.mrf.mxu0
    %2964 = vdwg.mxu0
    %2965 = vmatpush.bf16.msra.mxu0 %v1060
    %2966 = vmatpush.bf16.msra.mxu0 %v1052
    %2967 = vmatpush.bf16.msra.mxu0 %v1044
    %2968 = vmatpush.bf16.msra.mxu0 %v1036
    %2969 = vmatpush.bf16.msra.mxu0 %v1028
    %2970 = vmatpush.bf16.msra.mxu0 %v1020
    %2971 = vmatpush.bf16.msra.mxu0 %v1012
    %2972 = vmatpush.bf16.msra.mxu0 %v1004
    %2973 = vmatmul.bf16.gmra.mxu0 %v2937
    %v2974 = vpop.f32.mrf.mxu0
    %v2975 = vadd.f32 %v226, %v2974
    %v2976 = vpop.f32.mrf.mxu0
    %2977 = vdwg.mxu0
    %2978 = vmatpush.bf16.msra.mxu0 %v1124
    %2979 = vmatpush.bf16.msra.mxu0 %v1116
    %2980 = vmatpush.bf16.msra.mxu0 %v1108
    %2981 = vmatpush.bf16.msra.mxu0 %v1100
    %2982 = vmatpush.bf16.msra.mxu0 %v1092
    %2983 = vmatpush.bf16.msra.mxu0 %v1084
    %2984 = vmatpush.bf16.msra.mxu0 %v1076
    %2985 = vmatpush.bf16.msra.mxu0 %v1068
    %2986 = vmatmul.bf16.gmra.mxu0 %v2938
    %v2987 = vpop.f32.mrf.mxu0
    %v2988 = vadd.f32 %v2975, %v2987
    %v2989 = vpop.f32.mrf.mxu0
    %2990 = vdwg.mxu0
    %2991 = vmatpush.bf16.msra.mxu0 %v1061
    %2992 = vmatpush.bf16.msra.mxu0 %v1053
    %2993 = vmatpush.bf16.msra.mxu0 %v1045
    %2994 = vmatpush.bf16.msra.mxu0 %v1037
    %2995 = vmatpush.bf16.msra.mxu0 %v1029
    %2996 = vmatpush.bf16.msra.mxu0 %v1021
    %2997 = vmatpush.bf16.msra.mxu0 %v1013
    %2998 = vmatpush.bf16.msra.mxu0 %v1005
    %2999 = vmatmul.bf16.gmra.mxu0 %v2937
    %v3000 = vpop.f32.mrf.mxu0
    %v3001 = vadd.f32 %v258, %v3000
    %v3002 = vpop.f32.mrf.mxu0
    %3003 = vdwg.mxu0
    %3004 = vmatpush.bf16.msra.mxu0 %v1125
    %3005 = vmatpush.bf16.msra.mxu0 %v1117
    %3006 = vmatpush.bf16.msra.mxu0 %v1109
    %3007 = vmatpush.bf16.msra.mxu0 %v1101
    %3008 = vmatpush.bf16.msra.mxu0 %v1093
    %3009 = vmatpush.bf16.msra.mxu0 %v1085
    %3010 = vmatpush.bf16.msra.mxu0 %v1077
    %3011 = vmatpush.bf16.msra.mxu0 %v1069
    %3012 = vmatmul.bf16.gmra.mxu0 %v2938
    %v3013 = vpop.f32.mrf.mxu0
    %v3014 = vadd.f32 %v3001, %v3013
    %v3015 = vpop.f32.mrf.mxu0
    %3016 = vdwg.mxu0
    %3017 = vmatpush.bf16.msra.mxu0 %v1062
    %3018 = vmatpush.bf16.msra.mxu0 %v1054
    %3019 = vmatpush.bf16.msra.mxu0 %v1046
    %3020 = vmatpush.bf16.msra.mxu0 %v1038
    %3021 = vmatpush.bf16.msra.mxu0 %v1030
    %3022 = vmatpush.bf16.msra.mxu0 %v1022
    %3023 = vmatpush.bf16.msra.mxu0 %v1014
    %3024 = vmatpush.bf16.msra.mxu0 %v1006
    %3025 = vmatmul.bf16.gmra.mxu0 %v2937
    %v3026 = vpop.f32.mrf.mxu0
    %v3027 = vadd.f32 %v291, %v3026
    %v3028 = vpop.f32.mrf.mxu0
    %3029 = vdwg.mxu0
    %3030 = vmatpush.bf16.msra.mxu0 %v1126
    %3031 = vmatpush.bf16.msra.mxu0 %v1118
    %3032 = vmatpush.bf16.msra.mxu0 %v1110
    %3033 = vmatpush.bf16.msra.mxu0 %v1102
    %3034 = vmatpush.bf16.msra.mxu0 %v1094
    %3035 = vmatpush.bf16.msra.mxu0 %v1086
    %3036 = vmatpush.bf16.msra.mxu0 %v1078
    %3037 = vmatpush.bf16.msra.mxu0 %v1070
    %3038 = vmatmul.bf16.gmra.mxu0 %v2938
    %v3039 = vpop.f32.mrf.mxu0
    %v3040 = vadd.f32 %v3027, %v3039
    %v3041 = vpop.f32.mrf.mxu0
    %3042 = vdwg.mxu0
    %3043 = vmatpush.bf16.msra.mxu0 %v1063
    %3044 = vmatpush.bf16.msra.mxu0 %v1055
    %3045 = vmatpush.bf16.msra.mxu0 %v1047
    %3046 = vmatpush.bf16.msra.mxu0 %v1039
    %3047 = vmatpush.bf16.msra.mxu0 %v1031
    %3048 = vmatpush.bf16.msra.mxu0 %v1023
    %3049 = vmatpush.bf16.msra.mxu0 %v1015
    %3050 = vmatpush.bf16.msra.mxu0 %v1007
    %3051 = vmatmul.bf16.gmra.mxu0 %v2937
    %v3052 = vpop.f32.mrf.mxu0
    %v3053 = vadd.f32 %v323, %v3052
    %v3054 = vpop.f32.mrf.mxu0
    %3055 = vdwg.mxu0
    %3056 = vmatpush.bf16.msra.mxu0 %v1127
    %3057 = vmatpush.bf16.msra.mxu0 %v1119
    %3058 = vmatpush.bf16.msra.mxu0 %v1111
    %3059 = vmatpush.bf16.msra.mxu0 %v1103
    %3060 = vmatpush.bf16.msra.mxu0 %v1095
    %3061 = vmatpush.bf16.msra.mxu0 %v1087
    %3062 = vmatpush.bf16.msra.mxu0 %v1079
    %3063 = vmatpush.bf16.msra.mxu0 %v1071
    %3064 = vmatmul.bf16.gmra.mxu0 %v2938
    %v3065 = vpop.f32.mrf.mxu0
    %v3066 = vadd.f32 %v3053, %v3065
    %v3067 = vpop.f32.mrf.mxu0
    %3068 = vdwg.mxu0
    %3069 = vmatpush.bf16.msra.mxu0 %v1064
    %3070 = vmatpush.bf16.msra.mxu0 %v1056
    %3071 = vmatpush.bf16.msra.mxu0 %v1048
    %3072 = vmatpush.bf16.msra.mxu0 %v1040
    %3073 = vmatpush.bf16.msra.mxu0 %v1032
    %3074 = vmatpush.bf16.msra.mxu0 %v1024
    %3075 = vmatpush.bf16.msra.mxu0 %v1016
    %3076 = vmatpush.bf16.msra.mxu0 %v1008
    %3077 = vmatmul.bf16.gmra.mxu0 %v2937
    %v3078 = vpop.f32.mrf.mxu0
    %v3079 = vadd.f32 %v355, %v3078
    %v3080 = vpop.f32.mrf.mxu0
    %3081 = vdwg.mxu0
    %3082 = vmatpush.bf16.msra.mxu0 %v1128
    %3083 = vmatpush.bf16.msra.mxu0 %v1120
    %3084 = vmatpush.bf16.msra.mxu0 %v1112
    %3085 = vmatpush.bf16.msra.mxu0 %v1104
    %3086 = vmatpush.bf16.msra.mxu0 %v1096
    %3087 = vmatpush.bf16.msra.mxu0 %v1088
    %3088 = vmatpush.bf16.msra.mxu0 %v1080
    %3089 = vmatpush.bf16.msra.mxu0 %v1072
    %3090 = vmatmul.bf16.gmra.mxu0 %v2938
    %v3091 = vpop.f32.mrf.mxu0
    %v3092 = vadd.f32 %v3079, %v3091
    %v3093 = vpop.f32.mrf.mxu0
    %3094 = vdwg.mxu0
    %3095 = vmatpush.bf16.msra.mxu0 %v1065
    %3096 = vmatpush.bf16.msra.mxu0 %v1057
    %3097 = vmatpush.bf16.msra.mxu0 %v1049
    %3098 = vmatpush.bf16.msra.mxu0 %v1041
    %3099 = vmatpush.bf16.msra.mxu0 %v1033
    %3100 = vmatpush.bf16.msra.mxu0 %v1025
    %3101 = vmatpush.bf16.msra.mxu0 %v1017
    %3102 = vmatpush.bf16.msra.mxu0 %v1009
    %3103 = vmatmul.bf16.gmra.mxu0 %v2937
    %v3104 = vpop.f32.mrf.mxu0
    %v3105 = vadd.f32 %v386, %v3104
    %v3106 = vpop.f32.mrf.mxu0
    %3107 = vdwg.mxu0
    %3108 = vmatpush.bf16.msra.mxu0 %v1129
    %3109 = vmatpush.bf16.msra.mxu0 %v1121
    %3110 = vmatpush.bf16.msra.mxu0 %v1113
    %3111 = vmatpush.bf16.msra.mxu0 %v1105
    %3112 = vmatpush.bf16.msra.mxu0 %v1097
    %3113 = vmatpush.bf16.msra.mxu0 %v1089
    %3114 = vmatpush.bf16.msra.mxu0 %v1081
    %3115 = vmatpush.bf16.msra.mxu0 %v1073
    %3116 = vmatmul.bf16.gmra.mxu0 %v2938
    %v3117 = vpop.f32.mrf.mxu0
    %v3118 = vadd.f32 %v3105, %v3117
    %v3119 = vpop.f32.mrf.mxu0
    %3120 = vdwg.mxu0
    %3121 = vmatpush.bf16.msra.mxu0 %v1066
    %3122 = vmatpush.bf16.msra.mxu0 %v1058
    %3123 = vmatpush.bf16.msra.mxu0 %v1050
    %3124 = vmatpush.bf16.msra.mxu0 %v1042
    %3125 = vmatpush.bf16.msra.mxu0 %v1034
    %3126 = vmatpush.bf16.msra.mxu0 %v1026
    %3127 = vmatpush.bf16.msra.mxu0 %v1018
    %3128 = vmatpush.bf16.msra.mxu0 %v1010
    %3129 = vmatmul.bf16.gmra.mxu0 %v2937
    %v3130 = vpop.f32.mrf.mxu0
    %v3131 = vadd.f32 %v419, %v3130
    %v3132 = vpop.f32.mrf.mxu0
    %3133 = vdwg.mxu0
    %3134 = vmatpush.bf16.msra.mxu0 %v1130
    %3135 = vmatpush.bf16.msra.mxu0 %v1122
    %3136 = vmatpush.bf16.msra.mxu0 %v1114
    %3137 = vmatpush.bf16.msra.mxu0 %v1106
    %3138 = vmatpush.bf16.msra.mxu0 %v1098
    %3139 = vmatpush.bf16.msra.mxu0 %v1090
    %3140 = vmatpush.bf16.msra.mxu0 %v1082
    %3141 = vmatpush.bf16.msra.mxu0 %v1074
    %3142 = vmatmul.bf16.gmra.mxu0 %v2938
    %v3143 = vpop.f32.mrf.mxu0
    %v3144 = vadd.f32 %v3131, %v3143
    %v3145 = vpop.f32.mrf.mxu0
    %3146 = vdwg.mxu0
    %v3147 = vxor.u32 %v2962, 2147483648
    %v3148 = vxor.u32 %v2988, 2147483648
    %v3149 = vxor.u32 %v3014, 2147483648
    %v3150 = vxor.u32 %v3040, 2147483648
    %v3151 = vxor.u32 %v3066, 2147483648
    %v3152 = vxor.u32 %v3092, 2147483648
    %v3153 = vmul.f32 %v3147, 1.442695
    %v3154 = vpow.pop %v3153
    %v3155 = vmul.f32 %v3148, 1.442695
    %v3156 = vpow.pop %v3155
    %v3157 = vmul.f32 %v3149, 1.442695
    %v3158 = vpow.pop %v3157
    %v3159 = vmul.f32 %v3150, 1.442695
    %v3160 = vpow.pop %v3159
    %v3161 = vmul.f32 %v3151, 1.442695
    %v3162 = vpow.pop %v3161
    %v3163 = vmul.f32 %v3152, 1.442695
    %v3164 = vpow.pop %v3163
    %v3165 = vadd.f32 %v3154, 1.0
    %v3166 = vadd.f32 %v3156, 1.0
    %v3167 = vadd.f32 %v3158, 1.0
    %v3168 = vadd.f32 %v3160, 1.0
    %v3169 = vadd.f32 %v3162, 1.0
    %v3170 = vadd.f32 %v3164, 1.0
    %v3171 = vrcp.pop %v3165
    %v3172 = vmul.f32 %v3165, %v3171
    %v3173 = vsub.f32 1.0, %v3172
    %v3174 = vmul.f32 %v3171, %v3173
    %v3175 = vadd.f32 %v3171, %v3174
    %vm3176 = vweird.f32 %v3165
    %vm3177 = vweird.f32 %v3171
    %vm3178 = vmor %vm3176, %vm3177
    %v3179 = vsel %vm3178, %v3171, %v3175
    %v3180 = vand.u32 2147483647, %v3165
    %vm3181 = vcmp.eq.f32.partialorder %v3180, 8.507059e+37
    %v3182 = vand.u32 %v3165, 2147483648
    %v3183 = vor.u32 1.1754944e-38, %v3182
    %v3184 = vsel %vm3181, %v3183, %v3179
    %v3185 = vmul.f32 1.0, %v3184
    %v3186 = vrcp.pop %v3166
    %v3187 = vmul.f32 %v3166, %v3186
    %v3188 = vsub.f32 1.0, %v3187
    %v3189 = vmul.f32 %v3186, %v3188
    %v3190 = vadd.f32 %v3186, %v3189
    %vm3191 = vweird.f32 %v3166
    %vm3192 = vweird.f32 %v3186
    %vm3193 = vmor %vm3191, %vm3192
    %v3194 = vsel %vm3193, %v3186, %v3190
    %v3195 = vand.u32 2147483647, %v3166
    %vm3196 = vcmp.eq.f32.partialorder %v3195, 8.507059e+37
    %v3197 = vand.u32 %v3166, 2147483648
    %v3198 = vor.u32 1.1754944e-38, %v3197
    %v3199 = vsel %vm3196, %v3198, %v3194
    %v3200 = vmul.f32 1.0, %v3199
    %v3201 = vrcp.pop %v3167
    %v3202 = vmul.f32 %v3167, %v3201
    %v3203 = vsub.f32 1.0, %v3202
    %v3204 = vmul.f32 %v3201, %v3203
    %v3205 = vadd.f32 %v3201, %v3204
    %vm3206 = vweird.f32 %v3167
    %vm3207 = vweird.f32 %v3201
    %vm3208 = vmor %vm3206, %vm3207
    %v3209 = vsel %vm3208, %v3201, %v3205
    %v3210 = vand.u32 2147483647, %v3167
    %vm3211 = vcmp.eq.f32.partialorder %v3210, 8.507059e+37
    %v3212 = vand.u32 %v3167, 2147483648
    %v3213 = vor.u32 1.1754944e-38, %v3212
    %v3214 = vsel %vm3211, %v3213, %v3209
    %v3215 = vmul.f32 1.0, %v3214
    %v3216 = vrcp.pop %v3168
    %v3217 = vmul.f32 %v3168, %v3216
    %v3218 = vsub.f32 1.0, %v3217
    %v3219 = vmul.f32 %v3216, %v3218
    %v3220 = vadd.f32 %v3216, %v3219
    %vm3221 = vweird.f32 %v3168
    %vm3222 = vweird.f32 %v3216
    %vm3223 = vmor %vm3221, %vm3222
    %v3224 = vsel %vm3223, %v3216, %v3220
    %v3225 = vand.u32 2147483647, %v3168
    %vm3226 = vcmp.eq.f32.partialorder %v3225, 8.507059e+37
    %v3227 = vand.u32 %v3168, 2147483648
    %v3228 = vor.u32 1.1754944e-38, %v3227
    %v3229 = vsel %vm3226, %v3228, %v3224
    %v3230 = vmul.f32 1.0, %v3229
    %v3231 = vrcp.pop %v3169
    %v3232 = vmul.f32 %v3169, %v3231
    %v3233 = vsub.f32 1.0, %v3232
    %v3234 = vmul.f32 %v3231, %v3233
    %v3235 = vadd.f32 %v3231, %v3234
    %vm3236 = vweird.f32 %v3169
    %vm3237 = vweird.f32 %v3231
    %vm3238 = vmor %vm3236, %vm3237
    %v3239 = vsel %vm3238, %v3231, %v3235
    %v3240 = vand.u32 2147483647, %v3169
    %vm3241 = vcmp.eq.f32.partialorder %v3240, 8.507059e+37
    %v3242 = vand.u32 %v3169, 2147483648
    %v3243 = vor.u32 1.1754944e-38, %v3242
    %v3244 = vsel %vm3241, %v3243, %v3239
    %v3245 = vmul.f32 1.0, %v3244
    %v3246 = vrcp.pop %v3170
    %v3247 = vmul.f32 %v3170, %v3246
    %v3248 = vsub.f32 1.0, %v3247
    %v3249 = vmul.f32 %v3246, %v3248
    %v3250 = vadd.f32 %v3246, %v3249
    %vm3251 = vweird.f32 %v3170
    %vm3252 = vweird.f32 %v3246
    %vm3253 = vmor %vm3251, %vm3252
    %v3254 = vsel %vm3253, %v3246, %v3250
    %v3255 = vand.u32 2147483647, %v3170
    %vm3256 = vcmp.eq.f32.partialorder %v3255, 8.507059e+37
    %v3257 = vand.u32 %v3170, 2147483648
    %v3258 = vor.u32 1.1754944e-38, %v3257
    %v3259 = vsel %vm3256, %v3258, %v3254
    %v3260 = vmul.f32 1.0, %v3259
    %v3261 = vtanh.pop %v3118
    %v3262 = vtanh.pop %v3144
    %v3263 = vmul.f32 %v3200, %v2929
    %v3264 = vmul.f32 %v3185, %v3261
    %v3265 = vadd.f32 %v3263, %v3264
    %v3266 = vtanh.pop %v3265
    %v3267 = vmul.f32 %v3215, %v3266
    %v3268 = vmul.f32 %v3245, %v2934
    %v3269 = vmul.f32 %v3230, %v3262
    %v3270 = vadd.f32 %v3268, %v3269
    %v3271 = vtanh.pop %v3270
    %v3272 = vmul.f32 %v3260, %v3271
    %v3273 = vpack.c.bf16 %v3272, %v3272
    %v3274 = vpack.c.bf16 %v3267, %v3267
    %3275 = vmatpush.bf16.msra.mxu0 %v1059
    %3276 = vmatpush.bf16.msra.mxu0 %v1051
    %3277 = vmatpush.bf16.msra.mxu0 %v1043
    %3278 = vmatpush.bf16.msra.mxu0 %v1035
    %3279 = vmatpush.bf16.msra.mxu0 %v1027
    %3280 = vmatpush.bf16.msra.mxu0 %v1019
    %3281 = vmatpush.bf16.msra.mxu0 %v1011
    %3282 = vmatpush.bf16.msra.mxu0 %v1003
    %3283 = vmatmul.bf16.gmra.mxu0 %v3273
    %v3284 = vpop.f32.mrf.mxu0
    %v3285 = vadd.f32 %v196, %v3284
    %v3286 = vpop.f32.mrf.mxu0
    %3287 = vdwg.mxu0
    %3288 = vmatpush.bf16.msra.mxu0 %v1123
    %3289 = vmatpush.bf16.msra.mxu0 %v1115
    %3290 = vmatpush.bf16.msra.mxu0 %v1107
    %3291 = vmatpush.bf16.msra.mxu0 %v1099
    %3292 = vmatpush.bf16.msra.mxu0 %v1091
    %3293 = vmatpush.bf16.msra.mxu0 %v1083
    %3294 = vmatpush.bf16.msra.mxu0 %v1075
    %3295 = vmatpush.bf16.msra.mxu0 %v1067
    %3296 = vmatmul.bf16.gmra.mxu0 %v3274
    %v3297 = vpop.f32.mrf.mxu0
    %v3298 = vadd.f32 %v3285, %v3297
    %v3299 = vpop.f32.mrf.mxu0
    %3300 = vdwg.mxu0
    %3301 = vmatpush.bf16.msra.mxu0 %v1060
    %3302 = vmatpush.bf16.msra.mxu0 %v1052
    %3303 = vmatpush.bf16.msra.mxu0 %v1044
    %3304 = vmatpush.bf16.msra.mxu0 %v1036
    %3305 = vmatpush.bf16.msra.mxu0 %v1028
    %3306 = vmatpush.bf16.msra.mxu0 %v1020
    %3307 = vmatpush.bf16.msra.mxu0 %v1012
    %3308 = vmatpush.bf16.msra.mxu0 %v1004
    %3309 = vmatmul.bf16.gmra.mxu0 %v3273
    %v3310 = vpop.f32.mrf.mxu0
    %v3311 = vadd.f32 %v228, %v3310
    %v3312 = vpop.f32.mrf.mxu0
    %3313 = vdwg.mxu0
    %3314 = vmatpush.bf16.msra.mxu0 %v1124
    %3315 = vmatpush.bf16.msra.mxu0 %v1116
    %3316 = vmatpush.bf16.msra.mxu0 %v1108
    %3317 = vmatpush.bf16.msra.mxu0 %v1100
    %3318 = vmatpush.bf16.msra.mxu0 %v1092
    %3319 = vmatpush.bf16.msra.mxu0 %v1084
    %3320 = vmatpush.bf16.msra.mxu0 %v1076
    %3321 = vmatpush.bf16.msra.mxu0 %v1068
    %3322 = vmatmul.bf16.gmra.mxu0 %v3274
    %v3323 = vpop.f32.mrf.mxu0
    %v3324 = vadd.f32 %v3311, %v3323
    %v3325 = vpop.f32.mrf.mxu0
    %3326 = vdwg.mxu0
    %3327 = vmatpush.bf16.msra.mxu0 %v1061
    %3328 = vmatpush.bf16.msra.mxu0 %v1053
    %3329 = vmatpush.bf16.msra.mxu0 %v1045
    %3330 = vmatpush.bf16.msra.mxu0 %v1037
    %3331 = vmatpush.bf16.msra.mxu0 %v1029
    %3332 = vmatpush.bf16.msra.mxu0 %v1021
    %3333 = vmatpush.bf16.msra.mxu0 %v1013
    %3334 = vmatpush.bf16.msra.mxu0 %v1005
    %3335 = vmatmul.bf16.gmra.mxu0 %v3273
    %v3336 = vpop.f32.mrf.mxu0
    %v3337 = vadd.f32 %v260, %v3336
    %v3338 = vpop.f32.mrf.mxu0
    %3339 = vdwg.mxu0
    %3340 = vmatpush.bf16.msra.mxu0 %v1125
    %3341 = vmatpush.bf16.msra.mxu0 %v1117
    %3342 = vmatpush.bf16.msra.mxu0 %v1109
    %3343 = vmatpush.bf16.msra.mxu0 %v1101
    %3344 = vmatpush.bf16.msra.mxu0 %v1093
    %3345 = vmatpush.bf16.msra.mxu0 %v1085
    %3346 = vmatpush.bf16.msra.mxu0 %v1077
    %3347 = vmatpush.bf16.msra.mxu0 %v1069
    %3348 = vmatmul.bf16.gmra.mxu0 %v3274
    %v3349 = vpop.f32.mrf.mxu0
    %v3350 = vadd.f32 %v3337, %v3349
    %v3351 = vpop.f32.mrf.mxu0
    %3352 = vdwg.mxu0
    %3353 = vmatpush.bf16.msra.mxu0 %v1062
    %3354 = vmatpush.bf16.msra.mxu0 %v1054
    %3355 = vmatpush.bf16.msra.mxu0 %v1046
    %3356 = vmatpush.bf16.msra.mxu0 %v1038
    %3357 = vmatpush.bf16.msra.mxu0 %v1030
    %3358 = vmatpush.bf16.msra.mxu0 %v1022
    %3359 = vmatpush.bf16.msra.mxu0 %v1014
    %3360 = vmatpush.bf16.msra.mxu0 %v1006
    %3361 = vmatmul.bf16.gmra.mxu0 %v3273
    %v3362 = vpop.f32.mrf.mxu0
    %v3363 = vadd.f32 %v293, %v3362
    %v3364 = vpop.f32.mrf.mxu0
    %3365 = vdwg.mxu0
    %3366 = vmatpush.bf16.msra.mxu0 %v1126
    %3367 = vmatpush.bf16.msra.mxu0 %v1118
    %3368 = vmatpush.bf16.msra.mxu0 %v1110
    %3369 = vmatpush.bf16.msra.mxu0 %v1102
    %3370 = vmatpush.bf16.msra.mxu0 %v1094
    %3371 = vmatpush.bf16.msra.mxu0 %v1086
    %3372 = vmatpush.bf16.msra.mxu0 %v1078
    %3373 = vmatpush.bf16.msra.mxu0 %v1070
    %3374 = vmatmul.bf16.gmra.mxu0 %v3274
    %v3375 = vpop.f32.mrf.mxu0
    %v3376 = vadd.f32 %v3363, %v3375
    %v3377 = vpop.f32.mrf.mxu0
    %3378 = vdwg.mxu0
    %3379 = vmatpush.bf16.msra.mxu0 %v1063
    %3380 = vmatpush.bf16.msra.mxu0 %v1055
    %3381 = vmatpush.bf16.msra.mxu0 %v1047
    %3382 = vmatpush.bf16.msra.mxu0 %v1039
    %3383 = vmatpush.bf16.msra.mxu0 %v1031
    %3384 = vmatpush.bf16.msra.mxu0 %v1023
    %3385 = vmatpush.bf16.msra.mxu0 %v1015
    %3386 = vmatpush.bf16.msra.mxu0 %v1007
    %3387 = vmatmul.bf16.gmra.mxu0 %v3273
    %v3388 = vpop.f32.mrf.mxu0
    %v3389 = vadd.f32 %v325, %v3388
    %v3390 = vpop.f32.mrf.mxu0
    %3391 = vdwg.mxu0
    %3392 = vmatpush.bf16.msra.mxu0 %v1127
    %3393 = vmatpush.bf16.msra.mxu0 %v1119
    %3394 = vmatpush.bf16.msra.mxu0 %v1111
    %3395 = vmatpush.bf16.msra.mxu0 %v1103
    %3396 = vmatpush.bf16.msra.mxu0 %v1095
    %3397 = vmatpush.bf16.msra.mxu0 %v1087
    %3398 = vmatpush.bf16.msra.mxu0 %v1079
    %3399 = vmatpush.bf16.msra.mxu0 %v1071
    %3400 = vmatmul.bf16.gmra.mxu0 %v3274
    %v3401 = vpop.f32.mrf.mxu0
    %v3402 = vadd.f32 %v3389, %v3401
    %v3403 = vpop.f32.mrf.mxu0
    %3404 = vdwg.mxu0
    %3405 = vmatpush.bf16.msra.mxu0 %v1064
    %3406 = vmatpush.bf16.msra.mxu0 %v1056
    %3407 = vmatpush.bf16.msra.mxu0 %v1048
    %3408 = vmatpush.bf16.msra.mxu0 %v1040
    %3409 = vmatpush.bf16.msra.mxu0 %v1032
    %3410 = vmatpush.bf16.msra.mxu0 %v1024
    %3411 = vmatpush.bf16.msra.mxu0 %v1016
    %3412 = vmatpush.bf16.msra.mxu0 %v1008
    %3413 = vmatmul.bf16.gmra.mxu0 %v3273
    %v3414 = vpop.f32.mrf.mxu0
    %v3415 = vadd.f32 %v357, %v3414
    %v3416 = vpop.f32.mrf.mxu0
    %3417 = vdwg.mxu0
    %3418 = vmatpush.bf16.msra.mxu0 %v1128
    %3419 = vmatpush.bf16.msra.mxu0 %v1120
    %3420 = vmatpush.bf16.msra.mxu0 %v1112
    %3421 = vmatpush.bf16.msra.mxu0 %v1104
    %3422 = vmatpush.bf16.msra.mxu0 %v1096
    %3423 = vmatpush.bf16.msra.mxu0 %v1088
    %3424 = vmatpush.bf16.msra.mxu0 %v1080
    %3425 = vmatpush.bf16.msra.mxu0 %v1072
    %3426 = vmatmul.bf16.gmra.mxu0 %v3274
    %v3427 = vpop.f32.mrf.mxu0
    %v3428 = vadd.f32 %v3415, %v3427
    %v3429 = vpop.f32.mrf.mxu0
    %3430 = vdwg.mxu0
    %3431 = vmatpush.bf16.msra.mxu0 %v1065
    %3432 = vmatpush.bf16.msra.mxu0 %v1057
    %3433 = vmatpush.bf16.msra.mxu0 %v1049
    %3434 = vmatpush.bf16.msra.mxu0 %v1041
    %3435 = vmatpush.bf16.msra.mxu0 %v1033
    %3436 = vmatpush.bf16.msra.mxu0 %v1025
    %3437 = vmatpush.bf16.msra.mxu0 %v1017
    %3438 = vmatpush.bf16.msra.mxu0 %v1009
    %3439 = vmatmul.bf16.gmra.mxu0 %v3273
    %v3440 = vpop.f32.mrf.mxu0
    %v3441 = vadd.f32 %v388, %v3440
    %v3442 = vpop.f32.mrf.mxu0
    %3443 = vdwg.mxu0
    %3444 = vmatpush.bf16.msra.mxu0 %v1129
    %3445 = vmatpush.bf16.msra.mxu0 %v1121
    %3446 = vmatpush.bf16.msra.mxu0 %v1113
    %3447 = vmatpush.bf16.msra.mxu0 %v1105
    %3448 = vmatpush.bf16.msra.mxu0 %v1097
    %3449 = vmatpush.bf16.msra.mxu0 %v1089
    %3450 = vmatpush.bf16.msra.mxu0 %v1081
    %3451 = vmatpush.bf16.msra.mxu0 %v1073
    %3452 = vmatmul.bf16.gmra.mxu0 %v3274
    %v3453 = vpop.f32.mrf.mxu0
    %v3454 = vadd.f32 %v3441, %v3453
    %v3455 = vpop.f32.mrf.mxu0
    %3456 = vdwg.mxu0
    %3457 = vmatpush.bf16.msra.mxu0 %v1066
    %3458 = vmatpush.bf16.msra.mxu0 %v1058
    %3459 = vmatpush.bf16.msra.mxu0 %v1050
    %3460 = vmatpush.bf16.msra.mxu0 %v1042
    %3461 = vmatpush.bf16.msra.mxu0 %v1034
    %3462 = vmatpush.bf16.msra.mxu0 %v1026
    %3463 = vmatpush.bf16.msra.mxu0 %v1018
    %3464 = vmatpush.bf16.msra.mxu0 %v1010
    %3465 = vmatmul.bf16.gmra.mxu0 %v3273
    %v3466 = vpop.f32.mrf.mxu0
    %v3467 = vadd.f32 %v421, %v3466
    %v3468 = vpop.f32.mrf.mxu0
    %3469 = vdwg.mxu0
    %3470 = vmatpush.bf16.msra.mxu0 %v1130
    %3471 = vmatpush.bf16.msra.mxu0 %v1122
    %3472 = vmatpush.bf16.msra.mxu0 %v1114
    %3473 = vmatpush.bf16.msra.mxu0 %v1106
    %3474 = vmatpush.bf16.msra.mxu0 %v1098
    %3475 = vmatpush.bf16.msra.mxu0 %v1090
    %3476 = vmatpush.bf16.msra.mxu0 %v1082
    %3477 = vmatpush.bf16.msra.mxu0 %v1074
    %3478 = vmatmul.bf16.gmra.mxu0 %v3274
    %v3479 = vpop.f32.mrf.mxu0
    %v3480 = vadd.f32 %v3467, %v3479
    %v3481 = vpop.f32.mrf.mxu0
    %3482 = vdwg.mxu0
    %v3483 = vxor.u32 %v3298, 2147483648
    %v3484 = vxor.u32 %v3324, 2147483648
    %v3485 = vxor.u32 %v3350, 2147483648
    %v3486 = vxor.u32 %v3376, 2147483648
    %v3487 = vxor.u32 %v3402, 2147483648
    %v3488 = vxor.u32 %v3428, 2147483648
    %v3489 = vmul.f32 %v3483, 1.442695
    %v3490 = vpow.pop %v3489
    %v3491 = vmul.f32 %v3484, 1.442695
    %v3492 = vpow.pop %v3491
    %v3493 = vmul.f32 %v3485, 1.442695
    %v3494 = vpow.pop %v3493
    %v3495 = vmul.f32 %v3486, 1.442695
    %v3496 = vpow.pop %v3495
    %v3497 = vmul.f32 %v3487, 1.442695
    %v3498 = vpow.pop %v3497
    %v3499 = vmul.f32 %v3488, 1.442695
    %v3500 = vpow.pop %v3499
    %v3501 = vadd.f32 %v3490, 1.0
    %v3502 = vadd.f32 %v3492, 1.0
    %v3503 = vadd.f32 %v3494, 1.0
    %v3504 = vadd.f32 %v3496, 1.0
    %v3505 = vadd.f32 %v3498, 1.0
    %v3506 = vadd.f32 %v3500, 1.0
    %v3507 = vrcp.pop %v3501
    %v3508 = vmul.f32 %v3501, %v3507
    %v3509 = vsub.f32 1.0, %v3508
    %v3510 = vmul.f32 %v3507, %v3509
    %v3511 = vadd.f32 %v3507, %v3510
    %vm3512 = vweird.f32 %v3501
    %vm3513 = vweird.f32 %v3507
    %vm3514 = vmor %vm3512, %vm3513
    %v3515 = vsel %vm3514, %v3507, %v3511
    %v3516 = vand.u32 2147483647, %v3501
    %vm3517 = vcmp.eq.f32.partialorder %v3516, 8.507059e+37
    %v3518 = vand.u32 %v3501, 2147483648
    %v3519 = vor.u32 1.1754944e-38, %v3518
    %v3520 = vsel %vm3517, %v3519, %v3515
    %v3521 = vmul.f32 1.0, %v3520
    %v3522 = vrcp.pop %v3502
    %v3523 = vmul.f32 %v3502, %v3522
    %v3524 = vsub.f32 1.0, %v3523
    %v3525 = vmul.f32 %v3522, %v3524
    %v3526 = vadd.f32 %v3522, %v3525
    %vm3527 = vweird.f32 %v3502
    %vm3528 = vweird.f32 %v3522
    %vm3529 = vmor %vm3527, %vm3528
    %v3530 = vsel %vm3529, %v3522, %v3526
    %v3531 = vand.u32 2147483647, %v3502
    %vm3532 = vcmp.eq.f32.partialorder %v3531, 8.507059e+37
    %v3533 = vand.u32 %v3502, 2147483648
    %v3534 = vor.u32 1.1754944e-38, %v3533
    %v3535 = vsel %vm3532, %v3534, %v3530
    %v3536 = vmul.f32 1.0, %v3535
    %v3537 = vrcp.pop %v3503
    %v3538 = vmul.f32 %v3503, %v3537
    %v3539 = vsub.f32 1.0, %v3538
    %v3540 = vmul.f32 %v3537, %v3539
    %v3541 = vadd.f32 %v3537, %v3540
    %vm3542 = vweird.f32 %v3503
    %vm3543 = vweird.f32 %v3537
    %vm3544 = vmor %vm3542, %vm3543
    %v3545 = vsel %vm3544, %v3537, %v3541
    %v3546 = vand.u32 2147483647, %v3503
    %vm3547 = vcmp.eq.f32.partialorder %v3546, 8.507059e+37
    %v3548 = vand.u32 %v3503, 2147483648
    %v3549 = vor.u32 1.1754944e-38, %v3548
    %v3550 = vsel %vm3547, %v3549, %v3545
    %v3551 = vmul.f32 1.0, %v3550
    %v3552 = vrcp.pop %v3504
    %v3553 = vmul.f32 %v3504, %v3552
    %v3554 = vsub.f32 1.0, %v3553
    %v3555 = vmul.f32 %v3552, %v3554
    %v3556 = vadd.f32 %v3552, %v3555
    %vm3557 = vweird.f32 %v3504
    %vm3558 = vweird.f32 %v3552
    %vm3559 = vmor %vm3557, %vm3558
    %v3560 = vsel %vm3559, %v3552, %v3556
    %v3561 = vand.u32 2147483647, %v3504
    %vm3562 = vcmp.eq.f32.partialorder %v3561, 8.507059e+37
    %v3563 = vand.u32 %v3504, 2147483648
    %v3564 = vor.u32 1.1754944e-38, %v3563
    %v3565 = vsel %vm3562, %v3564, %v3560
    %v3566 = vmul.f32 1.0, %v3565
    %v3567 = vrcp.pop %v3505
    %v3568 = vmul.f32 %v3505, %v3567
    %v3569 = vsub.f32 1.0, %v3568
    %v3570 = vmul.f32 %v3567, %v3569
    %v3571 = vadd.f32 %v3567, %v3570
    %vm3572 = vweird.f32 %v3505
    %vm3573 = vweird.f32 %v3567
    %vm3574 = vmor %vm3572, %vm3573
    %v3575 = vsel %vm3574, %v3567, %v3571
    %v3576 = vand.u32 2147483647, %v3505
    %vm3577 = vcmp.eq.f32.partialorder %v3576, 8.507059e+37
    %v3578 = vand.u32 %v3505, 2147483648
    %v3579 = vor.u32 1.1754944e-38, %v3578
    %v3580 = vsel %vm3577, %v3579, %v3575
    %v3581 = vmul.f32 1.0, %v3580
    %v3582 = vrcp.pop %v3506
    %v3583 = vmul.f32 %v3506, %v3582
    %v3584 = vsub.f32 1.0, %v3583
    %v3585 = vmul.f32 %v3582, %v3584
    %v3586 = vadd.f32 %v3582, %v3585
    %vm3587 = vweird.f32 %v3506
    %vm3588 = vweird.f32 %v3582
    %vm3589 = vmor %vm3587, %vm3588
    %v3590 = vsel %vm3589, %v3582, %v3586
    %v3591 = vand.u32 2147483647, %v3506
    %vm3592 = vcmp.eq.f32.partialorder %v3591, 8.507059e+37
    %v3593 = vand.u32 %v3506, 2147483648
    %v3594 = vor.u32 1.1754944e-38, %v3593
    %v3595 = vsel %vm3592, %v3594, %v3590
    %v3596 = vmul.f32 1.0, %v3595
    %v3597 = vtanh.pop %v3454
    %v3598 = vtanh.pop %v3480
    %v3599 = vmul.f32 %v3536, %v3265
    %v3600 = vmul.f32 %v3521, %v3597
    %v3601 = vadd.f32 %v3599, %v3600
    %v3602 = vtanh.pop %v3601
    %v3603 = vmul.f32 %v3551, %v3602
    %v3604 = vmul.f32 %v3581, %v3270
    %v3605 = vmul.f32 %v3566, %v3598
    %v3606 = vadd.f32 %v3604, %v3605
    %v3607 = vtanh.pop %v3606
    %v3608 = vmul.f32 %v3596, %v3607
    %v3609 = vpack.c.bf16 %v3608, %v3608
    %v3610 = vpack.c.bf16 %v3603, %v3603
    %3611 = vmatpush.bf16.msra.mxu0 %v1059
    %3612 = vmatpush.bf16.msra.mxu0 %v1051
    %3613 = vmatpush.bf16.msra.mxu0 %v1043
    %3614 = vmatpush.bf16.msra.mxu0 %v1035
    %3615 = vmatpush.bf16.msra.mxu0 %v1027
    %3616 = vmatpush.bf16.msra.mxu0 %v1019
    %3617 = vmatpush.bf16.msra.mxu0 %v1011
    %3618 = vmatpush.bf16.msra.mxu0 %v1003
    %3619 = vmatmul.bf16.gmra.mxu0 %v3609
    %v3620 = vpop.f32.mrf.mxu0
    %v3621 = vadd.f32 %v199, %v3620
    %v3622 = vpop.f32.mrf.mxu0
    %3623 = vdwg.mxu0
    %3624 = vmatpush.bf16.msra.mxu0 %v1123
    %3625 = vmatpush.bf16.msra.mxu0 %v1115
    %3626 = vmatpush.bf16.msra.mxu0 %v1107
    %3627 = vmatpush.bf16.msra.mxu0 %v1099
    %3628 = vmatpush.bf16.msra.mxu0 %v1091
    %3629 = vmatpush.bf16.msra.mxu0 %v1083
    %3630 = vmatpush.bf16.msra.mxu0 %v1075
    %3631 = vmatpush.bf16.msra.mxu0 %v1067
    %3632 = vmatmul.bf16.gmra.mxu0 %v3610
    %v3633 = vpop.f32.mrf.mxu0
    %v3634 = vadd.f32 %v3621, %v3633
    %v3635 = vpop.f32.mrf.mxu0
    %3636 = vdwg.mxu0
    %3637 = vmatpush.bf16.msra.mxu0 %v1060
    %3638 = vmatpush.bf16.msra.mxu0 %v1052
    %3639 = vmatpush.bf16.msra.mxu0 %v1044
    %3640 = vmatpush.bf16.msra.mxu0 %v1036
    %3641 = vmatpush.bf16.msra.mxu0 %v1028
    %3642 = vmatpush.bf16.msra.mxu0 %v1020
    %3643 = vmatpush.bf16.msra.mxu0 %v1012
    %3644 = vmatpush.bf16.msra.mxu0 %v1004
    %3645 = vmatmul.bf16.gmra.mxu0 %v3609
    %v3646 = vpop.f32.mrf.mxu0
    %v3647 = vadd.f32 %v231, %v3646
    %v3648 = vpop.f32.mrf.mxu0
    %3649 = vdwg.mxu0
    %3650 = vmatpush.bf16.msra.mxu0 %v1124
    %3651 = vmatpush.bf16.msra.mxu0 %v1116
    %3652 = vmatpush.bf16.msra.mxu0 %v1108
    %3653 = vmatpush.bf16.msra.mxu0 %v1100
    %3654 = vmatpush.bf16.msra.mxu0 %v1092
    %3655 = vmatpush.bf16.msra.mxu0 %v1084
    %3656 = vmatpush.bf16.msra.mxu0 %v1076
    %3657 = vmatpush.bf16.msra.mxu0 %v1068
    %3658 = vmatmul.bf16.gmra.mxu0 %v3610
    %v3659 = vpop.f32.mrf.mxu0
    %v3660 = vadd.f32 %v3647, %v3659
    %v3661 = vpop.f32.mrf.mxu0
    %3662 = vdwg.mxu0
    %3663 = vmatpush.bf16.msra.mxu0 %v1061
    %3664 = vmatpush.bf16.msra.mxu0 %v1053
    %3665 = vmatpush.bf16.msra.mxu0 %v1045
    %3666 = vmatpush.bf16.msra.mxu0 %v1037
    %3667 = vmatpush.bf16.msra.mxu0 %v1029
    %3668 = vmatpush.bf16.msra.mxu0 %v1021
    %3669 = vmatpush.bf16.msra.mxu0 %v1013
    %3670 = vmatpush.bf16.msra.mxu0 %v1005
    %3671 = vmatmul.bf16.gmra.mxu0 %v3609
    %v3672 = vpop.f32.mrf.mxu0
    %v3673 = vadd.f32 %v263, %v3672
    %v3674 = vpop.f32.mrf.mxu0
    %3675 = vdwg.mxu0
    %3676 = vmatpush.bf16.msra.mxu0 %v1125
    %3677 = vmatpush.bf16.msra.mxu0 %v1117
    %3678 = vmatpush.bf16.msra.mxu0 %v1109
    %3679 = vmatpush.bf16.msra.mxu0 %v1101
    %3680 = vmatpush.bf16.msra.mxu0 %v1093
    %3681 = vmatpush.bf16.msra.mxu0 %v1085
    %3682 = vmatpush.bf16.msra.mxu0 %v1077
    %3683 = vmatpush.bf16.msra.mxu0 %v1069
    %3684 = vmatmul.bf16.gmra.mxu0 %v3610
    %v3685 = vpop.f32.mrf.mxu0
    %v3686 = vadd.f32 %v3673, %v3685
    %v3687 = vpop.f32.mrf.mxu0
    %3688 = vdwg.mxu0
    %3689 = vmatpush.bf16.msra.mxu0 %v1065
    %3690 = vmatpush.bf16.msra.mxu0 %v1057
    %3691 = vmatpush.bf16.msra.mxu0 %v1049
    %3692 = vmatpush.bf16.msra.mxu0 %v1041
    %3693 = vmatpush.bf16.msra.mxu0 %v1033
    %3694 = vmatpush.bf16.msra.mxu0 %v1025
    %3695 = vmatpush.bf16.msra.mxu0 %v1017
    %3696 = vmatpush.bf16.msra.mxu0 %v1009
    %3697 = vmatmul.bf16.gmra.mxu0 %v3609
    %v3698 = vpop.f32.mrf.mxu0
    %v3699 = vadd.f32 %v391, %v3698
    %v3700 = vpop.f32.mrf.mxu0
    %3701 = vdwg.mxu0
    %3702 = vmatpush.bf16.msra.mxu0 %v1129
    %3703 = vmatpush.bf16.msra.mxu0 %v1121
    %3704 = vmatpush.bf16.msra.mxu0 %v1113
    %3705 = vmatpush.bf16.msra.mxu0 %v1105
    %3706 = vmatpush.bf16.msra.mxu0 %v1097
    %3707 = vmatpush.bf16.msra.mxu0 %v1089
    %3708 = vmatpush.bf16.msra.mxu0 %v1081
    %3709 = vmatpush.bf16.msra.mxu0 %v1073
    %3710 = vmatmul.bf16.gmra.mxu0 %v3610
    %v3711 = vpop.f32.mrf.mxu0
    %v3712 = vadd.f32 %v3699, %v3711
    %v3713 = vpop.f32.mrf.mxu0
    %3714 = vdwg.mxu0
    %v3715 = vxor.u32 %v3634, 2147483648
    %v3716 = vxor.u32 %v3660, 2147483648
    %v3717 = vxor.u32 %v3686, 2147483648
    %v3718 = vmul.f32 %v3715, 1.442695
    %v3719 = vpow.pop %v3718
    %v3720 = vmul.f32 %v3716, 1.442695
    %v3721 = vpow.pop %v3720
    %v3722 = vmul.f32 %v3717, 1.442695
    %v3723 = vpow.pop %v3722
    %v3724 = vadd.f32 %v3719, 1.0
    %v3725 = vadd.f32 %v3721, 1.0
    %v3726 = vadd.f32 %v3723, 1.0
    %v3727 = vrcp.pop %v3724
    %v3728 = vmul.f32 %v3724, %v3727
    %v3729 = vsub.f32 1.0, %v3728
    %v3730 = vmul.f32 %v3727, %v3729
    %v3731 = vadd.f32 %v3727, %v3730
    %vm3732 = vweird.f32 %v3724
    %vm3733 = vweird.f32 %v3727
    %vm3734 = vmor %vm3732, %vm3733
    %v3735 = vsel %vm3734, %v3727, %v3731
    %v3736 = vand.u32 2147483647, %v3724
    %vm3737 = vcmp.eq.f32.partialorder %v3736, 8.507059e+37
    %v3738 = vand.u32 %v3724, 2147483648
    %v3739 = vor.u32 1.1754944e-38, %v3738
    %v3740 = vsel %vm3737, %v3739, %v3735
    %v3741 = vmul.f32 1.0, %v3740
    %v3742 = vrcp.pop %v3725
    %v3743 = vmul.f32 %v3725, %v3742
    %v3744 = vsub.f32 1.0, %v3743
    %v3745 = vmul.f32 %v3742, %v3744
    %v3746 = vadd.f32 %v3742, %v3745
    %vm3747 = vweird.f32 %v3725
    %vm3748 = vweird.f32 %v3742
    %vm3749 = vmor %vm3747, %vm3748
    %v3750 = vsel %vm3749, %v3742, %v3746
    %v3751 = vand.u32 2147483647, %v3725
    %vm3752 = vcmp.eq.f32.partialorder %v3751, 8.507059e+37
    %v3753 = vand.u32 %v3725, 2147483648
    %v3754 = vor.u32 1.1754944e-38, %v3753
    %v3755 = vsel %vm3752, %v3754, %v3750
    %v3756 = vmul.f32 1.0, %v3755
    %v3757 = vrcp.pop %v3726
    %v3758 = vmul.f32 %v3726, %v3757
    %v3759 = vsub.f32 1.0, %v3758
    %v3760 = vmul.f32 %v3757, %v3759
    %v3761 = vadd.f32 %v3757, %v3760
    %vm3762 = vweird.f32 %v3726
    %vm3763 = vweird.f32 %v3757
    %vm3764 = vmor %vm3762, %vm3763
    %v3765 = vsel %vm3764, %v3757, %v3761
    %v3766 = vand.u32 2147483647, %v3726
    %vm3767 = vcmp.eq.f32.partialorder %v3766, 8.507059e+37
    %v3768 = vand.u32 %v3726, 2147483648
    %v3769 = vor.u32 1.1754944e-38, %v3768
    %v3770 = vsel %vm3767, %v3769, %v3765
    %v3771 = vmul.f32 1.0, %v3770
    %v3772 = vtanh.pop %v3712
    %v3773 = vmul.f32 %v3756, %v3601
    %v3774 = vmul.f32 %v3741, %v3772
    %v3775 = vadd.f32 %v3773, %v3774
    %v3776 = vtanh.pop %v3775
    %v3777 = vmul.f32 %v3771, %v3776
    %v3778 = vpack.c.bf16 %v3777, %v3777
    %v3779 = vld [vmem:[#allocation4] sm:$0xf]
    %v3780 = vld [vmem:[#allocation4 + $0x4] sm:$0xf]
    %v3781 = vld [vmem:[#allocation4 + $0x8] sm:$0xf]
    %v3782 = vld [vmem:[#allocation4 + $0xc] sm:$0xf]
    %v3783 = vld [vmem:[#allocation4 + $0x10] sm:$0xf]
    %v3784 = vld [vmem:[#allocation4 + $0x14] sm:$0xf]
    %v3785 = vld [vmem:[#allocation4 + $0x18] sm:$0xf]
    %v3786 = vld [vmem:[#allocation4 + $0x1c] sm:$0xf]
    %v3787 = vld [vmem:[#allocation4 + $0x20] sm:$0xf]
    %v3788 = vld [vmem:[#allocation4 + $0x24] sm:$0xf]
    %v3789 = vld [vmem:[#allocation4 + $0x28] sm:$0xf]
    %v3790 = vld [vmem:[#allocation4 + $0x2c] sm:$0xf]
    %v3791 = vld [vmem:[#allocation4 + $0x30] sm:$0xf]
    %v3792 = vld [vmem:[#allocation4 + $0x34] sm:$0xf]
    %v3793 = vld [vmem:[#allocation4 + $0x38] sm:$0xf]
    %v3794 = vld [vmem:[#allocation4 + $0x3c] sm:$0xf]
    %v3795 = vld [vmem:[%s5] sm:$0x1]
    %v3797 = vperm.slane %v3795, 0
    %v3815 = vunpack.c.l.b16 %v3779
    %v3816 = vunpack.c.l.b16 %v3780
    %v3817 = vunpack.c.l.b16 %v3781
    %v3818 = vunpack.c.l.b16 %v3782
    %v3819 = vunpack.c.l.b16 %v3783
    %v3820 = vunpack.c.l.b16 %v3784
    %v3821 = vunpack.c.l.b16 %v3785
    %v3822 = vunpack.c.l.b16 %v3786
    %v3823 = vunpack.c.l.b16 %v3787
    %v3824 = vunpack.c.l.b16 %v3788
    %v3825 = vunpack.c.l.b16 %v3789
    %v3826 = vunpack.c.l.b16 %v3790
    %v3827 = vunpack.c.l.b16 %v3791
    %v3828 = vunpack.c.l.b16 %v3792
    %v3829 = vunpack.c.l.b16 %v3793
    %v3830 = vunpack.c.l.b16 %v3794
    %v3831 = vpack.c.b16 %v3816, %v3815
    %v3832 = vpack.c.b16 %v3818, %v3817
    %v3833 = vpack.c.b16 %v3820, %v3819
    %v3834 = vpack.c.b16 %v3822, %v3821
    %v3835 = vpack.c.b16 %v3824, %v3823
    %v3836 = vpack.c.b16 %v3826, %v3825
    %v3837 = vpack.c.b16 %v3828, %v3827
    %v3838 = vpack.c.b16 %v3830, %v3829
    %3847 = vmatpush.bf16.msra.mxu0 %v3838
    %3848 = vmatpush.bf16.msra.mxu0 %v3837
    %3849 = vmatpush.bf16.msra.mxu0 %v3836
    %3850 = vmatpush.bf16.msra.mxu0 %v3835
    %3851 = vmatpush.bf16.msra.mxu0 %v3834
    %3852 = vmatpush.bf16.msra.mxu0 %v3833
    %3853 = vmatpush.bf16.msra.mxu0 %v3832
    %3854 = vmatpush.bf16.msra.mxu0 %v3831
    %3855 = vmatmul.bf16.gmra.mxu0 %v3778
    %v3856 = vpop.f32.mrf.mxu0
    %v3857 = vadd.f32 %v3797, %v3856
    %v3858 = vpop.f32.mrf.mxu0
    %3859 = vdwg.mxu0
    %3860 = vst [vmem:[%s6] sm:$0xff] %v3857
    // Predicated region
    $region34: #{lstm_forward.1} parent=1 // pred_check
      _
    $region35: #{lstm_forward.1} parent=1 // pred_check_branch
      %3862 = sbr.rel (0) target = $region37
    $region36: #{lstm_forward.1} parent=1 // pred_region
      _
    $region37: #{lstm_forward.1} parent=1 // pred_fallthru
      _
    // Predicated region
    $region38: #{lstm_forward.1} parent=1 // pred_check
      _
    $region39: #{lstm_forward.1} parent=1 // pred_check_branch
      %3864 = sbr.rel (0) target = $region41
    $region40: #{lstm_forward.1} parent=1 // pred_region
      _
    $region41: #{lstm_forward.1} parent=1 // pred_fallthru
      _
    %3865 = vsyncpa [#allocation3], 1
    %3866 = vsyncpa [#allocation5], 1

</llo_original>
